<compile_context>
chip_gen: v6e
topology: v6e:2x2x1
jax: 0.10.0
libtpu: 0.0.40
codegen_flags: <defaults>
</compile_context>

<pallas_src>
import numpy as np
import jax
import jax.numpy as jnp
from jax.experimental import pallas as pl
from jax.experimental.pallas import tpu as pltpu

EPS_NORM = 1e-12     # F.normalize eps
EPS_BN = 1e-5        # BatchNorm eps

H = W = 4            # backbone feature-map spatial size
HW = H * W
C = 640              # planes[0] / planes[4]
C2 = 64              # planes[1..3]
U = V = 5            # self-correlation kernel_size = (5, 5)
PAD = 2
UV = U * V
PATCH = 4            # stem patch size (stand-in backbone)
KIN = PATCH * PATCH * 3


# --------------------------- fused Pallas kernel -----------------------------

def _mxdot(a, b):
    # bf16 at the MXU (full rate on v6e/v7x, accepted on v5e), f32 accumulate.
    return jnp.dot(a.astype(jnp.bfloat16), b.astype(jnp.bfloat16),
                   preferred_element_type=jnp.float32)


def _prenet_kernel(x_ref, sel_ref, wstem_ref, win_ref, wc1_ref, wc2_ref,
                   wout_ref, sc_ref, sh_ref, s4_ref, b4_ref, o_ref):
    BB = x_ref.shape[0]
    bf16 = jnp.bfloat16

    # ---- ResNet stand-in: patch-embed matmul + ReLU (== embeddings_r) -------
    # TODO(synk): ResNet(args) is not defined in the provided module; this is a
    # deterministic 4x4 patch-embed stand-in producing the (HW, 640) feature map.
    x = x_ref[...].reshape(BB * HW, KIN)                          # (BB*16, 48)
    feat = jnp.maximum(_mxdot(x, wstem_ref[...]), 0.0)            # (BB*16, 640) f32

    # ---- SelfCorrelationComputation: ReLU + L2-normalize ---------------------
    ssq = jnp.sum(feat * feat, axis=-1, keepdims=True)
    fn = feat / jnp.maximum(jnp.sqrt(ssq), EPS_NORM)              # (BB*16, 640) f32
    fn_b = fn.astype(bf16)

    # 5x5 zero-padded neighborhood via a 0/1 selection matmul (exact gather of
    # the bf16 values), times the center value (plain broadcast - the old `ctr`
    # selection matmul is gone).  Rows ordered ((u*V + v) major, (h*W + w) minor)
    # per sub-batch; short unrolled loop over the BB sub-batches.
    sel = sel_ref[...]                                            # (UV*HW, HW) bf16
    corr_parts = []
    for bi in range(BB):
        f_i = fn_b[bi * HW:(bi + 1) * HW, :]                      # (16, 640) bf16
        nb = _mxdot(sel, f_i).reshape(UV, HW, C)                  # (25, 16, 640) f32
        ct = fn[bi * HW:(bi + 1) * HW, :].reshape(1, HW, C)       # broadcast center
        corr_parts.append((nb * ct).astype(bf16))                 # (25, 16, 640) bf16
    corr = jnp.concatenate(corr_parts, axis=0).reshape(BB * UV * HW, C)

    # ---- SCR conv1x1_in + BN + ReLU ------------------------------------------
    y1 = jnp.maximum(
        _mxdot(corr, win_ref[...]) * sc_ref[0:1, :] + sh_ref[0:1, :], 0.0
    ).astype(bf16).reshape(BB, UV, HW, C2)                        # (BB, 25, 16, 64)

    # ---- conv1: Conv3d (1,3,3) over (u,v): 5x5 -> 3x3, as ONE im2col matmul --
    # For each output row `a`, gather the nine (BB, 3, HW, 64) tap slices
    # (output column = slice position, v' = b_out + db) and concatenate along
    # channels in (da, db)-major order to match wc1's (576, 64) layout.  The
    # three row-groups are stacked along M, so BN + ReLU is applied exactly once.
    pats = []
    for a in range(3):
        taps = [y1[:, (a + da) * V + db:(a + da) * V + db + 3, :, :]
                for da in range(3) for db in range(3)]
        pats.append(jnp.concatenate(taps, axis=-1))               # (BB, 3, HW, 576)
    pat1 = jnp.concatenate(pats, axis=0).reshape(3 * BB * 3 * HW, 9 * C2)
    y2 = jnp.maximum(
        _mxdot(pat1, wc1_ref[...]) * sc_ref[1:2, :] + sh_ref[1:2, :], 0.0
    ).astype(bf16).reshape(3, BB, 3, HW, C2)                      # (a, bi, b, hw, c)

    # ---- conv2: Conv3d (1,3,3): 3x3 -> 1x1, as ONE im2col matmul -------------
    cols = [y2[a, :, b, :, :].reshape(BB * HW, C2)
            for a in range(3) for b in range(3)]                  # (a, b)-major
    pat2 = jnp.concatenate(cols, axis=-1)                         # (BB*16, 576)
    y3 = jnp.maximum(
        _mxdot(pat2, wc2_ref[...]) * sc_ref[2:3, :] + sh_ref[2:3, :], 0.0
    ).astype(bf16)                                                # (BB*16, 64)

    # ---- conv1x1_out + BN, residual with embeddings_r, final ReLU ------------
    out = _mxdot(y3, wout_ref[...]) * s4_ref[...] + b4_ref[...] + feat
    o_ref[...] = jnp.maximum(out, 0.0).reshape(BB, HW, C)


# --------------------------- parameters / constants --------------------------

def bn_affine(gamma, beta, running_mean=0.0, running_var=1.0):
    # Eval-mode BatchNorm folded into a per-channel affine.  Pass real running
    # stats here when loading a trained checkpoint.
    scale = gamma / jnp.sqrt(running_var + EPS_BN)
    shift = beta - running_mean * scale
    return scale.reshape(1, -1), shift.reshape(1, -1)


def _selection_matrix():
    # 0/1 matrix implementing nn.Unfold(kernel_size=(5,5), padding=2) as an
    # in-kernel matmul.  Rows ordered ((u,v) major, (h,w) minor).
    sel = np.zeros((UV * HW, HW), np.float32)
    for u in range(U):
        for v in range(V):
            for h in range(H):
                for w in range(W):
                    r = (u * V + v) * HW + (h * W + w)
                    hh, ww = h + u - PAD, w + v - PAD
                    if 0 <= hh < H and 0 <= ww < W:
                        sel[r, hh * W + ww] = 1.0
    return jnp.asarray(sel)


def init_params(key):
    ks = jax.random.split(key, 12)
    n = lambda k, s, sc=0.05: sc * jax.random.normal(k, s, jnp.float32)
    return {
        "w_stem": n(ks[0], (KIN, C)),            # ResNet stand-in patch embed
        "w_in":   n(ks[1], (C, C2)),             # conv1x1_in (640 -> 64)
        "g1": 1.0 + 0.1 * jax.random.normal(ks[2], (C2,), jnp.float32),
        "b1": 0.1 * jax.random.normal(ks[3], (C2,), jnp.float32),
        "w_c1":   n(ks[4], (3, 3, C2, C2)),      # Conv3d (1,3,3), (kh,kw,Cin,Cout)
        "g2": 1.0 + 0.1 * jax.random.normal(ks[5], (C2,), jnp.float32),
        "b2": 0.1 * jax.random.normal(ks[6], (C2,), jnp.float32),
        "w_c2":   n(ks[7], (3, 3, C2, C2)),      # Conv3d (1,3,3)
        "g3": 1.0 + 0.1 * jax.random.normal(ks[8], (C2,), jnp.float32),
        "b3": 0.1 * jax.random.normal(ks[9], (C2,), jnp.float32),
        "w_out":  n(ks[10], (C2, C)),            # conv1x1_out (64 -> 640)
        "g4": jnp.ones((C,), jnp.float32),
        "b4": 0.1 * jax.random.normal(ks[11], (C,), jnp.float32),
    }


# --------------------------- forward (single pallas_call) --------------------

def prenet_forward(image, p, block_batch=4):
    B = image.shape[0]
    # Batch-block size: keep >= 2 grid steps (so v7x's two TensorCores both get
    # work) and cap at `block_batch` to stay well inside VMEM on v5e/v7x.
    BB = max(1, min(block_batch, B // 2)) if B >= 2 else 1
    n_steps = -(-B // BB)
    Bp = n_steps * BB

    # Stand-in backbone input prep (pure data movement): NCHW -> 4x4 patch rows.
    x = jnp.transpose(image, (0, 2, 3, 1))
    x = x.reshape(B, H, PATCH, W, PATCH, 3).transpose(0, 1, 3, 2, 4, 5)
    x = x.reshape(B, HW, KIN)
    if Bp != B:                                   # pad batch to a multiple of BB
        x = jnp.concatenate([x, jnp.zeros((Bp - B, HW, KIN), x.dtype)], axis=0)

    bf16 = jnp.bfloat16
    sel = _selection_matrix().astype(bf16)

    s1, b1 = bn_affine(p["g1"], p["b1"])
    s2, b2 = bn_affine(p["g2"], p["b2"])
    s3, b3 = bn_affine(p["g3"], p["b3"])
    s4, b4 = bn_affine(p["g4"], p["b4"])
    scales = jnp.concatenate([s1, s2, s3], axis=0)                # (3, 64)
    shifts = jnp.concatenate([b1, b2, b3], axis=0)                # (3, 64)

    # Im2col weight layout (tap (kh,kw)-major, Cin minor) prepared on the host.
    # NOTE: w_c1/w_c2 are stored as (kh, kw, Cin, Cout); transpose from
    # PyTorch's Conv3d (Cout, Cin, kd, kh, kw) layout when loading real weights.
    wc1 = p["w_c1"].reshape(9 * C2, C2).astype(bf16)              # (576, 64)
    wc2 = p["w_c2"].reshape(9 * C2, C2).astype(bf16)              # (576, 64)

    # Constants/weights (< ~1 MB total in bf16); index_map is constant so they
    # are fetched once — double-buffer overhead is negligible at these sizes.
    def const(shape):
        nd = len(shape)
        return pl.BlockSpec(shape, lambda b: (0,) * nd)

    out = pl.pallas_call(
        _prenet_kernel,
        out_shape=jax.ShapeDtypeStruct((Bp, HW, C), jnp.float32),
        grid=(n_steps,),
        in_specs=[
            pl.BlockSpec((BB, HW, KIN), lambda b: (b, 0, 0)),     # patches
            const((UV * HW, HW)),                                 # sel
            const((KIN, C)),                                      # w_stem
            const((C, C2)),                                       # w_in
            const((9 * C2, C2)),                                  # w_c1 (im2col)
            const((9 * C2, C2)),                                  # w_c2 (im2col)
            const((C2, C)),                                       # w_out
            const((3, C2)), const((3, C2)),                       # BN scales/shifts
            const((1, C)), const((1, C)),                         # BN4 scale/shift
        ],
        out_specs=pl.BlockSpec((BB, HW, C), lambda b: (b, 0, 0)),
        compiler_params=pltpu.CompilerParams(
            dimension_semantics=("parallel",)),
    )(x, sel, p["w_stem"].astype(bf16), p["w_in"].astype(bf16),
      wc1, wc2, p["w_out"].astype(bf16), scales, shifts, s4, b4)

    return out[:B].reshape(B, H, W, C)   # NHWC (== PyTorch [B, 640, H, W] up to transpose)


# --------------------------- pure-JAX f32 reference --------------------------

def prenet_reference(image, p):
    B = image.shape[0]
    x = jnp.transpose(image, (0, 2, 3, 1))
    x = x.reshape(B, H, PATCH, W, PATCH, 3).transpose(0, 1, 3, 2, 4, 5)
    x = x.reshape(B * HW, KIN)
    feat = jnp.maximum(x @ p["w_stem"], 0.0)
    fn = feat / jnp.maximum(jnp.sqrt(jnp.sum(feat * feat, -1, keepdims=True)), EPS_NORM)
    fn4 = fn.reshape(B, H, W, C)
    fpad = jnp.pad(fn4, ((0, 0), (PAD, PAD), (PAD, PAD), (0, 0)))
    nb = jnp.stack([fpad[:, u:u + H, v:v + W, :] for u in range(U) for v in range(V)],
                   axis=3)                                        # (B,H,W,25,C)
    corr = (nb * fn4[:, :, :, None, :]).reshape(B * HW * UV, C)
    s1, b1 = bn_affine(p["g1"], p["b1"])
    s2, b2 = bn_affine(p["g2"], p["b2"])
    s3, b3 = bn_affine(p["g3"], p["b3"])
    s4, b4 = bn_affine(p["g4"], p["b4"])
    y1 = jnp.maximum(corr @ p["w_in"] * s1 + b1, 0.0)             # (B*HW*25, 64)
    P = B * HW
    x2 = y1.reshape(P, U, V, C2)
    rows = []
    for a in range(3):
        cols = [x2[:, a:a + 3, b:b + 3, :] for b in range(3)]
        rows.append(jnp.stack(cols, axis=1))
    pat = jnp.stack(rows, axis=1).reshape(P * 9, 9 * C2)
    y2 = jnp.maximum(pat @ p["w_c1"].reshape(9 * C2, C2) * s2 + b2, 0.0)
    y3 = jnp.maximum(y2.reshape(P, 9 * C2) @ p["w_c2"].reshape(9 * C2, C2) * s3 + b3, 0.0)
    emb = jnp.maximum(y3 @ p["w_out"] * s4 + b4 + feat, 0.0)
    return emb.reshape(B, H, W, C)


if __name__ == "__main__":
    key = jax.random.PRNGKey(0)
    kp, kx = jax.random.split(key)
    params = init_params(kp)
    sample_image = jax.random.normal(kx, (2, 3, 16, 16), jnp.float32)  # NCHW, like PyTorch

    out = jax.jit(prenet_forward)(sample_image, params)
    out = jax.block_until_ready(out)

    assert out.shape == (2, H, W, C)
    assert bool(jnp.all(jnp.isfinite(out)))
    ref = prenet_reference(sample_image, params)
    err = float(jnp.max(jnp.abs(out - ref)))
    assert err < 5e-2, f"mismatch vs pure-JAX reference: max abs err = {err}"
    print("KERNEL_OK")
</pallas_src>

<mosaic_0001>
module attributes {stable_mosaic.version = 11 : i64} {
  func.func @_prenet_kernel(%arg0: i32, %arg1: memref<1x16x48xf32, #tpu.memory_space<vmem>>, %arg2: memref<400x16xbf16, #tpu.memory_space<vmem>>, %arg3: memref<48x640xbf16, #tpu.memory_space<vmem>>, %arg4: memref<640x64xbf16, #tpu.memory_space<vmem>>, %arg5: memref<576x64xbf16, #tpu.memory_space<vmem>>, %arg6: memref<576x64xbf16, #tpu.memory_space<vmem>>, %arg7: memref<64x640xbf16, #tpu.memory_space<vmem>>, %arg8: memref<3x64xf32, #tpu.memory_space<vmem>>, %arg9: memref<3x64xf32, #tpu.memory_space<vmem>>, %arg10: memref<1x640xf32, #tpu.memory_space<vmem>>, %arg11: memref<1x640xf32, #tpu.memory_space<vmem>>, %arg12: memref<1x16x640xf32, #tpu.memory_space<vmem>>) attributes {dimension_semantics = [#tpu.dimension_semantics<parallel>], iteration_bounds = array<i64: 2>, scalar_prefetch = 0 : i64, scratch_operands = 0 : i64, tpu.core_type = #tpu.core_type<tc>, window_params = [{transform_indices = @transform_0, window_bounds = array<i64: 1, 16, 48>}, {pipeline_mode = #tpu.pipeline_mode<synchronous>, transform_indices = @transform_1, window_bounds = array<i64: 400, 16>}, {pipeline_mode = #tpu.pipeline_mode<synchronous>, transform_indices = @transform_2, window_bounds = array<i64: 48, 640>}, {pipeline_mode = #tpu.pipeline_mode<synchronous>, transform_indices = @transform_3, window_bounds = array<i64: 640, 64>}, {pipeline_mode = #tpu.pipeline_mode<synchronous>, transform_indices = @transform_4, window_bounds = array<i64: 576, 64>}, {pipeline_mode = #tpu.pipeline_mode<synchronous>, transform_indices = @transform_5, window_bounds = array<i64: 576, 64>}, {pipeline_mode = #tpu.pipeline_mode<synchronous>, transform_indices = @transform_6, window_bounds = array<i64: 64, 640>}, {pipeline_mode = #tpu.pipeline_mode<synchronous>, transform_indices = @transform_7, window_bounds = array<i64: 3, 64>}, {pipeline_mode = #tpu.pipeline_mode<synchronous>, transform_indices = @transform_8, window_bounds = array<i64: 3, 64>}, {pipeline_mode = #tpu.pipeline_mode<synchronous>, transform_indices = @transform_9, window_bounds = array<i64: 1, 640>}, {pipeline_mode = #tpu.pipeline_mode<synchronous>, transform_indices = @transform_10, window_bounds = array<i64: 1, 640>}, {transform_indices = @transform_11, window_bounds = array<i64: 1, 16, 640>}]} {
    %c0 = arith.constant 0 : index
    %c0_0 = arith.constant 0 : index
    %c0_1 = arith.constant 0 : index
    %0 = vector.load %arg1[%c0, %c0_0, %c0_1] : memref<1x16x48xf32, #tpu.memory_space<vmem>>, vector<1x16x48xf32>
    %1 = vector.shape_cast %0 : vector<1x16x48xf32> to vector<16x48xf32>
    %c0_2 = arith.constant 0 : index
    %c0_3 = arith.constant 0 : index
    %2 = vector.load %arg3[%c0_2, %c0_3] : memref<48x640xbf16, #tpu.memory_space<vmem>>, vector<48x640xbf16>
    %3 = arith.truncf %1 : vector<16x48xf32> to vector<16x48xbf16>
    %cst = arith.constant dense<0.000000e+00> : vector<16x640xf32>
    %4 = tpu.matmul %3, %2, %cst {dimension_numbers = #tpu.dot_dimension_numbers<[1], [0], [0], [1], [0, 0, 1, 1], [], []>} : vector<16x48xbf16>, vector<48x640xbf16>, vector<16x640xf32> -> vector<16x640xf32>
    %cst_4 = arith.constant 0.000000e+00 : f32
    %5 = vector.broadcast %cst_4 : f32 to vector<16x640xf32>
    %6 = arith.maximumf %4, %5 : vector<16x640xf32>
    %7 = arith.mulf %6, %6 : vector<16x640xf32>
    %cst_5 = arith.constant dense<0.000000e+00> : vector<16xf32>
    %8 = vector.multi_reduction <add>, %7, %cst_5 [1] : vector<16x640xf32> to vector<16xf32>
    %9 = vector.shape_cast %8 : vector<16xf32> to vector<16x1xf32>
    %10 = math.sqrt %9 : vector<16x1xf32>
    %cst_6 = arith.constant 9.99999996E-13 : f32
    %11 = vector.broadcast %cst_6 : f32 to vector<16x1xf32>
    %12 = arith.maximumf %10, %11 : vector<16x1xf32>
    %13 = vector.broadcast %12 : vector<16x1xf32> to vector<16x640xf32>
    %14 = arith.divf %6, %13 : vector<16x640xf32>
    %15 = arith.truncf %14 : vector<16x640xf32> to vector<16x640xbf16>
    %c0_7 = arith.constant 0 : index
    %c0_8 = arith.constant 0 : index
    %16 = vector.load %arg2[%c0_7, %c0_8] : memref<400x16xbf16, #tpu.memory_space<vmem>>, vector<400x16xbf16>
    %cst_9 = arith.constant dense<0.000000e+00> : vector<400x640xf32>
    %17 = tpu.matmul %16, %15, %cst_9 {dimension_numbers = #tpu.dot_dimension_numbers<[1], [0], [0], [1], [0, 0, 1, 1], [], []>} : vector<400x16xbf16>, vector<16x640xbf16>, vector<400x640xf32> -> vector<400x640xf32>
    %18 = vector.shape_cast %17 : vector<400x640xf32> to vector<25x16x640xf32>
    %19 = vector.shape_cast %14 : vector<16x640xf32> to vector<1x16x640xf32>
    %20 = vector.broadcast %19 : vector<1x16x640xf32> to vector<25x16x640xf32>
    %21 = arith.mulf %18, %20 : vector<25x16x640xf32>
    %22 = arith.truncf %21 : vector<25x16x640xf32> to vector<25x16x640xbf16>
    %23 = vector.shape_cast %22 : vector<25x16x640xbf16> to vector<400x640xbf16>
    %c0_10 = arith.constant 0 : index
    %c0_11 = arith.constant 0 : index
    %24 = vector.load %arg4[%c0_10, %c0_11] : memref<640x64xbf16, #tpu.memory_space<vmem>>, vector<640x64xbf16>
    %cst_12 = arith.constant dense<0.000000e+00> : vector<400x64xf32>
    %25 = tpu.matmul %23, %24, %cst_12 {dimension_numbers = #tpu.dot_dimension_numbers<[1], [0], [0], [1], [0, 0, 1, 1], [], []>} : vector<400x640xbf16>, vector<640x64xbf16>, vector<400x64xf32> -> vector<400x64xf32>
    %c0_13 = arith.constant 0 : index
    %c0_14 = arith.constant 0 : index
    %26 = vector.load %arg8[%c0_13, %c0_14] : memref<3x64xf32, #tpu.memory_space<vmem>>, vector<1x64xf32>
    %27 = vector.broadcast %26 : vector<1x64xf32> to vector<400x64xf32>
    %28 = arith.mulf %25, %27 : vector<400x64xf32>
    %c0_15 = arith.constant 0 : index
    %c0_16 = arith.constant 0 : index
    %29 = vector.load %arg9[%c0_15, %c0_16] : memref<3x64xf32, #tpu.memory_space<vmem>>, vector<1x64xf32>
    %30 = vector.broadcast %29 : vector<1x64xf32> to vector<400x64xf32>
    %31 = arith.addf %28, %30 : vector<400x64xf32>
    %cst_17 = arith.constant 0.000000e+00 : f32
    %32 = vector.broadcast %cst_17 : f32 to vector<400x64xf32>
    %33 = arith.maximumf %31, %32 : vector<400x64xf32>
    %34 = arith.truncf %33 : vector<400x64xf32> to vector<400x64xbf16>
    %35 = vector.shape_cast %34 : vector<400x64xbf16> to vector<1x25x16x64xbf16>
    %36 = vector.extract_strided_slice %35 {offsets = [0, 0, 0, 0], sizes = [1, 3, 16, 64], strides = [1, 1, 1, 1]} : vector<1x25x16x64xbf16> to vector<1x3x16x64xbf16>
    %37 = vector.extract_strided_slice %35 {offsets = [0, 1, 0, 0], sizes = [1, 3, 16, 64], strides = [1, 1, 1, 1]} : vector<1x25x16x64xbf16> to vector<1x3x16x64xbf16>
    %38 = vector.extract_strided_slice %35 {offsets = [0, 2, 0, 0], sizes = [1, 3, 16, 64], strides = [1, 1, 1, 1]} : vector<1x25x16x64xbf16> to vector<1x3x16x64xbf16>
    %39 = vector.extract_strided_slice %35 {offsets = [0, 5, 0, 0], sizes = [1, 3, 16, 64], strides = [1, 1, 1, 1]} : vector<1x25x16x64xbf16> to vector<1x3x16x64xbf16>
    %40 = vector.extract_strided_slice %35 {offsets = [0, 6, 0, 0], sizes = [1, 3, 16, 64], strides = [1, 1, 1, 1]} : vector<1x25x16x64xbf16> to vector<1x3x16x64xbf16>
    %41 = vector.extract_strided_slice %35 {offsets = [0, 7, 0, 0], sizes = [1, 3, 16, 64], strides = [1, 1, 1, 1]} : vector<1x25x16x64xbf16> to vector<1x3x16x64xbf16>
    %42 = vector.extract_strided_slice %35 {offsets = [0, 10, 0, 0], sizes = [1, 3, 16, 64], strides = [1, 1, 1, 1]} : vector<1x25x16x64xbf16> to vector<1x3x16x64xbf16>
    %43 = vector.extract_strided_slice %35 {offsets = [0, 11, 0, 0], sizes = [1, 3, 16, 64], strides = [1, 1, 1, 1]} : vector<1x25x16x64xbf16> to vector<1x3x16x64xbf16>
    %44 = vector.extract_strided_slice %35 {offsets = [0, 12, 0, 0], sizes = [1, 3, 16, 64], strides = [1, 1, 1, 1]} : vector<1x25x16x64xbf16> to vector<1x3x16x64xbf16>
    %45 = tpu.concatenate %36, %37, %38, %39, %40, %41, %42, %43, %44 in 3 : vector<1x3x16x64xbf16>, vector<1x3x16x64xbf16>, vector<1x3x16x64xbf16>, vector<1x3x16x64xbf16>, vector<1x3x16x64xbf16>, vector<1x3x16x64xbf16>, vector<1x3x16x64xbf16>, vector<1x3x16x64xbf16>, vector<1x3x16x64xbf16> -> vector<1x3x16x576xbf16>
    %46 = vector.extract_strided_slice %35 {offsets = [0, 5, 0, 0], sizes = [1, 3, 16, 64], strides = [1, 1, 1, 1]} : vector<1x25x16x64xbf16> to vector<1x3x16x64xbf16>
    %47 = vector.extract_strided_slice %35 {offsets = [0, 6, 0, 0], sizes = [1, 3, 16, 64], strides = [1, 1, 1, 1]} : vector<1x25x16x64xbf16> to vector<1x3x16x64xbf16>
    %48 = vector.extract_strided_slice %35 {offsets = [0, 7, 0, 0], sizes = [1, 3, 16, 64], strides = [1, 1, 1, 1]} : vector<1x25x16x64xbf16> to vector<1x3x16x64xbf16>
    %49 = vector.extract_strided_slice %35 {offsets = [0, 10, 0, 0], sizes = [1, 3, 16, 64], strides = [1, 1, 1, 1]} : vector<1x25x16x64xbf16> to vector<1x3x16x64xbf16>
    %50 = vector.extract_strided_slice %35 {offsets = [0, 11, 0, 0], sizes = [1, 3, 16, 64], strides = [1, 1, 1, 1]} : vector<1x25x16x64xbf16> to vector<1x3x16x64xbf16>
    %51 = vector.extract_strided_slice %35 {offsets = [0, 12, 0, 0], sizes = [1, 3, 16, 64], strides = [1, 1, 1, 1]} : vector<1x25x16x64xbf16> to vector<1x3x16x64xbf16>
    %52 = vector.extract_strided_slice %35 {offsets = [0, 15, 0, 0], sizes = [1, 3, 16, 64], strides = [1, 1, 1, 1]} : vector<1x25x16x64xbf16> to vector<1x3x16x64xbf16>
    %53 = vector.extract_strided_slice %35 {offsets = [0, 16, 0, 0], sizes = [1, 3, 16, 64], strides = [1, 1, 1, 1]} : vector<1x25x16x64xbf16> to vector<1x3x16x64xbf16>
    %54 = vector.extract_strided_slice %35 {offsets = [0, 17, 0, 0], sizes = [1, 3, 16, 64], strides = [1, 1, 1, 1]} : vector<1x25x16x64xbf16> to vector<1x3x16x64xbf16>
    %55 = tpu.concatenate %46, %47, %48, %49, %50, %51, %52, %53, %54 in 3 : vector<1x3x16x64xbf16>, vector<1x3x16x64xbf16>, vector<1x3x16x64xbf16>, vector<1x3x16x64xbf16>, vector<1x3x16x64xbf16>, vector<1x3x16x64xbf16>, vector<1x3x16x64xbf16>, vector<1x3x16x64xbf16>, vector<1x3x16x64xbf16> -> vector<1x3x16x576xbf16>
    %56 = vector.extract_strided_slice %35 {offsets = [0, 10, 0, 0], sizes = [1, 3, 16, 64], strides = [1, 1, 1, 1]} : vector<1x25x16x64xbf16> to vector<1x3x16x64xbf16>
    %57 = vector.extract_strided_slice %35 {offsets = [0, 11, 0, 0], sizes = [1, 3, 16, 64], strides = [1, 1, 1, 1]} : vector<1x25x16x64xbf16> to vector<1x3x16x64xbf16>
    %58 = vector.extract_strided_slice %35 {offsets = [0, 12, 0, 0], sizes = [1, 3, 16, 64], strides = [1, 1, 1, 1]} : vector<1x25x16x64xbf16> to vector<1x3x16x64xbf16>
    %59 = vector.extract_strided_slice %35 {offsets = [0, 15, 0, 0], sizes = [1, 3, 16, 64], strides = [1, 1, 1, 1]} : vector<1x25x16x64xbf16> to vector<1x3x16x64xbf16>
    %60 = vector.extract_strided_slice %35 {offsets = [0, 16, 0, 0], sizes = [1, 3, 16, 64], strides = [1, 1, 1, 1]} : vector<1x25x16x64xbf16> to vector<1x3x16x64xbf16>
    %61 = vector.extract_strided_slice %35 {offsets = [0, 17, 0, 0], sizes = [1, 3, 16, 64], strides = [1, 1, 1, 1]} : vector<1x25x16x64xbf16> to vector<1x3x16x64xbf16>
    %62 = vector.extract_strided_slice %35 {offsets = [0, 20, 0, 0], sizes = [1, 3, 16, 64], strides = [1, 1, 1, 1]} : vector<1x25x16x64xbf16> to vector<1x3x16x64xbf16>
    %63 = vector.extract_strided_slice %35 {offsets = [0, 21, 0, 0], sizes = [1, 3, 16, 64], strides = [1, 1, 1, 1]} : vector<1x25x16x64xbf16> to vector<1x3x16x64xbf16>
    %64 = vector.extract_strided_slice %35 {offsets = [0, 22, 0, 0], sizes = [1, 3, 16, 64], strides = [1, 1, 1, 1]} : vector<1x25x16x64xbf16> to vector<1x3x16x64xbf16>
    %65 = tpu.concatenate %56, %57, %58, %59, %60, %61, %62, %63, %64 in 3 : vector<1x3x16x64xbf16>, vector<1x3x16x64xbf16>, vector<1x3x16x64xbf16>, vector<1x3x16x64xbf16>, vector<1x3x16x64xbf16>, vector<1x3x16x64xbf16>, vector<1x3x16x64xbf16>, vector<1x3x16x64xbf16>, vector<1x3x16x64xbf16> -> vector<1x3x16x576xbf16>
    %66 = tpu.concatenate %45, %55, %65 in 0 : vector<1x3x16x576xbf16>, vector<1x3x16x576xbf16>, vector<1x3x16x576xbf16> -> vector<3x3x16x576xbf16>
    %67 = vector.shape_cast %66 : vector<3x3x16x576xbf16> to vector<144x576xbf16>
    %c0_18 = arith.constant 0 : index
    %c0_19 = arith.constant 0 : index
    %68 = vector.load %arg5[%c0_18, %c0_19] : memref<576x64xbf16, #tpu.memory_space<vmem>>, vector<576x64xbf16>
    %cst_20 = arith.constant dense<0.000000e+00> : vector<144x64xf32>
    %69 = tpu.matmul %67, %68, %cst_20 {dimension_numbers = #tpu.dot_dimension_numbers<[1], [0], [0], [1], [0, 0, 1, 1], [], []>} : vector<144x576xbf16>, vector<576x64xbf16>, vector<144x64xf32> -> vector<144x64xf32>
    %c1 = arith.constant 1 : index
    %c0_21 = arith.constant 0 : index
    %70 = vector.load %arg8[%c1, %c0_21] : memref<3x64xf32, #tpu.memory_space<vmem>>, vector<1x64xf32>
    %71 = vector.broadcast %70 : vector<1x64xf32> to vector<144x64xf32>
    %72 = arith.mulf %69, %71 : vector<144x64xf32>
    %c1_22 = arith.constant 1 : index
    %c0_23 = arith.constant 0 : index
    %73 = vector.load %arg9[%c1_22, %c0_23] : memref<3x64xf32, #tpu.memory_space<vmem>>, vector<1x64xf32>
    %74 = vector.broadcast %73 : vector<1x64xf32> to vector<144x64xf32>
    %75 = arith.addf %72, %74 : vector<144x64xf32>
    %cst_24 = arith.constant 0.000000e+00 : f32
    %76 = vector.broadcast %cst_24 : f32 to vector<144x64xf32>
    %77 = arith.maximumf %75, %76 : vector<144x64xf32>
    %78 = arith.truncf %77 : vector<144x64xf32> to vector<144x64xbf16>
    %79 = vector.shape_cast %78 : vector<144x64xbf16> to vector<3x1x3x16x64xbf16>
    %80 = vector.extract_strided_slice %79 {offsets = [0, 0, 0, 0, 0], sizes = [1, 1, 1, 16, 64], strides = [1, 1, 1, 1, 1]} : vector<3x1x3x16x64xbf16> to vector<1x1x1x16x64xbf16>
    %81 = vector.shape_cast %80 : vector<1x1x1x16x64xbf16> to vector<1x16x64xbf16>
    %82 = vector.shape_cast %81 : vector<1x16x64xbf16> to vector<16x64xbf16>
    %83 = vector.extract_strided_slice %79 {offsets = [0, 0, 1, 0, 0], sizes = [1, 1, 1, 16, 64], strides = [1, 1, 1, 1, 1]} : vector<3x1x3x16x64xbf16> to vector<1x1x1x16x64xbf16>
    %84 = vector.shape_cast %83 : vector<1x1x1x16x64xbf16> to vector<1x16x64xbf16>
    %85 = vector.shape_cast %84 : vector<1x16x64xbf16> to vector<16x64xbf16>
    %86 = vector.extract_strided_slice %79 {offsets = [0, 0, 2, 0, 0], sizes = [1, 1, 1, 16, 64], strides = [1, 1, 1, 1, 1]} : vector<3x1x3x16x64xbf16> to vector<1x1x1x16x64xbf16>
    %87 = vector.shape_cast %86 : vector<1x1x1x16x64xbf16> to vector<1x16x64xbf16>
    %88 = vector.shape_cast %87 : vector<1x16x64xbf16> to vector<16x64xbf16>
    %89 = vector.extract_strided_slice %79 {offsets = [1, 0, 0, 0, 0], sizes = [1, 1, 1, 16, 64], strides = [1, 1, 1, 1, 1]} : vector<3x1x3x16x64xbf16> to vector<1x1x1x16x64xbf16>
    %90 = vector.shape_cast %89 : vector<1x1x1x16x64xbf16> to vector<1x16x64xbf16>
    %91 = vector.shape_cast %90 : vector<1x16x64xbf16> to vector<16x64xbf16>
    %92 = vector.extract_strided_slice %79 {offsets = [1, 0, 1, 0, 0], sizes = [1, 1, 1, 16, 64], strides = [1, 1, 1, 1, 1]} : vector<3x1x3x16x64xbf16> to vector<1x1x1x16x64xbf16>
    %93 = vector.shape_cast %92 : vector<1x1x1x16x64xbf16> to vector<1x16x64xbf16>
    %94 = vector.shape_cast %93 : vector<1x16x64xbf16> to vector<16x64xbf16>
    %95 = vector.extract_strided_slice %79 {offsets = [1, 0, 2, 0, 0], sizes = [1, 1, 1, 16, 64], strides = [1, 1, 1, 1, 1]} : vector<3x1x3x16x64xbf16> to vector<1x1x1x16x64xbf16>
    %96 = vector.shape_cast %95 : vector<1x1x1x16x64xbf16> to vector<1x16x64xbf16>
    %97 = vector.shape_cast %96 : vector<1x16x64xbf16> to vector<16x64xbf16>
    %98 = vector.extract_strided_slice %79 {offsets = [2, 0, 0, 0, 0], sizes = [1, 1, 1, 16, 64], strides = [1, 1, 1, 1, 1]} : vector<3x1x3x16x64xbf16> to vector<1x1x1x16x64xbf16>
    %99 = vector.shape_cast %98 : vector<1x1x1x16x64xbf16> to vector<1x16x64xbf16>
    %100 = vector.shape_cast %99 : vector<1x16x64xbf16> to vector<16x64xbf16>
    %101 = vector.extract_strided_slice %79 {offsets = [2, 0, 1, 0, 0], sizes = [1, 1, 1, 16, 64], strides = [1, 1, 1, 1, 1]} : vector<3x1x3x16x64xbf16> to vector<1x1x1x16x64xbf16>
    %102 = vector.shape_cast %101 : vector<1x1x1x16x64xbf16> to vector<1x16x64xbf16>
    %103 = vector.shape_cast %102 : vector<1x16x64xbf16> to vector<16x64xbf16>
    %104 = vector.extract_strided_slice %79 {offsets = [2, 0, 2, 0, 0], sizes = [1, 1, 1, 16, 64], strides = [1, 1, 1, 1, 1]} : vector<3x1x3x16x64xbf16> to vector<1x1x1x16x64xbf16>
    %105 = vector.shape_cast %104 : vector<1x1x1x16x64xbf16> to vector<1x16x64xbf16>
    %106 = vector.shape_cast %105 : vector<1x16x64xbf16> to vector<16x64xbf16>
    %107 = tpu.concatenate %82, %85, %88, %91, %94, %97, %100, %103, %106 in 1 : vector<16x64xbf16>, vector<16x64xbf16>, vector<16x64xbf16>, vector<16x64xbf16>, vector<16x64xbf16>, vector<16x64xbf16>, vector<16x64xbf16>, vector<16x64xbf16>, vector<16x64xbf16> -> vector<16x576xbf16>
    %c0_25 = arith.constant 0 : index
    %c0_26 = arith.constant 0 : index
    %108 = vector.load %arg6[%c0_25, %c0_26] : memref<576x64xbf16, #tpu.memory_space<vmem>>, vector<576x64xbf16>
    %cst_27 = arith.constant dense<0.000000e+00> : vector<16x64xf32>
    %109 = tpu.matmul %107, %108, %cst_27 {dimension_numbers = #tpu.dot_dimension_numbers<[1], [0], [0], [1], [0, 0, 1, 1], [], []>} : vector<16x576xbf16>, vector<576x64xbf16>, vector<16x64xf32> -> vector<16x64xf32>
    %c2 = arith.constant 2 : index
    %c0_28 = arith.constant 0 : index
    %110 = vector.load %arg8[%c2, %c0_28] : memref<3x64xf32, #tpu.memory_space<vmem>>, vector<1x64xf32>
    %111 = vector.broadcast %110 : vector<1x64xf32> to vector<16x64xf32>
    %112 = arith.mulf %109, %111 : vector<16x64xf32>
    %c2_29 = arith.constant 2 : index
    %c0_30 = arith.constant 0 : index
    %113 = vector.load %arg9[%c2_29, %c0_30] : memref<3x64xf32, #tpu.memory_space<vmem>>, vector<1x64xf32>
    %114 = vector.broadcast %113 : vector<1x64xf32> to vector<16x64xf32>
    %115 = arith.addf %112, %114 : vector<16x64xf32>
    %cst_31 = arith.constant 0.000000e+00 : f32
    %116 = vector.broadcast %cst_31 : f32 to vector<16x64xf32>
    %117 = arith.maximumf %115, %116 : vector<16x64xf32>
    %118 = arith.truncf %117 : vector<16x64xf32> to vector<16x64xbf16>
    %c0_32 = arith.constant 0 : index
    %c0_33 = arith.constant 0 : index
    %119 = vector.load %arg7[%c0_32, %c0_33] : memref<64x640xbf16, #tpu.memory_space<vmem>>, vector<64x640xbf16>
    %cst_34 = arith.constant dense<0.000000e+00> : vector<16x640xf32>
    %120 = tpu.matmul %118, %119, %cst_34 {dimension_numbers = #tpu.dot_dimension_numbers<[1], [0], [0], [1], [0, 0, 1, 1], [], []>} : vector<16x64xbf16>, vector<64x640xbf16>, vector<16x640xf32> -> vector<16x640xf32>
    %c0_35 = arith.constant 0 : index
    %c0_36 = arith.constant 0 : index
    %121 = vector.load %arg10[%c0_35, %c0_36] : memref<1x640xf32, #tpu.memory_space<vmem>>, vector<1x640xf32>
    %122 = vector.broadcast %121 : vector<1x640xf32> to vector<16x640xf32>
    %123 = arith.mulf %120, %122 : vector<16x640xf32>
    %c0_37 = arith.constant 0 : index
    %c0_38 = arith.constant 0 : index
    %124 = vector.load %arg11[%c0_37, %c0_38] : memref<1x640xf32, #tpu.memory_space<vmem>>, vector<1x640xf32>
    %125 = vector.broadcast %124 : vector<1x640xf32> to vector<16x640xf32>
    %126 = arith.addf %123, %125 : vector<16x640xf32>
    %127 = arith.addf %126, %6 : vector<16x640xf32>
    %cst_39 = arith.constant 0.000000e+00 : f32
    %128 = vector.broadcast %cst_39 : f32 to vector<16x640xf32>
    %129 = arith.maximumf %127, %128 : vector<16x640xf32>
    %130 = vector.shape_cast %129 : vector<16x640xf32> to vector<1x16x640xf32>
    %c0_40 = arith.constant 0 : index
    %c0_41 = arith.constant 0 : index
    %c0_42 = arith.constant 0 : index
    %131 = vector.load %arg12[%c0_40, %c0_41, %c0_42] : memref<1x16x640xf32, #tpu.memory_space<vmem>>, vector<1x16x640xf32>
    tpu.vector_store %arg12[%c0_40, %c0_41, %c0_42], %130 {strides = array<i32>} : memref<1x16x640xf32, #tpu.memory_space<vmem>>, vector<1x16x640xf32>,
    return
  }
  func.func @transform_0(%arg0: i32) -> (i32, i32, i32) {
    %c0_i32 = arith.constant 0 : i32
    %c0_i32_0 = arith.constant 0 : i32
    %c0_i32_1 = arith.constant 0 : i32
    return %arg0, %c0_i32, %c0_i32_0 : i32, i32, i32
  }
  func.func @transform_1(%arg0: i32) -> (i32, i32) {
    %c0_i32 = arith.constant 0 : i32
    %c0_i32_0 = arith.constant 0 : i32
    %c0_i32_1 = arith.constant 0 : i32
    return %c0_i32, %c0_i32_0 : i32, i32
  }
  func.func @transform_2(%arg0: i32) -> (i32, i32) {
    %c0_i32 = arith.constant 0 : i32
    %c0_i32_0 = arith.constant 0 : i32
    %c0_i32_1 = arith.constant 0 : i32
    return %c0_i32, %c0_i32_0 : i32, i32
  }
  func.func @transform_3(%arg0: i32) -> (i32, i32) {
    %c0_i32 = arith.constant 0 : i32
    %c0_i32_0 = arith.constant 0 : i32
    %c0_i32_1 = arith.constant 0 : i32
    return %c0_i32, %c0_i32_0 : i32, i32
  }
  func.func @transform_4(%arg0: i32) -> (i32, i32) {
    %c0_i32 = arith.constant 0 : i32
    %c0_i32_0 = arith.constant 0 : i32
    %c0_i32_1 = arith.constant 0 : i32
    return %c0_i32, %c0_i32_0 : i32, i32
  }
  func.func @transform_5(%arg0: i32) -> (i32, i32) {
    %c0_i32 = arith.constant 0 : i32
    %c0_i32_0 = arith.constant 0 : i32
    %c0_i32_1 = arith.constant 0 : i32
    return %c0_i32, %c0_i32_0 : i32, i32
  }
  func.func @transform_6(%arg0: i32) -> (i32, i32) {
    %c0_i32 = arith.constant 0 : i32
    %c0_i32_0 = arith.constant 0 : i32
    %c0_i32_1 = arith.constant 0 : i32
    return %c0_i32, %c0_i32_0 : i32, i32
  }
  func.func @transform_7(%arg0: i32) -> (i32, i32) {
    %c0_i32 = arith.constant 0 : i32
    %c0_i32_0 = arith.constant 0 : i32
    %c0_i32_1 = arith.constant 0 : i32
    return %c0_i32, %c0_i32_0 : i32, i32
  }
  func.func @transform_8(%arg0: i32) -> (i32, i32) {
    %c0_i32 = arith.constant 0 : i32
    %c0_i32_0 = arith.constant 0 : i32
    %c0_i32_1 = arith.constant 0 : i32
    return %c0_i32, %c0_i32_0 : i32, i32
  }
  func.func @transform_9(%arg0: i32) -> (i32, i32) {
    %c0_i32 = arith.constant 0 : i32
    %c0_i32_0 = arith.constant 0 : i32
    %c0_i32_1 = arith.constant 0 : i32
    return %c0_i32, %c0_i32_0 : i32, i32
  }
  func.func @transform_10(%arg0: i32) -> (i32, i32) {
    %c0_i32 = arith.constant 0 : i32
    %c0_i32_0 = arith.constant 0 : i32
    %c0_i32_1 = arith.constant 0 : i32
    return %c0_i32, %c0_i32_0 : i32, i32
  }
  func.func @transform_11(%arg0: i32) -> (i32, i32, i32) {
    %c0_i32 = arith.constant 0 : i32
    %c0_i32_0 = arith.constant 0 : i32
    %c0_i32_1 = arith.constant 0 : i32
    return %arg0, %c0_i32, %c0_i32_0 : i32, i32, i32
  }
}

</mosaic_0001>

<llo_original>
// kernel: prenet_forward.1
$region0: #{prenet_forward.1}
  #allocation0 [shape = 'u32[]', space=smem, size = 0x4, offset = 0x4, fixed_abs, tag = 'smem constant byte address 0x4 - core index']
  #allocation1 [shape = 'u32[144,128]{1,0:T(1,128)}', space=vmem, size = 0x12000, scoped, tag = 'internal scratch']
  %s0 = inlined_call_operand.vmem [shape: f32[2,16,48], index: 0, kind: input, shape index: {}]
  %s1 = inlined_call_operand.vmem [shape: bf16[400,16], index: 1, kind: input, shape index: {}]
  %s2 = inlined_call_operand.vmem [shape: bf16[48,640], index: 2, kind: input, shape index: {}]
  %s3 = inlined_call_operand.vmem [shape: bf16[640,64], index: 3, kind: input, shape index: {}]
  %s4 = inlined_call_operand.vmem [shape: bf16[576,64], index: 4, kind: input, shape index: {}]
  %s5 = inlined_call_operand.vmem [shape: bf16[576,64], index: 5, kind: input, shape index: {}]
  %s6 = inlined_call_operand.vmem [shape: bf16[64,640], index: 6, kind: input, shape index: {}]
  %s7 = inlined_call_operand.vmem [shape: f32[3,64], index: 7, kind: input, shape index: {}]
  %s8 = inlined_call_operand.vmem [shape: f32[3,64], index: 8, kind: input, shape index: {}]
  %s9 = inlined_call_operand.vmem [shape: f32[1,640], index: 9, kind: input, shape index: {}]
  %s10 = inlined_call_operand.vmem [shape: f32[1,640], index: 10, kind: input, shape index: {}]
  %s11 = inlined_call_operand.vmem [shape: f32[2,16,640], index: 11, kind: output, shape index: {}]
  %s12 = sld [smem:[#allocation0]]
  $region77: #{prenet_forward.1} parent=0
    _
  %s14 = ssub.s32 1, %s12
  %s15 = scalar_select 0, %s14, %s12
  loop: start=0, step=1, limit=4
  $region2: #{prenet_forward.1} parent=0 // loop_pre_header
    _
  $region3: #{prenet_forward.1} parent=0 // loop_header
    %s17 = sphi 0, %s21
    %p18 = scmp.ge.s32.totalorder %s17, 4
    %s27 = sphi 0, %s29
    %s30 = sphi 0, %s27
    %s31 = sphi 0, %s30
    %s47 = sphi 0, %s31
    %s51 = sphi 0, %s51
    %s53 = sphi 0, %s51
    %s54 = sphi 0, %s53
    %s68 = sphi 0, %s54
    %s72 = sphi 0, %s72
    %s74 = sphi 0, %s72
    %s75 = sphi 0, %s74
    %s89 = sphi 0, %s75
    %s93 = sphi 0, %s93
    %s95 = sphi 0, %s93
    %s96 = sphi 0, %s95
    %s110 = sphi 0, %s96
    %s114 = sphi 0, %s114
    %s116 = sphi 0, %s114
    %s117 = sphi 0, %s116
    %s131 = sphi 0, %s117
    %s135 = sphi 0, %s135
    %s137 = sphi 0, %s135
    %s138 = sphi 0, %s137
    %s152 = sphi 0, %s138
    %s156 = sphi 0, %s156
    %s158 = sphi 0, %s156
    %s159 = sphi 0, %s158
    %s173 = sphi 0, %s159
    %s177 = sphi 0, %s177
    %s179 = sphi 0, %s177
    %s180 = sphi 0, %s179
    %s194 = sphi 0, %s180
    %s198 = sphi 0, %s198
    %s200 = sphi 0, %s198
    %s201 = sphi 0, %s200
    %s215 = sphi 0, %s201
    %s219 = sphi 0, %s219
    %s221 = sphi 0, %s219
    %s222 = sphi 0, %s221
    %s236 = sphi 0, %s222
    %s240 = sphi 0, %s240
    %s242 = sphi 0, %s240
    %s243 = sphi 0, %s242
    %s257 = sphi 0, %s243
    %s263 = sphi 0, %s265
    %s266 = sphi 0, %s263
    %s267 = sphi 0, %s266
    %s283 = sphi 0, %s267
  $region4: #{prenet_forward.1} parent=0 // loop_header_branch
    %20 = sbr.rel (%p18) target = $region8
  $region5: #{prenet_forward.1} parent=0 // loop_body
    %s22 = ssub.s32 %s17, 1
    %s23 = ssub.s32 %s17, 2
    %s24 = sadd.s32 %s17, 1
    %s25 = ssub.s32 %s17, %s24
    %p26 = scmp.eq.s32.totalorder %s25, 0
    %s28 = sadd.s32 %s27, 1
    %s29 = scalar_select %p26, %s27, %s28
    %p32 = pneg %p26
    %p33 = scmp.eq.s32.totalorder %s17, 1
    %p34 = por %p32, %p33
    %p35 = scmp.ne.s32.totalorder %s27, %s30
    %p36 = scmp.eq.s32.totalorder %s17, 0
    %p37 = por %p35, %p36
    %p38 = scmp.ne.s32.totalorder %s27, %s30
    %p39 = scmp.eq.s32.totalorder %s22, 1
    %p40 = por %p38, %p39
    %p41 = scmp.ne.s32.totalorder %s30, %s31
    %p42 = scmp.eq.s32.totalorder %s22, 0
    %p43 = por %p41, %p42
    %p44 = scmp.ne.s32.totalorder %s30, %s31
    %p45 = scmp.eq.s32.totalorder %s23, 1
    %p46 = por %p44, %p45
    %p48 = scmp.ne.s32.totalorder %s31, %s47
    %p49 = scmp.eq.s32.totalorder %s23, 0
    %p50 = por %p48, %p49
    %s52 = sadd.s32 %s51, 1
    %p55 = scmp.eq.s32.totalorder %s17, 1
    %p56 = scmp.ne.s32.totalorder %s51, %s53
    %p57 = scmp.eq.s32.totalorder %s17, 0
    %p58 = por %p56, %p57
    %p59 = scmp.ne.s32.totalorder %s51, %s53
    %p60 = scmp.eq.s32.totalorder %s22, 1
    %p61 = por %p59, %p60
    %p62 = scmp.ne.s32.totalorder %s53, %s54
    %p63 = scmp.eq.s32.totalorder %s22, 0
    %p64 = por %p62, %p63
    %p65 = scmp.ne.s32.totalorder %s53, %s54
    %p66 = scmp.eq.s32.totalorder %s23, 1
    %p67 = por %p65, %p66
    %p69 = scmp.ne.s32.totalorder %s54, %s68
    %p70 = scmp.eq.s32.totalorder %s23, 0
    %p71 = por %p69, %p70
    %s73 = sadd.s32 %s72, 1
    %p76 = scmp.eq.s32.totalorder %s17, 1
    %p77 = scmp.ne.s32.totalorder %s72, %s74
    %p78 = scmp.eq.s32.totalorder %s17, 0
    %p79 = por %p77, %p78
    %p80 = scmp.ne.s32.totalorder %s72, %s74
    %p81 = scmp.eq.s32.totalorder %s22, 1
    %p82 = por %p80, %p81
    %p83 = scmp.ne.s32.totalorder %s74, %s75
    %p84 = scmp.eq.s32.totalorder %s22, 0
    %p85 = por %p83, %p84
    %p86 = scmp.ne.s32.totalorder %s74, %s75
    %p87 = scmp.eq.s32.totalorder %s23, 1
    %p88 = por %p86, %p87
    %p90 = scmp.ne.s32.totalorder %s75, %s89
    %p91 = scmp.eq.s32.totalorder %s23, 0
    %p92 = por %p90, %p91
    %s94 = sadd.s32 %s93, 1
    %p97 = scmp.eq.s32.totalorder %s17, 1
    %p98 = scmp.ne.s32.totalorder %s93, %s95
    %p99 = scmp.eq.s32.totalorder %s17, 0
    %p100 = por %p98, %p99
    %p101 = scmp.ne.s32.totalorder %s93, %s95
    %p102 = scmp.eq.s32.totalorder %s22, 1
    %p103 = por %p101, %p102
    %p104 = scmp.ne.s32.totalorder %s95, %s96
    %p105 = scmp.eq.s32.totalorder %s22, 0
    %p106 = por %p104, %p105
    %p107 = scmp.ne.s32.totalorder %s95, %s96
    %p108 = scmp.eq.s32.totalorder %s23, 1
    %p109 = por %p107, %p108
    %p111 = scmp.ne.s32.totalorder %s96, %s110
    %p112 = scmp.eq.s32.totalorder %s23, 0
    %p113 = por %p111, %p112
    %s115 = sadd.s32 %s114, 1
    %p118 = scmp.eq.s32.totalorder %s17, 1
    %p119 = scmp.ne.s32.totalorder %s114, %s116
    %p120 = scmp.eq.s32.totalorder %s17, 0
    %p121 = por %p119, %p120
    %p122 = scmp.ne.s32.totalorder %s114, %s116
    %p123 = scmp.eq.s32.totalorder %s22, 1
    %p124 = por %p122, %p123
    %p125 = scmp.ne.s32.totalorder %s116, %s117
    %p126 = scmp.eq.s32.totalorder %s22, 0
    %p127 = por %p125, %p126
    %p128 = scmp.ne.s32.totalorder %s116, %s117
    %p129 = scmp.eq.s32.totalorder %s23, 1
    %p130 = por %p128, %p129
    %p132 = scmp.ne.s32.totalorder %s117, %s131
    %p133 = scmp.eq.s32.totalorder %s23, 0
    %p134 = por %p132, %p133
    %s136 = sadd.s32 %s135, 1
    %p139 = scmp.eq.s32.totalorder %s17, 1
    %p140 = scmp.ne.s32.totalorder %s135, %s137
    %p141 = scmp.eq.s32.totalorder %s17, 0
    %p142 = por %p140, %p141
    %p143 = scmp.ne.s32.totalorder %s135, %s137
    %p144 = scmp.eq.s32.totalorder %s22, 1
    %p145 = por %p143, %p144
    %p146 = scmp.ne.s32.totalorder %s137, %s138
    %p147 = scmp.eq.s32.totalorder %s22, 0
    %p148 = por %p146, %p147
    %p149 = scmp.ne.s32.totalorder %s137, %s138
    %p150 = scmp.eq.s32.totalorder %s23, 1
    %p151 = por %p149, %p150
    %p153 = scmp.ne.s32.totalorder %s138, %s152
    %p154 = scmp.eq.s32.totalorder %s23, 0
    %p155 = por %p153, %p154
    %s157 = sadd.s32 %s156, 1
    %p160 = scmp.eq.s32.totalorder %s17, 1
    %p161 = scmp.ne.s32.totalorder %s156, %s158
    %p162 = scmp.eq.s32.totalorder %s17, 0
    %p163 = por %p161, %p162
    %p164 = scmp.ne.s32.totalorder %s156, %s158
    %p165 = scmp.eq.s32.totalorder %s22, 1
    %p166 = por %p164, %p165
    %p167 = scmp.ne.s32.totalorder %s158, %s159
    %p168 = scmp.eq.s32.totalorder %s22, 0
    %p169 = por %p167, %p168
    %p170 = scmp.ne.s32.totalorder %s158, %s159
    %p171 = scmp.eq.s32.totalorder %s23, 1
    %p172 = por %p170, %p171
    %p174 = scmp.ne.s32.totalorder %s159, %s173
    %p175 = scmp.eq.s32.totalorder %s23, 0
    %p176 = por %p174, %p175
    %s178 = sadd.s32 %s177, 1
    %p181 = scmp.eq.s32.totalorder %s17, 1
    %p182 = scmp.ne.s32.totalorder %s177, %s179
    %p183 = scmp.eq.s32.totalorder %s17, 0
    %p184 = por %p182, %p183
    %p185 = scmp.ne.s32.totalorder %s177, %s179
    %p186 = scmp.eq.s32.totalorder %s22, 1
    %p187 = por %p185, %p186
    %p188 = scmp.ne.s32.totalorder %s179, %s180
    %p189 = scmp.eq.s32.totalorder %s22, 0
    %p190 = por %p188, %p189
    %p191 = scmp.ne.s32.totalorder %s179, %s180
    %p192 = scmp.eq.s32.totalorder %s23, 1
    %p193 = por %p191, %p192
    %p195 = scmp.ne.s32.totalorder %s180, %s194
    %p196 = scmp.eq.s32.totalorder %s23, 0
    %p197 = por %p195, %p196
    %s199 = sadd.s32 %s198, 1
    %p202 = scmp.eq.s32.totalorder %s17, 1
    %p203 = scmp.ne.s32.totalorder %s198, %s200
    %p204 = scmp.eq.s32.totalorder %s17, 0
    %p205 = por %p203, %p204
    %p206 = scmp.ne.s32.totalorder %s198, %s200
    %p207 = scmp.eq.s32.totalorder %s22, 1
    %p208 = por %p206, %p207
    %p209 = scmp.ne.s32.totalorder %s200, %s201
    %p210 = scmp.eq.s32.totalorder %s22, 0
    %p211 = por %p209, %p210
    %p212 = scmp.ne.s32.totalorder %s200, %s201
    %p213 = scmp.eq.s32.totalorder %s23, 1
    %p214 = por %p212, %p213
    %p216 = scmp.ne.s32.totalorder %s201, %s215
    %p217 = scmp.eq.s32.totalorder %s23, 0
    %p218 = por %p216, %p217
    %s220 = sadd.s32 %s219, 1
    %p223 = scmp.eq.s32.totalorder %s17, 1
    %p224 = scmp.ne.s32.totalorder %s219, %s221
    %p225 = scmp.eq.s32.totalorder %s17, 0
    %p226 = por %p224, %p225
    %p227 = scmp.ne.s32.totalorder %s219, %s221
    %p228 = scmp.eq.s32.totalorder %s22, 1
    %p229 = por %p227, %p228
    %p230 = scmp.ne.s32.totalorder %s221, %s222
    %p231 = scmp.eq.s32.totalorder %s22, 0
    %p232 = por %p230, %p231
    %p233 = scmp.ne.s32.totalorder %s221, %s222
    %p234 = scmp.eq.s32.totalorder %s23, 1
    %p235 = por %p233, %p234
    %p237 = scmp.ne.s32.totalorder %s222, %s236
    %p238 = scmp.eq.s32.totalorder %s23, 0
    %p239 = por %p237, %p238
    %s241 = sadd.s32 %s240, 1
    %p244 = scmp.eq.s32.totalorder %s17, 1
    %p245 = scmp.ne.s32.totalorder %s240, %s242
    %p246 = scmp.eq.s32.totalorder %s17, 0
    %p247 = por %p245, %p246
    %p248 = scmp.ne.s32.totalorder %s240, %s242
    %p249 = scmp.eq.s32.totalorder %s22, 1
    %p250 = por %p248, %p249
    %p251 = scmp.ne.s32.totalorder %s242, %s243
    %p252 = scmp.eq.s32.totalorder %s22, 0
    %p253 = por %p251, %p252
    %p254 = scmp.ne.s32.totalorder %s242, %s243
    %p255 = scmp.eq.s32.totalorder %s23, 1
    %p256 = por %p254, %p255
    %p258 = scmp.ne.s32.totalorder %s243, %s257
    %p259 = scmp.eq.s32.totalorder %s23, 0
    %p260 = por %p258, %p259
    %s261 = ssub.s32 %s17, %s24
    %p262 = scmp.eq.s32.totalorder %s261, 0
    %s264 = sadd.s32 %s263, 1
    %s265 = scalar_select %p262, %s263, %s264
    %p268 = pneg %p262
    %p269 = scmp.eq.s32.totalorder %s17, 1
    %p270 = por %p268, %p269
    %p271 = scmp.ne.s32.totalorder %s263, %s266
    %p272 = scmp.eq.s32.totalorder %s17, 0
    %p273 = por %p271, %p272
    %p274 = scmp.ne.s32.totalorder %s263, %s266
    %p275 = scmp.eq.s32.totalorder %s22, 1
    %p276 = por %p274, %p275
    %p277 = scmp.ne.s32.totalorder %s266, %s267
    %p278 = scmp.eq.s32.totalorder %s22, 0
    %p279 = por %p277, %p278
    %p280 = scmp.ne.s32.totalorder %s266, %s267
    %p281 = scmp.eq.s32.totalorder %s23, 1
    %p282 = por %p280, %p281
    %p284 = scmp.ne.s32.totalorder %s267, %s283
    %p285 = scmp.eq.s32.totalorder %s23, 0
    %p286 = por %p284, %p285
    %p287 = scmp.le.s32.totalorder 1, %s17
    %p288 = scmp.lt.s32.totalorder %s17, 3
    %p289 = pnand %p287, %p288
    %p290 = pneg %p289
    // Predicated region
    $region9: #{prenet_forward.1} parent=5 // pred_check
      _
    $region10: #{prenet_forward.1} parent=5 // pred_check_branch
      %292 = sbr.rel (%p289) target = $region12
    $region11: #{prenet_forward.1} parent=5 // pred_region
      %s293 = ssub.s32 %s17, 1
      // Predicated region
      $region13: #{prenet_forward.1} parent=11 // pred_check
        %p294 = pneg %p64
      $region14: #{prenet_forward.1} parent=11 // pred_check_branch
        %296 = sbr.rel (%p294) target = $region16
      $region15: #{prenet_forward.1} parent=11 // pred_region
        _
      $region16: #{prenet_forward.1} parent=11 // pred_fallthru
        _
      // Predicated region
      $region17: #{prenet_forward.1} parent=11 // pred_check
        %p297 = pneg %p85
      $region18: #{prenet_forward.1} parent=11 // pred_check_branch
        %299 = sbr.rel (%p297) target = $region20
      $region19: #{prenet_forward.1} parent=11 // pred_region
        _
      $region20: #{prenet_forward.1} parent=11 // pred_fallthru
        _
      // Predicated region
      $region21: #{prenet_forward.1} parent=11 // pred_check
        %p300 = pneg %p106
      $region22: #{prenet_forward.1} parent=11 // pred_check_branch
        %302 = sbr.rel (%p300) target = $region24
      $region23: #{prenet_forward.1} parent=11 // pred_region
        _
      $region24: #{prenet_forward.1} parent=11 // pred_fallthru
        _
      // Predicated region
      $region25: #{prenet_forward.1} parent=11 // pred_check
        %p303 = pneg %p127
      $region26: #{prenet_forward.1} parent=11 // pred_check_branch
        %305 = sbr.rel (%p303) target = $region28
      $region27: #{prenet_forward.1} parent=11 // pred_region
        _
      $region28: #{prenet_forward.1} parent=11 // pred_fallthru
        _
      // Predicated region
      $region29: #{prenet_forward.1} parent=11 // pred_check
        %p306 = pneg %p148
      $region30: #{prenet_forward.1} parent=11 // pred_check_branch
        %308 = sbr.rel (%p306) target = $region32
      $region31: #{prenet_forward.1} parent=11 // pred_region
        _
      $region32: #{prenet_forward.1} parent=11 // pred_fallthru
        _
      // Predicated region
      $region33: #{prenet_forward.1} parent=11 // pred_check
        %p309 = pneg %p169
      $region34: #{prenet_forward.1} parent=11 // pred_check_branch
        %311 = sbr.rel (%p309) target = $region36
      $region35: #{prenet_forward.1} parent=11 // pred_region
        _
      $region36: #{prenet_forward.1} parent=11 // pred_fallthru
        _
      // Predicated region
      $region37: #{prenet_forward.1} parent=11 // pred_check
        %p312 = pneg %p190
      $region38: #{prenet_forward.1} parent=11 // pred_check_branch
        %314 = sbr.rel (%p312) target = $region40
      $region39: #{prenet_forward.1} parent=11 // pred_region
        _
      $region40: #{prenet_forward.1} parent=11 // pred_fallthru
        _
      // Predicated region
      $region41: #{prenet_forward.1} parent=11 // pred_check
        %p315 = pneg %p211
      $region42: #{prenet_forward.1} parent=11 // pred_check_branch
        %317 = sbr.rel (%p315) target = $region44
      $region43: #{prenet_forward.1} parent=11 // pred_region
        _
      $region44: #{prenet_forward.1} parent=11 // pred_fallthru
        _
      // Predicated region
      $region45: #{prenet_forward.1} parent=11 // pred_check
        %p318 = pneg %p232
      $region46: #{prenet_forward.1} parent=11 // pred_check_branch
        %320 = sbr.rel (%p318) target = $region48
      $region47: #{prenet_forward.1} parent=11 // pred_region
        _
      $region48: #{prenet_forward.1} parent=11 // pred_fallthru
        _
      // Predicated region
      $region49: #{prenet_forward.1} parent=11 // pred_check
        %p321 = pneg %p253
      $region50: #{prenet_forward.1} parent=11 // pred_check_branch
        %323 = sbr.rel (%p321) target = $region52
      $region51: #{prenet_forward.1} parent=11 // pred_region
        _
      $region52: #{prenet_forward.1} parent=11 // pred_fallthru
        _
    $region12: #{prenet_forward.1} parent=5 // pred_fallthru
      _
    %p324 = scmp.lt.s32.totalorder %s17, 2
    // Predicated region
    $region53: #{prenet_forward.1} parent=5 // pred_check
      %p325 = pneg %p324
    $region54: #{prenet_forward.1} parent=5 // pred_check_branch
      %327 = sbr.rel (%p325) target = $region56
    $region55: #{prenet_forward.1} parent=5 // pred_region
      // Predicated region
      $region57: #{prenet_forward.1} parent=55 // pred_check
        %p328 = pneg %p37
      $region58: #{prenet_forward.1} parent=55 // pred_check_branch
        %330 = sbr.rel (%p328) target = $region60
      $region59: #{prenet_forward.1} parent=55 // pred_region
        %p331 = scmp.lt.s32.totalorder %s17, 1
        %s332 = scalar_select %p331, %s17, 1
        %s333 = smul.addr %s332, 2
        %s334 = smul.addr %s333, 8
        %s335 = scalar_lea.vmem %s0, %s334
      $region60: #{prenet_forward.1} parent=55 // pred_fallthru
        _
    $region56: #{prenet_forward.1} parent=5 // pred_fallthru
      _
    %p336 = scmp.le.s32.totalorder 1, %s17
    %p337 = scmp.lt.s32.totalorder %s17, 3
    %p338 = pnand %p336, %p337
    %p339 = pneg %p338
    // Predicated region
    $region61: #{prenet_forward.1} parent=5 // pred_check
      _
    $region62: #{prenet_forward.1} parent=5 // pred_check_branch
      %341 = sbr.rel (%p338) target = $region64
    $region63: #{prenet_forward.1} parent=5 // pred_region
      %s342 = ssub.s32 %s17, 1
      %p343 = scmp.lt.s32.totalorder %s22, 1
      %s344 = scalar_select %p343, %s22, 1
      %s345 = smul.addr %s344, 2
      %s346 = smul.addr %s345, 8
      %s347 = scalar_lea.vmem %s0, %s346
      %p348 = pneg %p43
      %p349 = pneg %p40
      %p350 = pneg %p64
      %p351 = pneg %p61
      %p352 = pneg %p85
      %p353 = pneg %p82
      %p354 = pneg %p106
      %p355 = pneg %p103
      %p356 = pneg %p127
      %p357 = pneg %p124
      %p358 = pneg %p148
      %p359 = pneg %p145
      %p360 = pneg %p169
      %p361 = pneg %p166
      %p362 = pneg %p190
      %p363 = pneg %p187
      %p364 = pneg %p211
      %p365 = pneg %p208
      %p366 = pneg %p232
      %p367 = pneg %p229
      %p368 = pneg %p253
      %p369 = pneg %p250
      %p370 = pneg %p279
      %p371 = pneg %p276
      %p372 = scmp.lt.s32.totalorder %s22, 1
      %s373 = scalar_select %p372, %s22, 1
      %s374 = smul.addr %s373, 10
      %s375 = smul.addr %s374, 8
      %s376 = scalar_lea.vmem %s11, %s375
      %p377 = scmp.lt.s32.totalorder %s22, 1
      %s378 = scalar_select %p377, %s22, 1
      %s379 = smul.addr %s378, 2
      %s380 = smul.addr %s379, 8
      %s381 = scalar_lea.vmem %s0, %s380
      %p382 = scmp.lt.s32.totalorder %s22, 1
      %s383 = scalar_select %p382, %s22, 1
      %s384 = smul.addr %s383, 10
      %s385 = smul.addr %s384, 8
      %s386 = scalar_lea.vmem %s11, %s385
      %v388 = vld [vmem:[%s381] sm:$0xff]
      %v389 = vld [vmem:[%s381 + $0x8] sm:$0xff]
      %v390 = vld [vmem:[%s2] sm:$0xff]
      %v391 = vld [vmem:[%s2 + $0x8] sm:$0xff]
      %v392 = vld [vmem:[%s2 + $0x10] sm:$0xf]
      %v393 = vld [vmem:[%s2 + $0x14] sm:$0xff]
      %v394 = vld [vmem:[%s2 + $0x1c] sm:$0xff]
      %v395 = vld [vmem:[%s2 + $0x24] sm:$0xf]
      %v396 = vld [vmem:[%s2 + $0x28] sm:$0xff]
      %v397 = vld [vmem:[%s2 + $0x30] sm:$0xff]
      %v398 = vld [vmem:[%s2 + $0x38] sm:$0xf]
      %v399 = vld [vmem:[%s2 + $0x3c] sm:$0xff]
      %v400 = vld [vmem:[%s2 + $0x44] sm:$0xff]
      %v401 = vld [vmem:[%s2 + $0x4c] sm:$0xf]
      %v402 = vld [vmem:[%s2 + $0x50] sm:$0xff]
      %v403 = vld [vmem:[%s2 + $0x58] sm:$0xff]
      %v404 = vld [vmem:[%s2 + $0x60] sm:$0xf]
      %v405 = vld [vmem:[%s2 + $0x64] sm:$0xff]
      %v406 = vld [vmem:[%s2 + $0x6c] sm:$0xff]
      %v407 = vld [vmem:[%s2 + $0x74] sm:$0xf]
      %v408 = vpack.c.bf16 %v389, %v388
      %v427 = vunpack.c.l.b16 %v390
      %v428 = vunpack.c.h.b16 %v390
      %v429 = vunpack.c.l.b16 %v391
      %v430 = vunpack.c.h.b16 %v391
      %v431 = vunpack.c.l.b16 %v392
      %v432 = vunpack.c.l.b16 %v393
      %v433 = vunpack.c.h.b16 %v393
      %v434 = vunpack.c.l.b16 %v394
      %v435 = vunpack.c.h.b16 %v394
      %v436 = vunpack.c.l.b16 %v395
      %v437 = vunpack.c.l.b16 %v396
      %v438 = vunpack.c.h.b16 %v396
      %v439 = vunpack.c.l.b16 %v397
      %v440 = vunpack.c.h.b16 %v397
      %v441 = vunpack.c.l.b16 %v398
      %v442 = vunpack.c.l.b16 %v399
      %v443 = vunpack.c.h.b16 %v399
      %v444 = vunpack.c.l.b16 %v400
      %v445 = vunpack.c.h.b16 %v400
      %v446 = vunpack.c.l.b16 %v401
      %v447 = vunpack.c.l.b16 %v402
      %v448 = vunpack.c.h.b16 %v402
      %v449 = vunpack.c.l.b16 %v403
      %v450 = vunpack.c.h.b16 %v403
      %v451 = vunpack.c.l.b16 %v404
      %v452 = vunpack.c.l.b16 %v405
      %v453 = vunpack.c.h.b16 %v405
      %v454 = vunpack.c.l.b16 %v406
      %v455 = vunpack.c.h.b16 %v406
      %v456 = vunpack.c.l.b16 %v407
      %v457 = vpack.c.b16 %v432, %v427
      %v458 = vpack.c.b16 %v433, %v428
      %v459 = vpack.c.b16 %v434, %v429
      %v460 = vpack.c.b16 %v435, %v430
      %v461 = vpack.c.b16 %v436, %v431
      %v462 = vpack.c.b16 %v442, %v437
      %v463 = vpack.c.b16 %v443, %v438
      %v464 = vpack.c.b16 %v444, %v439
      %v465 = vpack.c.b16 %v445, %v440
      %v466 = vpack.c.b16 %v446, %v441
      %v467 = vpack.c.b16 %v452, %v447
      %v468 = vpack.c.b16 %v453, %v448
      %v469 = vpack.c.b16 %v454, %v449
      %v470 = vpack.c.b16 %v455, %v450
      %v471 = vpack.c.b16 %v456, %v451
      %vm487 = vcmask 392192
      %v489 = vsel %vm487, %v408, 0
      %491 = vmatprep.subr.bf16.mxu0 0
      %492 = vmatpush1.bf16.msra.mxu0 0
      %493 = vmatprep.subr.bf16.mxu0 0
      %494 = vmatpush1.bf16.msra.mxu0 0
      %495 = vmatprep.subr.bf16.mxu0 0
      %496 = vmatpush1.bf16.msra.mxu0 0
      %497 = vmatprep.subr.bf16.mxu0 0
      %498 = vmatpush1.bf16.msra.mxu0 0
      %499 = vmatprep.subr.bf16.mxu0 0
      %500 = vmatpush1.bf16.msra.mxu0 0
      %501 = vmatprep.subr.bf16.mxu0 %v468
      %502 = vmatpush1.bf16.msra.mxu0 %v467
      %503 = vmatprep.subr.bf16.mxu0 %v463
      %504 = vmatpush1.bf16.msra.mxu0 %v462
      %505 = vmatprep.subr.bf16.mxu0 %v458
      %506 = vmatpush1.bf16.msra.mxu0 %v457
      %507 = vmatprep.subr.bf16.mxu0 0
      %508 = vmatpush2.bf16.msra.mxu0 0
      %509 = vmatprep.subr.bf16.mxu0 0
      %510 = vmatpush2.bf16.msra.mxu0 0
      %511 = vmatprep.subr.bf16.mxu0 0
      %512 = vmatpush2.bf16.msra.mxu0 0
      %513 = vmatprep.subr.bf16.mxu0 0
      %514 = vmatpush2.bf16.msra.mxu0 0
      %515 = vmatprep.subr.bf16.mxu0 0
      %516 = vmatpush2.bf16.msra.mxu0 0
      %517 = vmatprep.subr.bf16.mxu0 0
      %518 = vmatpush2.bf16.msra.mxu0 0
      %519 = vmatprep.subr.bf16.mxu0 0
      %520 = vmatpush2.bf16.msra.mxu0 0
      %521 = vmatprep.subr.bf16.mxu0 0
      %522 = vmatpush2.bf16.msra.mxu0 0
      %523 = vmatprep.mubr.bf16.mxu0 0
      %524 = vmatmul.mubr.bf16.gmra.mxu0 %v489
      %v525 = vpop.f32.mrf.mxu0
      %v526 = vadd.f32 0.0, %v525
      %v527 = vpop.f32.mrf.mxu0
      %v528 = vadd.f32 0.0, %v527
      %v529 = vpop.f32.mrf.mxu0
      %v530 = vadd.f32 0.0, %v529
      %v531 = vpop.f32.mrf.mxu0
      %v532 = vadd.f32 0.0, %v531
      %533 = vdwg.mxu0
      %534 = vmatprep.subr.bf16.mxu0 0
      %535 = vmatpush1.bf16.msra.mxu0 0
      %536 = vmatprep.subr.bf16.mxu0 0
      %537 = vmatpush1.bf16.msra.mxu0 0
      %538 = vmatprep.subr.bf16.mxu0 0
      %539 = vmatpush1.bf16.msra.mxu0 0
      %540 = vmatprep.subr.bf16.mxu0 0
      %541 = vmatpush1.bf16.msra.mxu0 0
      %542 = vmatprep.subr.bf16.mxu0 0
      %543 = vmatpush1.bf16.msra.mxu0 0
      %544 = vmatprep.subr.bf16.mxu0 %v470
      %545 = vmatpush1.bf16.msra.mxu0 %v469
      %546 = vmatprep.subr.bf16.mxu0 %v465
      %547 = vmatpush1.bf16.msra.mxu0 %v464
      %548 = vmatprep.subr.bf16.mxu0 %v460
      %549 = vmatpush1.bf16.msra.mxu0 %v459
      %550 = vmatprep.subr.bf16.mxu0 0
      %551 = vmatpush2.bf16.msra.mxu0 0
      %552 = vmatprep.subr.bf16.mxu0 0
      %553 = vmatpush2.bf16.msra.mxu0 0
      %554 = vmatprep.subr.bf16.mxu0 0
      %555 = vmatpush2.bf16.msra.mxu0 0
      %556 = vmatprep.subr.bf16.mxu0 0
      %557 = vmatpush2.bf16.msra.mxu0 0
      %558 = vmatprep.subr.bf16.mxu0 0
      %559 = vmatpush2.bf16.msra.mxu0 0
      %560 = vmatprep.subr.bf16.mxu0 0
      %561 = vmatpush2.bf16.msra.mxu0 0
      %562 = vmatprep.subr.bf16.mxu0 0
      %563 = vmatpush2.bf16.msra.mxu0 0
      %564 = vmatprep.subr.bf16.mxu0 0
      %565 = vmatpush2.bf16.msra.mxu0 0
      %566 = vmatprep.mubr.bf16.mxu0 0
      %567 = vmatmul.mubr.bf16.gmra.mxu0 %v489
      %v568 = vpop.f32.mrf.mxu0
      %v569 = vadd.f32 0.0, %v568
      %v570 = vpop.f32.mrf.mxu0
      %v571 = vadd.f32 0.0, %v570
      %v572 = vpop.f32.mrf.mxu0
      %v573 = vadd.f32 0.0, %v572
      %v574 = vpop.f32.mrf.mxu0
      %v575 = vadd.f32 0.0, %v574
      %576 = vdwg.mxu0
      %577 = vmatprep.subr.bf16.mxu0 0
      %578 = vmatpush1.bf16.msra.mxu0 0
      %579 = vmatprep.subr.bf16.mxu0 0
      %580 = vmatpush1.bf16.msra.mxu0 0
      %581 = vmatprep.subr.bf16.mxu0 0
      %582 = vmatpush1.bf16.msra.mxu0 0
      %583 = vmatprep.subr.bf16.mxu0 0
      %584 = vmatpush1.bf16.msra.mxu0 0
      %585 = vmatprep.subr.bf16.mxu0 0
      %586 = vmatpush1.bf16.msra.mxu0 0
      %587 = vmatprep.subr.bf16.mxu0 0
      %588 = vmatpush1.bf16.msra.mxu0 %v471
      %589 = vmatprep.subr.bf16.mxu0 0
      %590 = vmatpush1.bf16.msra.mxu0 %v466
      %591 = vmatprep.subr.bf16.mxu0 0
      %592 = vmatpush1.bf16.msra.mxu0 %v461
      %593 = vmatprep.subr.bf16.mxu0 0
      %594 = vmatpush2.bf16.msra.mxu0 0
      %595 = vmatprep.subr.bf16.mxu0 0
      %596 = vmatpush2.bf16.msra.mxu0 0
      %597 = vmatprep.subr.bf16.mxu0 0
      %598 = vmatpush2.bf16.msra.mxu0 0
      %599 = vmatprep.subr.bf16.mxu0 0
      %600 = vmatpush2.bf16.msra.mxu0 0
      %601 = vmatprep.subr.bf16.mxu0 0
      %602 = vmatpush2.bf16.msra.mxu0 0
      %603 = vmatprep.subr.bf16.mxu0 0
      %604 = vmatpush2.bf16.msra.mxu0 0
      %605 = vmatprep.subr.bf16.mxu0 0
      %606 = vmatpush2.bf16.msra.mxu0 0
      %607 = vmatprep.subr.bf16.mxu0 0
      %608 = vmatpush2.bf16.msra.mxu0 0
      %609 = vmatprep.mubr.bf16.mxu0 0
      %610 = vmatmul.mubr.bf16.gmra.mxu0 %v489
      %v611 = vpop.f32.mrf.mxu0
      %v612 = vadd.f32 0.0, %v611
      %v613 = vpop.f32.mrf.mxu0
      %v614 = vpop.f32.mrf.mxu0
      %v615 = vadd.f32 0.0, %v614
      %v616 = vpop.f32.mrf.mxu0
      %617 = vdwg.mxu0
      %v618 = vmax.f32 %v526, 0.0
      %v619 = vmax.f32 %v528, 0.0
      %v620 = vmax.f32 %v569, 0.0
      %v621 = vmax.f32 %v571, 0.0
      %v622 = vmax.f32 %v612, 0.0
      %v623 = vmax.f32 %v530, 0.0
      %v624 = vmax.f32 %v532, 0.0
      %v625 = vmax.f32 %v573, 0.0
      %v626 = vmax.f32 %v575, 0.0
      %v627 = vmax.f32 %v615, 0.0
      %v628 = vmul.f32 %v618, %v618
      %v629 = vmul.f32 %v619, %v619
      %v630 = vmul.f32 %v620, %v620
      %v631 = vmul.f32 %v621, %v621
      %v632 = vmul.f32 %v622, %v622
      %v633 = vmul.f32 %v623, %v623
      %v634 = vmul.f32 %v624, %v624
      %v635 = vmul.f32 %v625, %v625
      %v636 = vmul.f32 %v626, %v626
      %v637 = vmul.f32 %v627, %v627
      %v638 = vadd.f32 %v628, %v629
      %v639 = vadd.f32 %v638, %v630
      %v640 = vadd.f32 %v639, %v631
      %v641 = vadd.f32 %v640, %v632
      %642 = vadd.xlane.f32.xlu0 %v641
      %v643 = vpop.xlane.xlu0 %642
      %v644 = vadd.f32 %v633, %v634
      %v645 = vadd.f32 %v644, %v635
      %v646 = vadd.f32 %v645, %v636
      %v647 = vadd.f32 %v646, %v637
      %648 = vadd.xlane.f32.xlu0 %v647
      %v649 = vpop.xlane.xlu0 %648
      %v650 = vrsqrt.pop %v643
      %v651 = vmul.f32 %v643, %v650
      %vm652 = vcmp.eq.f32.partialorder %v643, inf
      %v653 = vsel %vm652, %v643, %v651
      %vm654 = vcmp.eq.f32.partialorder %v643, 0.0
      %v655 = vand.u32 %v643, 2147483648
      %v656 = vsel %vm654, %v655, %v653
      %v657 = vrsqrt.pop %v649
      %v658 = vmul.f32 %v649, %v657
      %vm659 = vcmp.eq.f32.partialorder %v649, inf
      %v660 = vsel %vm659, %v649, %v658
      %vm661 = vcmp.eq.f32.partialorder %v649, 0.0
      %v662 = vand.u32 %v649, 2147483648
      %v663 = vsel %vm661, %v662, %v660
      %v664 = vmax.f32 %v656, 1e-12
      %v665 = vmax.f32 %v663, 1e-12
      %v666 = vrcp.pop %v664
      %v667 = vmul.f32 %v618, %v666
      %v668 = vmul.f32 %v619, %v666
      %v669 = vmul.f32 %v620, %v666
      %v670 = vmul.f32 %v621, %v666
      %v671 = vmul.f32 %v622, %v666
      %v672 = vrcp.pop %v665
      %v673 = vmul.f32 %v623, %v672
      %v674 = vmul.f32 %v624, %v672
      %v675 = vmul.f32 %v625, %v672
      %v676 = vmul.f32 %v626, %v672
      %v677 = vmul.f32 %v627, %v672
      %v678 = vpack.c.bf16 %v673, %v667
      %v679 = vpack.c.bf16 %v674, %v668
      %v680 = vpack.c.bf16 %v675, %v669
      %v681 = vpack.c.bf16 %v676, %v670
      %v682 = vpack.c.bf16 %v677, %v671
      %v683 = vld [vmem:[%s1] sm:$0xf]
      %v684 = vld [vmem:[%s1 + $0x4] sm:$0xf]
      %v685 = vld [vmem:[%s1 + $0x8] sm:$0xf]
      %v686 = vld [vmem:[%s1 + $0xc] sm:$0xf]
      %v687 = vld [vmem:[%s1 + $0x10] sm:$0xf]
      %v688 = vld [vmem:[%s1 + $0x14] sm:$0xf]
      %v689 = vld [vmem:[%s1 + $0x18] sm:$0xf]
      %v690 = vld [vmem:[%s1 + $0x1c] sm:$0xf]
      %v691 = vld [vmem:[%s1 + $0x20] sm:$0xf]
      %v692 = vld [vmem:[%s1 + $0x24] sm:$0xf]
      %v693 = vld [vmem:[%s1 + $0x28] sm:$0xf]
      %v694 = vld [vmem:[%s1 + $0x2c] sm:$0xf]
      %v695 = vld [vmem:[%s1 + $0x30] sm:$0xf]
      %v696 = vld [vmem:[%s1 + $0x34] sm:$0xf]
      %v697 = vld [vmem:[%s1 + $0x38] sm:$0xf]
      %v698 = vld [vmem:[%s1 + $0x3c] sm:$0xf]
      %v699 = vld [vmem:[%s1 + $0x40] sm:$0xf]
      %v700 = vld [vmem:[%s1 + $0x44] sm:$0xf]
      %v701 = vld [vmem:[%s1 + $0x48] sm:$0xf]
      %v702 = vld [vmem:[%s1 + $0x4c] sm:$0xf]
      %v703 = vld [vmem:[%s1 + $0x50] sm:$0xf]
      %v704 = vld [vmem:[%s1 + $0x54] sm:$0xf]
      %v705 = vld [vmem:[%s1 + $0x58] sm:$0xf]
      %v706 = vld [vmem:[%s1 + $0x5c] sm:$0xf]
      %v707 = vld [vmem:[%s1 + $0x60] sm:$0xf]
      %v708 = vld [vmem:[%s1 + $0x64] sm:$0xf]
      %v709 = vld [vmem:[%s1 + $0x68] sm:$0xf]
      %v710 = vld [vmem:[%s1 + $0x6c] sm:$0xf]
      %v711 = vld [vmem:[%s1 + $0x70] sm:$0xf]
      %v712 = vld [vmem:[%s1 + $0x74] sm:$0xf]
      %v713 = vld [vmem:[%s1 + $0x78] sm:$0xf]
      %v714 = vld [vmem:[%s1 + $0x7c] sm:$0xf]
      %v715 = vld [vmem:[%s1 + $0x80] sm:$0xf]
      %v716 = vld [vmem:[%s1 + $0x84] sm:$0xf]
      %v717 = vld [vmem:[%s1 + $0x88] sm:$0xf]
      %v718 = vld [vmem:[%s1 + $0x8c] sm:$0xf]
      %v719 = vld [vmem:[%s1 + $0x90] sm:$0xf]
      %v720 = vld [vmem:[%s1 + $0x94] sm:$0xf]
      %v721 = vld [vmem:[%s1 + $0x98] sm:$0xf]
      %v722 = vld [vmem:[%s1 + $0x9c] sm:$0xf]
      %v723 = vld [vmem:[%s1 + $0xa0] sm:$0xf]
      %v724 = vld [vmem:[%s1 + $0xa4] sm:$0xf]
      %v725 = vld [vmem:[%s1 + $0xa8] sm:$0xf]
      %v726 = vld [vmem:[%s1 + $0xac] sm:$0xf]
      %v727 = vld [vmem:[%s1 + $0xb0] sm:$0xf]
      %v728 = vld [vmem:[%s1 + $0xb4] sm:$0xf]
      %v729 = vld [vmem:[%s1 + $0xb8] sm:$0xf]
      %v730 = vld [vmem:[%s1 + $0xbc] sm:$0xf]
      %v731 = vld [vmem:[%s1 + $0xc0] sm:$0xf]
      %v732 = vld [vmem:[%s1 + $0xc4] sm:$0xf]
      %v783 = vunpack.c.l.b16 %v683
      %v784 = vunpack.c.l.b16 %v684
      %v785 = vunpack.c.l.b16 %v685
      %v786 = vunpack.c.l.b16 %v686
      %v787 = vunpack.c.l.b16 %v687
      %v788 = vunpack.c.l.b16 %v688
      %v789 = vunpack.c.l.b16 %v689
      %v790 = vunpack.c.l.b16 %v690
      %v791 = vunpack.c.l.b16 %v691
      %v792 = vunpack.c.l.b16 %v692
      %v793 = vunpack.c.l.b16 %v693
      %v794 = vunpack.c.l.b16 %v694
      %v795 = vunpack.c.l.b16 %v695
      %v796 = vunpack.c.l.b16 %v696
      %v797 = vunpack.c.l.b16 %v697
      %v798 = vunpack.c.l.b16 %v698
      %v799 = vunpack.c.l.b16 %v699
      %v800 = vunpack.c.l.b16 %v700
      %v801 = vunpack.c.l.b16 %v701
      %v802 = vunpack.c.l.b16 %v702
      %v803 = vunpack.c.l.b16 %v703
      %v804 = vunpack.c.l.b16 %v704
      %v805 = vunpack.c.l.b16 %v705
      %v806 = vunpack.c.l.b16 %v706
      %v807 = vunpack.c.l.b16 %v707
      %v808 = vunpack.c.l.b16 %v708
      %v809 = vunpack.c.l.b16 %v709
      %v810 = vunpack.c.l.b16 %v710
      %v811 = vunpack.c.l.b16 %v711
      %v812 = vunpack.c.l.b16 %v712
      %v813 = vunpack.c.l.b16 %v713
      %v814 = vunpack.c.l.b16 %v714
      %v815 = vunpack.c.l.b16 %v715
      %v816 = vunpack.c.l.b16 %v716
      %v817 = vunpack.c.l.b16 %v717
      %v818 = vunpack.c.l.b16 %v718
      %v819 = vunpack.c.l.b16 %v719
      %v820 = vunpack.c.l.b16 %v720
      %v821 = vunpack.c.l.b16 %v721
      %v822 = vunpack.c.l.b16 %v722
      %v823 = vunpack.c.l.b16 %v723
      %v824 = vunpack.c.l.b16 %v724
      %v825 = vunpack.c.l.b16 %v725
      %v826 = vunpack.c.l.b16 %v726
      %v827 = vunpack.c.l.b16 %v727
      %v828 = vunpack.c.l.b16 %v728
      %v829 = vunpack.c.l.b16 %v729
      %v830 = vunpack.c.l.b16 %v730
      %v831 = vunpack.c.l.b16 %v731
      %v832 = vunpack.c.l.b16 %v732
      %v833 = vpack.c.b16 %v784, %v783
      %v834 = vpack.c.b16 %v786, %v785
      %v835 = vpack.c.b16 %v788, %v787
      %v836 = vpack.c.b16 %v790, %v789
      %v837 = vpack.c.b16 %v792, %v791
      %v838 = vpack.c.b16 %v794, %v793
      %v839 = vpack.c.b16 %v796, %v795
      %v840 = vpack.c.b16 %v798, %v797
      %v841 = vpack.c.b16 %v800, %v799
      %v842 = vpack.c.b16 %v802, %v801
      %v843 = vpack.c.b16 %v804, %v803
      %v844 = vpack.c.b16 %v806, %v805
      %v845 = vpack.c.b16 %v808, %v807
      %v846 = vpack.c.b16 %v810, %v809
      %v847 = vpack.c.b16 %v812, %v811
      %v848 = vpack.c.b16 %v814, %v813
      %v849 = vpack.c.b16 %v816, %v815
      %v850 = vpack.c.b16 %v818, %v817
      %v851 = vpack.c.b16 %v820, %v819
      %v852 = vpack.c.b16 %v822, %v821
      %v853 = vpack.c.b16 %v824, %v823
      %v854 = vpack.c.b16 %v826, %v825
      %v855 = vpack.c.b16 %v828, %v827
      %v856 = vpack.c.b16 %v830, %v829
      %v857 = vpack.c.b16 %v832, %v831
      %vm858 = vcmask 130048
      %v860 = vsel %vm858, %v833, 0
      %v863 = vsel %vm858, %v834, 0
      %v866 = vsel %vm858, %v835, 0
      %v869 = vsel %vm858, %v836, 0
      %v872 = vsel %vm858, %v837, 0
      %v875 = vsel %vm858, %v838, 0
      %v878 = vsel %vm858, %v839, 0
      %v881 = vsel %vm858, %v840, 0
      %v884 = vsel %vm858, %v841, 0
      %v887 = vsel %vm858, %v842, 0
      %v890 = vsel %vm858, %v843, 0
      %v893 = vsel %vm858, %v844, 0
      %v896 = vsel %vm858, %v845, 0
      %v899 = vsel %vm858, %v846, 0
      %v902 = vsel %vm858, %v847, 0
      %v905 = vsel %vm858, %v848, 0
      %v908 = vsel %vm858, %v849, 0
      %v911 = vsel %vm858, %v850, 0
      %v914 = vsel %vm858, %v851, 0
      %v917 = vsel %vm858, %v852, 0
      %v920 = vsel %vm858, %v853, 0
      %v923 = vsel %vm858, %v854, 0
      %v926 = vsel %vm858, %v855, 0
      %v929 = vsel %vm858, %v856, 0
      %v932 = vsel %vm858, %v857, 0
      %934 = vmatprep.subr.bf16.mxu0 0
      %935 = vmatpush1.bf16.msra.mxu0 0
      %936 = vmatprep.subr.bf16.mxu0 0
      %937 = vmatpush1.bf16.msra.mxu0 0
      %938 = vmatprep.subr.bf16.mxu0 0
      %939 = vmatpush1.bf16.msra.mxu0 0
      %940 = vmatprep.subr.bf16.mxu0 0
      %941 = vmatpush1.bf16.msra.mxu0 0
      %942 = vmatprep.subr.bf16.mxu0 0
      %943 = vmatpush1.bf16.msra.mxu0 0
      %944 = vmatprep.subr.bf16.mxu0 0
      %945 = vmatpush1.bf16.msra.mxu0 0
      %946 = vmatprep.subr.bf16.mxu0 0
      %947 = vmatpush1.bf16.msra.mxu0 0
      %948 = vmatprep.subr.bf16.mxu0 %v679
      %949 = vmatpush1.bf16.msra.mxu0 %v678
      %950 = vmatprep.subr.bf16.mxu0 0
      %951 = vmatpush2.bf16.msra.mxu0 0
      %952 = vmatprep.subr.bf16.mxu0 0
      %953 = vmatpush2.bf16.msra.mxu0 0
      %954 = vmatprep.subr.bf16.mxu0 0
      %955 = vmatpush2.bf16.msra.mxu0 0
      %956 = vmatprep.subr.bf16.mxu0 0
      %957 = vmatpush2.bf16.msra.mxu0 0
      %958 = vmatprep.subr.bf16.mxu0 0
      %959 = vmatpush2.bf16.msra.mxu0 0
      %960 = vmatprep.subr.bf16.mxu0 0
      %961 = vmatpush2.bf16.msra.mxu0 0
      %962 = vmatprep.subr.bf16.mxu0 0
      %963 = vmatpush2.bf16.msra.mxu0 0
      %964 = vmatprep.subr.bf16.mxu0 0
      %965 = vmatpush2.bf16.msra.mxu0 0
      %966 = vmatprep.mubr.bf16.mxu0 0
      %967 = vmatmul.mubr.bf16.gmra.mxu0 %v860
      %v968 = vpop.f32.mrf.mxu0
      %v969 = vadd.f32 0.0, %v968
      %v970 = vpop.f32.mrf.mxu0
      %v971 = vadd.f32 0.0, %v970
      %v972 = vpop.f32.mrf.mxu0
      %v973 = vadd.f32 0.0, %v972
      %v974 = vpop.f32.mrf.mxu0
      %v975 = vadd.f32 0.0, %v974
      %976 = vmatprep.mubr.bf16.mxu0 0
      %977 = vmatmul.mubr.bf16.gmra.mxu0 %v863
      %v978 = vpop.f32.mrf.mxu0
      %v979 = vadd.f32 0.0, %v978
      %v980 = vpop.f32.mrf.mxu0
      %v981 = vadd.f32 0.0, %v980
      %v982 = vpop.f32.mrf.mxu0
      %v983 = vadd.f32 0.0, %v982
      %v984 = vpop.f32.mrf.mxu0
      %v985 = vadd.f32 0.0, %v984
      %986 = vmatprep.mubr.bf16.mxu0 0
      %987 = vmatmul.mubr.bf16.gmra.mxu0 %v866
      %v988 = vpop.f32.mrf.mxu0
      %v989 = vadd.f32 0.0, %v988
      %v990 = vpop.f32.mrf.mxu0
      %v991 = vadd.f32 0.0, %v990
      %v992 = vpop.f32.mrf.mxu0
      %v993 = vadd.f32 0.0, %v992
      %v994 = vpop.f32.mrf.mxu0
      %v995 = vadd.f32 0.0, %v994
      %996 = vmatprep.mubr.bf16.mxu0 0
      %997 = vmatmul.mubr.bf16.gmra.mxu0 %v869
      %v998 = vpop.f32.mrf.mxu0
      %v999 = vadd.f32 0.0, %v998
      %v1000 = vpop.f32.mrf.mxu0
      %v1001 = vadd.f32 0.0, %v1000
      %v1002 = vpop.f32.mrf.mxu0
      %v1003 = vadd.f32 0.0, %v1002
      %v1004 = vpop.f32.mrf.mxu0
      %v1005 = vadd.f32 0.0, %v1004
      %1006 = vmatprep.mubr.bf16.mxu0 0
      %1007 = vmatmul.mubr.bf16.gmra.mxu0 %v872
      %v1008 = vpop.f32.mrf.mxu0
      %v1009 = vadd.f32 0.0, %v1008
      %v1010 = vpop.f32.mrf.mxu0
      %v1011 = vadd.f32 0.0, %v1010
      %v1012 = vpop.f32.mrf.mxu0
      %v1013 = vadd.f32 0.0, %v1012
      %v1014 = vpop.f32.mrf.mxu0
      %v1015 = vadd.f32 0.0, %v1014
      %1016 = vmatprep.mubr.bf16.mxu0 0
      %1017 = vmatmul.mubr.bf16.gmra.mxu0 %v875
      %v1018 = vpop.f32.mrf.mxu0
      %v1019 = vadd.f32 0.0, %v1018
      %v1020 = vpop.f32.mrf.mxu0
      %v1021 = vadd.f32 0.0, %v1020
      %v1022 = vpop.f32.mrf.mxu0
      %v1023 = vadd.f32 0.0, %v1022
      %v1024 = vpop.f32.mrf.mxu0
      %v1025 = vadd.f32 0.0, %v1024
      %1026 = vmatprep.mubr.bf16.mxu0 0
      %1027 = vmatmul.mubr.bf16.gmra.mxu0 %v878
      %v1028 = vpop.f32.mrf.mxu0
      %v1029 = vadd.f32 0.0, %v1028
      %v1030 = vpop.f32.mrf.mxu0
      %v1031 = vadd.f32 0.0, %v1030
      %v1032 = vpop.f32.mrf.mxu0
      %v1033 = vadd.f32 0.0, %v1032
      %v1034 = vpop.f32.mrf.mxu0
      %v1035 = vadd.f32 0.0, %v1034
      %1036 = vmatprep.mubr.bf16.mxu0 0
      %1037 = vmatmul.mubr.bf16.gmra.mxu0 %v881
      %v1038 = vpop.f32.mrf.mxu0
      %v1039 = vadd.f32 0.0, %v1038
      %v1040 = vpop.f32.mrf.mxu0
      %v1041 = vadd.f32 0.0, %v1040
      %v1042 = vpop.f32.mrf.mxu0
      %v1043 = vadd.f32 0.0, %v1042
      %v1044 = vpop.f32.mrf.mxu0
      %v1045 = vadd.f32 0.0, %v1044
      %1046 = vmatprep.mubr.bf16.mxu0 0
      %1047 = vmatmul.mubr.bf16.gmra.mxu0 %v884
      %v1048 = vpop.f32.mrf.mxu0
      %v1049 = vadd.f32 0.0, %v1048
      %v1050 = vpop.f32.mrf.mxu0
      %v1051 = vadd.f32 0.0, %v1050
      %v1052 = vpop.f32.mrf.mxu0
      %v1053 = vadd.f32 0.0, %v1052
      %v1054 = vpop.f32.mrf.mxu0
      %v1055 = vadd.f32 0.0, %v1054
      %1056 = vmatprep.mubr.bf16.mxu0 0
      %1057 = vmatmul.mubr.bf16.gmra.mxu0 %v887
      %v1058 = vpop.f32.mrf.mxu0
      %v1059 = vadd.f32 0.0, %v1058
      %v1060 = vpop.f32.mrf.mxu0
      %v1061 = vadd.f32 0.0, %v1060
      %v1062 = vpop.f32.mrf.mxu0
      %v1063 = vadd.f32 0.0, %v1062
      %v1064 = vpop.f32.mrf.mxu0
      %v1065 = vadd.f32 0.0, %v1064
      %1066 = vmatprep.mubr.bf16.mxu0 0
      %1067 = vmatmul.mubr.bf16.gmra.mxu0 %v890
      %v1068 = vpop.f32.mrf.mxu0
      %v1069 = vadd.f32 0.0, %v1068
      %v1070 = vpop.f32.mrf.mxu0
      %v1071 = vadd.f32 0.0, %v1070
      %v1072 = vpop.f32.mrf.mxu0
      %v1073 = vadd.f32 0.0, %v1072
      %v1074 = vpop.f32.mrf.mxu0
      %v1075 = vadd.f32 0.0, %v1074
      %1076 = vmatprep.mubr.bf16.mxu0 0
      %1077 = vmatmul.mubr.bf16.gmra.mxu0 %v893
      %v1078 = vpop.f32.mrf.mxu0
      %v1079 = vadd.f32 0.0, %v1078
      %v1080 = vpop.f32.mrf.mxu0
      %v1081 = vadd.f32 0.0, %v1080
      %v1082 = vpop.f32.mrf.mxu0
      %v1083 = vadd.f32 0.0, %v1082
      %v1084 = vpop.f32.mrf.mxu0
      %v1085 = vadd.f32 0.0, %v1084
      %1086 = vmatprep.mubr.bf16.mxu0 0
      %1087 = vmatmul.mubr.bf16.gmra.mxu0 %v896
      %v1088 = vpop.f32.mrf.mxu0
      %v1089 = vadd.f32 0.0, %v1088
      %v1090 = vpop.f32.mrf.mxu0
      %v1091 = vadd.f32 0.0, %v1090
      %v1092 = vpop.f32.mrf.mxu0
      %v1093 = vadd.f32 0.0, %v1092
      %v1094 = vpop.f32.mrf.mxu0
      %v1095 = vadd.f32 0.0, %v1094
      %1096 = vmatprep.mubr.bf16.mxu0 0
      %1097 = vmatmul.mubr.bf16.gmra.mxu0 %v899
      %v1098 = vpop.f32.mrf.mxu0
      %v1099 = vadd.f32 0.0, %v1098
      %v1100 = vpop.f32.mrf.mxu0
      %v1101 = vadd.f32 0.0, %v1100
      %v1102 = vpop.f32.mrf.mxu0
      %v1103 = vadd.f32 0.0, %v1102
      %v1104 = vpop.f32.mrf.mxu0
      %v1105 = vadd.f32 0.0, %v1104
      %1106 = vmatprep.mubr.bf16.mxu0 0
      %1107 = vmatmul.mubr.bf16.gmra.mxu0 %v902
      %v1108 = vpop.f32.mrf.mxu0
      %v1109 = vadd.f32 0.0, %v1108
      %v1110 = vpop.f32.mrf.mxu0
      %v1111 = vadd.f32 0.0, %v1110
      %v1112 = vpop.f32.mrf.mxu0
      %v1113 = vadd.f32 0.0, %v1112
      %v1114 = vpop.f32.mrf.mxu0
      %v1115 = vadd.f32 0.0, %v1114
      %1116 = vmatprep.mubr.bf16.mxu0 0
      %1117 = vmatmul.mubr.bf16.gmra.mxu0 %v905
      %v1118 = vpop.f32.mrf.mxu0
      %v1119 = vadd.f32 0.0, %v1118
      %v1120 = vpop.f32.mrf.mxu0
      %v1121 = vadd.f32 0.0, %v1120
      %v1122 = vpop.f32.mrf.mxu0
      %v1123 = vadd.f32 0.0, %v1122
      %v1124 = vpop.f32.mrf.mxu0
      %v1125 = vadd.f32 0.0, %v1124
      %1126 = vmatprep.mubr.bf16.mxu0 0
      %1127 = vmatmul.mubr.bf16.gmra.mxu0 %v908
      %v1128 = vpop.f32.mrf.mxu0
      %v1129 = vadd.f32 0.0, %v1128
      %v1130 = vpop.f32.mrf.mxu0
      %v1131 = vadd.f32 0.0, %v1130
      %v1132 = vpop.f32.mrf.mxu0
      %v1133 = vadd.f32 0.0, %v1132
      %v1134 = vpop.f32.mrf.mxu0
      %v1135 = vadd.f32 0.0, %v1134
      %1136 = vmatprep.mubr.bf16.mxu0 0
      %1137 = vmatmul.mubr.bf16.gmra.mxu0 %v911
      %v1138 = vpop.f32.mrf.mxu0
      %v1139 = vadd.f32 0.0, %v1138
      %v1140 = vpop.f32.mrf.mxu0
      %v1141 = vadd.f32 0.0, %v1140
      %v1142 = vpop.f32.mrf.mxu0
      %v1143 = vadd.f32 0.0, %v1142
      %v1144 = vpop.f32.mrf.mxu0
      %v1145 = vadd.f32 0.0, %v1144
      %1146 = vmatprep.mubr.bf16.mxu0 0
      %1147 = vmatmul.mubr.bf16.gmra.mxu0 %v914
      %v1148 = vpop.f32.mrf.mxu0
      %v1149 = vadd.f32 0.0, %v1148
      %v1150 = vpop.f32.mrf.mxu0
      %v1151 = vadd.f32 0.0, %v1150
      %v1152 = vpop.f32.mrf.mxu0
      %v1153 = vadd.f32 0.0, %v1152
      %v1154 = vpop.f32.mrf.mxu0
      %v1155 = vadd.f32 0.0, %v1154
      %1156 = vmatprep.mubr.bf16.mxu0 0
      %1157 = vmatmul.mubr.bf16.gmra.mxu0 %v917
      %v1158 = vpop.f32.mrf.mxu0
      %v1159 = vadd.f32 0.0, %v1158
      %v1160 = vpop.f32.mrf.mxu0
      %v1161 = vadd.f32 0.0, %v1160
      %v1162 = vpop.f32.mrf.mxu0
      %v1163 = vadd.f32 0.0, %v1162
      %v1164 = vpop.f32.mrf.mxu0
      %v1165 = vadd.f32 0.0, %v1164
      %1166 = vmatprep.mubr.bf16.mxu0 0
      %1167 = vmatmul.mubr.bf16.gmra.mxu0 %v920
      %v1168 = vpop.f32.mrf.mxu0
      %v1169 = vadd.f32 0.0, %v1168
      %v1170 = vpop.f32.mrf.mxu0
      %v1171 = vadd.f32 0.0, %v1170
      %v1172 = vpop.f32.mrf.mxu0
      %v1173 = vadd.f32 0.0, %v1172
      %v1174 = vpop.f32.mrf.mxu0
      %v1175 = vadd.f32 0.0, %v1174
      %1176 = vmatprep.mubr.bf16.mxu0 0
      %1177 = vmatmul.mubr.bf16.gmra.mxu0 %v923
      %v1178 = vpop.f32.mrf.mxu0
      %v1179 = vadd.f32 0.0, %v1178
      %v1180 = vpop.f32.mrf.mxu0
      %v1181 = vadd.f32 0.0, %v1180
      %v1182 = vpop.f32.mrf.mxu0
      %v1183 = vadd.f32 0.0, %v1182
      %v1184 = vpop.f32.mrf.mxu0
      %v1185 = vadd.f32 0.0, %v1184
      %1186 = vmatprep.mubr.bf16.mxu0 0
      %1187 = vmatmul.mubr.bf16.gmra.mxu0 %v926
      %v1188 = vpop.f32.mrf.mxu0
      %v1189 = vadd.f32 0.0, %v1188
      %v1190 = vpop.f32.mrf.mxu0
      %v1191 = vadd.f32 0.0, %v1190
      %v1192 = vpop.f32.mrf.mxu0
      %v1193 = vadd.f32 0.0, %v1192
      %v1194 = vpop.f32.mrf.mxu0
      %v1195 = vadd.f32 0.0, %v1194
      %1196 = vmatprep.mubr.bf16.mxu0 0
      %1197 = vmatmul.mubr.bf16.gmra.mxu0 %v929
      %v1198 = vpop.f32.mrf.mxu0
      %v1199 = vadd.f32 0.0, %v1198
      %v1200 = vpop.f32.mrf.mxu0
      %v1201 = vadd.f32 0.0, %v1200
      %v1202 = vpop.f32.mrf.mxu0
      %v1203 = vadd.f32 0.0, %v1202
      %v1204 = vpop.f32.mrf.mxu0
      %v1205 = vadd.f32 0.0, %v1204
      %1206 = vmatprep.mubr.bf16.mxu0 0
      %1207 = vmatmul.mubr.bf16.gmra.mxu0 %v932
      %v1208 = vpop.f32.mrf.mxu0
      %v1209 = vadd.f32 0.0, %v1208
      %v1210 = vpop.f32.mrf.mxu0
      %v1211 = vadd.f32 0.0, %v1210
      %v1212 = vpop.f32.mrf.mxu0
      %v1213 = vadd.f32 0.0, %v1212
      %v1214 = vpop.f32.mrf.mxu0
      %v1215 = vadd.f32 0.0, %v1214
      %1216 = vdwg.mxu0
      %1217 = vmatprep.subr.bf16.mxu0 0
      %1218 = vmatpush1.bf16.msra.mxu0 0
      %1219 = vmatprep.subr.bf16.mxu0 0
      %1220 = vmatpush1.bf16.msra.mxu0 0
      %1221 = vmatprep.subr.bf16.mxu0 0
      %1222 = vmatpush1.bf16.msra.mxu0 0
      %1223 = vmatprep.subr.bf16.mxu0 0
      %1224 = vmatpush1.bf16.msra.mxu0 0
      %1225 = vmatprep.subr.bf16.mxu0 0
      %1226 = vmatpush1.bf16.msra.mxu0 0
      %1227 = vmatprep.subr.bf16.mxu0 0
      %1228 = vmatpush1.bf16.msra.mxu0 0
      %1229 = vmatprep.subr.bf16.mxu0 0
      %1230 = vmatpush1.bf16.msra.mxu0 0
      %1231 = vmatprep.subr.bf16.mxu0 %v681
      %1232 = vmatpush1.bf16.msra.mxu0 %v680
      %1233 = vmatprep.subr.bf16.mxu0 0
      %1234 = vmatpush2.bf16.msra.mxu0 0
      %1235 = vmatprep.subr.bf16.mxu0 0
      %1236 = vmatpush2.bf16.msra.mxu0 0
      %1237 = vmatprep.subr.bf16.mxu0 0
      %1238 = vmatpush2.bf16.msra.mxu0 0
      %1239 = vmatprep.subr.bf16.mxu0 0
      %1240 = vmatpush2.bf16.msra.mxu0 0
      %1241 = vmatprep.subr.bf16.mxu0 0
      %1242 = vmatpush2.bf16.msra.mxu0 0
      %1243 = vmatprep.subr.bf16.mxu0 0
      %1244 = vmatpush2.bf16.msra.mxu0 0
      %1245 = vmatprep.subr.bf16.mxu0 0
      %1246 = vmatpush2.bf16.msra.mxu0 0
      %1247 = vmatprep.subr.bf16.mxu0 0
      %1248 = vmatpush2.bf16.msra.mxu0 0
      %1249 = vmatprep.mubr.bf16.mxu0 0
      %1250 = vmatmul.mubr.bf16.gmra.mxu0 %v860
      %v1251 = vpop.f32.mrf.mxu0
      %v1252 = vadd.f32 0.0, %v1251
      %v1253 = vpop.f32.mrf.mxu0
      %v1254 = vadd.f32 0.0, %v1253
      %v1255 = vpop.f32.mrf.mxu0
      %v1256 = vadd.f32 0.0, %v1255
      %v1257 = vpop.f32.mrf.mxu0
      %v1258 = vadd.f32 0.0, %v1257
      %1259 = vmatprep.mubr.bf16.mxu0 0
      %1260 = vmatmul.mubr.bf16.gmra.mxu0 %v863
      %v1261 = vpop.f32.mrf.mxu0
      %v1262 = vadd.f32 0.0, %v1261
      %v1263 = vpop.f32.mrf.mxu0
      %v1264 = vadd.f32 0.0, %v1263
      %v1265 = vpop.f32.mrf.mxu0
      %v1266 = vadd.f32 0.0, %v1265
      %v1267 = vpop.f32.mrf.mxu0
      %v1268 = vadd.f32 0.0, %v1267
      %1269 = vmatprep.mubr.bf16.mxu0 0
      %1270 = vmatmul.mubr.bf16.gmra.mxu0 %v866
      %v1271 = vpop.f32.mrf.mxu0
      %v1272 = vadd.f32 0.0, %v1271
      %v1273 = vpop.f32.mrf.mxu0
      %v1274 = vadd.f32 0.0, %v1273
      %v1275 = vpop.f32.mrf.mxu0
      %v1276 = vadd.f32 0.0, %v1275
      %v1277 = vpop.f32.mrf.mxu0
      %v1278 = vadd.f32 0.0, %v1277
      %1279 = vmatprep.mubr.bf16.mxu0 0
      %1280 = vmatmul.mubr.bf16.gmra.mxu0 %v869
      %v1281 = vpop.f32.mrf.mxu0
      %v1282 = vadd.f32 0.0, %v1281
      %v1283 = vpop.f32.mrf.mxu0
      %v1284 = vadd.f32 0.0, %v1283
      %v1285 = vpop.f32.mrf.mxu0
      %v1286 = vadd.f32 0.0, %v1285
      %v1287 = vpop.f32.mrf.mxu0
      %v1288 = vadd.f32 0.0, %v1287
      %1289 = vmatprep.mubr.bf16.mxu0 0
      %1290 = vmatmul.mubr.bf16.gmra.mxu0 %v872
      %v1291 = vpop.f32.mrf.mxu0
      %v1292 = vadd.f32 0.0, %v1291
      %v1293 = vpop.f32.mrf.mxu0
      %v1294 = vadd.f32 0.0, %v1293
      %v1295 = vpop.f32.mrf.mxu0
      %v1296 = vadd.f32 0.0, %v1295
      %v1297 = vpop.f32.mrf.mxu0
      %v1298 = vadd.f32 0.0, %v1297
      %1299 = vmatprep.mubr.bf16.mxu0 0
      %1300 = vmatmul.mubr.bf16.gmra.mxu0 %v875
      %v1301 = vpop.f32.mrf.mxu0
      %v1302 = vadd.f32 0.0, %v1301
      %v1303 = vpop.f32.mrf.mxu0
      %v1304 = vadd.f32 0.0, %v1303
      %v1305 = vpop.f32.mrf.mxu0
      %v1306 = vadd.f32 0.0, %v1305
      %v1307 = vpop.f32.mrf.mxu0
      %v1308 = vadd.f32 0.0, %v1307
      %1309 = vmatprep.mubr.bf16.mxu0 0
      %1310 = vmatmul.mubr.bf16.gmra.mxu0 %v878
      %v1311 = vpop.f32.mrf.mxu0
      %v1312 = vadd.f32 0.0, %v1311
      %v1313 = vpop.f32.mrf.mxu0
      %v1314 = vadd.f32 0.0, %v1313
      %v1315 = vpop.f32.mrf.mxu0
      %v1316 = vadd.f32 0.0, %v1315
      %v1317 = vpop.f32.mrf.mxu0
      %v1318 = vadd.f32 0.0, %v1317
      %1319 = vmatprep.mubr.bf16.mxu0 0
      %1320 = vmatmul.mubr.bf16.gmra.mxu0 %v881
      %v1321 = vpop.f32.mrf.mxu0
      %v1322 = vadd.f32 0.0, %v1321
      %v1323 = vpop.f32.mrf.mxu0
      %v1324 = vadd.f32 0.0, %v1323
      %v1325 = vpop.f32.mrf.mxu0
      %v1326 = vadd.f32 0.0, %v1325
      %v1327 = vpop.f32.mrf.mxu0
      %v1328 = vadd.f32 0.0, %v1327
      %1329 = vmatprep.mubr.bf16.mxu0 0
      %1330 = vmatmul.mubr.bf16.gmra.mxu0 %v884
      %v1331 = vpop.f32.mrf.mxu0
      %v1332 = vadd.f32 0.0, %v1331
      %v1333 = vpop.f32.mrf.mxu0
      %v1334 = vadd.f32 0.0, %v1333
      %v1335 = vpop.f32.mrf.mxu0
      %v1336 = vadd.f32 0.0, %v1335
      %v1337 = vpop.f32.mrf.mxu0
      %v1338 = vadd.f32 0.0, %v1337
      %1339 = vmatprep.mubr.bf16.mxu0 0
      %1340 = vmatmul.mubr.bf16.gmra.mxu0 %v887
      %v1341 = vpop.f32.mrf.mxu0
      %v1342 = vadd.f32 0.0, %v1341
      %v1343 = vpop.f32.mrf.mxu0
      %v1344 = vadd.f32 0.0, %v1343
      %v1345 = vpop.f32.mrf.mxu0
      %v1346 = vadd.f32 0.0, %v1345
      %v1347 = vpop.f32.mrf.mxu0
      %v1348 = vadd.f32 0.0, %v1347
      %1349 = vmatprep.mubr.bf16.mxu0 0
      %1350 = vmatmul.mubr.bf16.gmra.mxu0 %v890
      %v1351 = vpop.f32.mrf.mxu0
      %v1352 = vadd.f32 0.0, %v1351
      %v1353 = vpop.f32.mrf.mxu0
      %v1354 = vadd.f32 0.0, %v1353
      %v1355 = vpop.f32.mrf.mxu0
      %v1356 = vadd.f32 0.0, %v1355
      %v1357 = vpop.f32.mrf.mxu0
      %v1358 = vadd.f32 0.0, %v1357
      %1359 = vmatprep.mubr.bf16.mxu0 0
      %1360 = vmatmul.mubr.bf16.gmra.mxu0 %v893
      %v1361 = vpop.f32.mrf.mxu0
      %v1362 = vadd.f32 0.0, %v1361
      %v1363 = vpop.f32.mrf.mxu0
      %v1364 = vadd.f32 0.0, %v1363
      %v1365 = vpop.f32.mrf.mxu0
      %v1366 = vadd.f32 0.0, %v1365
      %v1367 = vpop.f32.mrf.mxu0
      %v1368 = vadd.f32 0.0, %v1367
      %1369 = vmatprep.mubr.bf16.mxu0 0
      %1370 = vmatmul.mubr.bf16.gmra.mxu0 %v896
      %v1371 = vpop.f32.mrf.mxu0
      %v1372 = vadd.f32 0.0, %v1371
      %v1373 = vpop.f32.mrf.mxu0
      %v1374 = vadd.f32 0.0, %v1373
      %v1375 = vpop.f32.mrf.mxu0
      %v1376 = vadd.f32 0.0, %v1375
      %v1377 = vpop.f32.mrf.mxu0
      %v1378 = vadd.f32 0.0, %v1377
      %1379 = vmatprep.mubr.bf16.mxu0 0
      %1380 = vmatmul.mubr.bf16.gmra.mxu0 %v899
      %v1381 = vpop.f32.mrf.mxu0
      %v1382 = vadd.f32 0.0, %v1381
      %v1383 = vpop.f32.mrf.mxu0
      %v1384 = vadd.f32 0.0, %v1383
      %v1385 = vpop.f32.mrf.mxu0
      %v1386 = vadd.f32 0.0, %v1385
      %v1387 = vpop.f32.mrf.mxu0
      %v1388 = vadd.f32 0.0, %v1387
      %1389 = vmatprep.mubr.bf16.mxu0 0
      %1390 = vmatmul.mubr.bf16.gmra.mxu0 %v902
      %v1391 = vpop.f32.mrf.mxu0
      %v1392 = vadd.f32 0.0, %v1391
      %v1393 = vpop.f32.mrf.mxu0
      %v1394 = vadd.f32 0.0, %v1393
      %v1395 = vpop.f32.mrf.mxu0
      %v1396 = vadd.f32 0.0, %v1395
      %v1397 = vpop.f32.mrf.mxu0
      %v1398 = vadd.f32 0.0, %v1397
      %1399 = vmatprep.mubr.bf16.mxu0 0
      %1400 = vmatmul.mubr.bf16.gmra.mxu0 %v905
      %v1401 = vpop.f32.mrf.mxu0
      %v1402 = vadd.f32 0.0, %v1401
      %v1403 = vpop.f32.mrf.mxu0
      %v1404 = vadd.f32 0.0, %v1403
      %v1405 = vpop.f32.mrf.mxu0
      %v1406 = vadd.f32 0.0, %v1405
      %v1407 = vpop.f32.mrf.mxu0
      %v1408 = vadd.f32 0.0, %v1407
      %1409 = vmatprep.mubr.bf16.mxu0 0
      %1410 = vmatmul.mubr.bf16.gmra.mxu0 %v908
      %v1411 = vpop.f32.mrf.mxu0
      %v1412 = vadd.f32 0.0, %v1411
      %v1413 = vpop.f32.mrf.mxu0
      %v1414 = vadd.f32 0.0, %v1413
      %v1415 = vpop.f32.mrf.mxu0
      %v1416 = vadd.f32 0.0, %v1415
      %v1417 = vpop.f32.mrf.mxu0
      %v1418 = vadd.f32 0.0, %v1417
      %1419 = vmatprep.mubr.bf16.mxu0 0
      %1420 = vmatmul.mubr.bf16.gmra.mxu0 %v911
      %v1421 = vpop.f32.mrf.mxu0
      %v1422 = vadd.f32 0.0, %v1421
      %v1423 = vpop.f32.mrf.mxu0
      %v1424 = vadd.f32 0.0, %v1423
      %v1425 = vpop.f32.mrf.mxu0
      %v1426 = vadd.f32 0.0, %v1425
      %v1427 = vpop.f32.mrf.mxu0
      %v1428 = vadd.f32 0.0, %v1427
      %1429 = vmatprep.mubr.bf16.mxu0 0
      %1430 = vmatmul.mubr.bf16.gmra.mxu0 %v914
      %v1431 = vpop.f32.mrf.mxu0
      %v1432 = vadd.f32 0.0, %v1431
      %v1433 = vpop.f32.mrf.mxu0
      %v1434 = vadd.f32 0.0, %v1433
      %v1435 = vpop.f32.mrf.mxu0
      %v1436 = vadd.f32 0.0, %v1435
      %v1437 = vpop.f32.mrf.mxu0
      %v1438 = vadd.f32 0.0, %v1437
      %1439 = vmatprep.mubr.bf16.mxu0 0
      %1440 = vmatmul.mubr.bf16.gmra.mxu0 %v917
      %v1441 = vpop.f32.mrf.mxu0
      %v1442 = vadd.f32 0.0, %v1441
      %v1443 = vpop.f32.mrf.mxu0
      %v1444 = vadd.f32 0.0, %v1443
      %v1445 = vpop.f32.mrf.mxu0
      %v1446 = vadd.f32 0.0, %v1445
      %v1447 = vpop.f32.mrf.mxu0
      %v1448 = vadd.f32 0.0, %v1447
      %1449 = vmatprep.mubr.bf16.mxu0 0
      %1450 = vmatmul.mubr.bf16.gmra.mxu0 %v920
      %v1451 = vpop.f32.mrf.mxu0
      %v1452 = vadd.f32 0.0, %v1451
      %v1453 = vpop.f32.mrf.mxu0
      %v1454 = vadd.f32 0.0, %v1453
      %v1455 = vpop.f32.mrf.mxu0
      %v1456 = vadd.f32 0.0, %v1455
      %v1457 = vpop.f32.mrf.mxu0
      %v1458 = vadd.f32 0.0, %v1457
      %1459 = vmatprep.mubr.bf16.mxu0 0
      %1460 = vmatmul.mubr.bf16.gmra.mxu0 %v923
      %v1461 = vpop.f32.mrf.mxu0
      %v1462 = vadd.f32 0.0, %v1461
      %v1463 = vpop.f32.mrf.mxu0
      %v1464 = vadd.f32 0.0, %v1463
      %v1465 = vpop.f32.mrf.mxu0
      %v1466 = vadd.f32 0.0, %v1465
      %v1467 = vpop.f32.mrf.mxu0
      %v1468 = vadd.f32 0.0, %v1467
      %1469 = vmatprep.mubr.bf16.mxu0 0
      %1470 = vmatmul.mubr.bf16.gmra.mxu0 %v926
      %v1471 = vpop.f32.mrf.mxu0
      %v1472 = vadd.f32 0.0, %v1471
      %v1473 = vpop.f32.mrf.mxu0
      %v1474 = vadd.f32 0.0, %v1473
      %v1475 = vpop.f32.mrf.mxu0
      %v1476 = vadd.f32 0.0, %v1475
      %v1477 = vpop.f32.mrf.mxu0
      %v1478 = vadd.f32 0.0, %v1477
      %1479 = vmatprep.mubr.bf16.mxu0 0
      %1480 = vmatmul.mubr.bf16.gmra.mxu0 %v929
      %v1481 = vpop.f32.mrf.mxu0
      %v1482 = vadd.f32 0.0, %v1481
      %v1483 = vpop.f32.mrf.mxu0
      %v1484 = vadd.f32 0.0, %v1483
      %v1485 = vpop.f32.mrf.mxu0
      %v1486 = vadd.f32 0.0, %v1485
      %v1487 = vpop.f32.mrf.mxu0
      %v1488 = vadd.f32 0.0, %v1487
      %1489 = vmatprep.mubr.bf16.mxu0 0
      %1490 = vmatmul.mubr.bf16.gmra.mxu0 %v932
      %v1491 = vpop.f32.mrf.mxu0
      %v1492 = vadd.f32 0.0, %v1491
      %v1493 = vpop.f32.mrf.mxu0
      %v1494 = vadd.f32 0.0, %v1493
      %v1495 = vpop.f32.mrf.mxu0
      %v1496 = vadd.f32 0.0, %v1495
      %v1497 = vpop.f32.mrf.mxu0
      %v1498 = vadd.f32 0.0, %v1497
      %1499 = vdwg.mxu0
      %1500 = vmatprep.subr.bf16.mxu0 0
      %1501 = vmatpush1.bf16.msra.mxu0 0
      %1502 = vmatprep.subr.bf16.mxu0 0
      %1503 = vmatpush1.bf16.msra.mxu0 0
      %1504 = vmatprep.subr.bf16.mxu0 0
      %1505 = vmatpush1.bf16.msra.mxu0 0
      %1506 = vmatprep.subr.bf16.mxu0 0
      %1507 = vmatpush1.bf16.msra.mxu0 0
      %1508 = vmatprep.subr.bf16.mxu0 0
      %1509 = vmatpush1.bf16.msra.mxu0 0
      %1510 = vmatprep.subr.bf16.mxu0 0
      %1511 = vmatpush1.bf16.msra.mxu0 0
      %1512 = vmatprep.subr.bf16.mxu0 0
      %1513 = vmatpush1.bf16.msra.mxu0 0
      %1514 = vmatprep.subr.bf16.mxu0 0
      %1515 = vmatpush1.bf16.msra.mxu0 %v682
      %1516 = vmatprep.subr.bf16.mxu0 0
      %1517 = vmatpush2.bf16.msra.mxu0 0
      %1518 = vmatprep.subr.bf16.mxu0 0
      %1519 = vmatpush2.bf16.msra.mxu0 0
      %1520 = vmatprep.subr.bf16.mxu0 0
      %1521 = vmatpush2.bf16.msra.mxu0 0
      %1522 = vmatprep.subr.bf16.mxu0 0
      %1523 = vmatpush2.bf16.msra.mxu0 0
      %1524 = vmatprep.subr.bf16.mxu0 0
      %1525 = vmatpush2.bf16.msra.mxu0 0
      %1526 = vmatprep.subr.bf16.mxu0 0
      %1527 = vmatpush2.bf16.msra.mxu0 0
      %1528 = vmatprep.subr.bf16.mxu0 0
      %1529 = vmatpush2.bf16.msra.mxu0 0
      %1530 = vmatprep.subr.bf16.mxu0 0
      %1531 = vmatpush2.bf16.msra.mxu0 0
      %1532 = vmatprep.mubr.bf16.mxu0 0
      %1533 = vmatmul.mubr.bf16.gmra.mxu0 %v860
      %v1534 = vpop.f32.mrf.mxu0
      %v1535 = vadd.f32 0.0, %v1534
      %v1536 = vpop.f32.mrf.mxu0
      %v1537 = vpop.f32.mrf.mxu0
      %v1538 = vadd.f32 0.0, %v1537
      %v1539 = vpop.f32.mrf.mxu0
      %1540 = vmatprep.mubr.bf16.mxu0 0
      %1541 = vmatmul.mubr.bf16.gmra.mxu0 %v863
      %v1542 = vpop.f32.mrf.mxu0
      %v1543 = vadd.f32 0.0, %v1542
      %v1544 = vpop.f32.mrf.mxu0
      %v1545 = vpop.f32.mrf.mxu0
      %v1546 = vadd.f32 0.0, %v1545
      %v1547 = vpop.f32.mrf.mxu0
      %1548 = vmatprep.mubr.bf16.mxu0 0
      %1549 = vmatmul.mubr.bf16.gmra.mxu0 %v866
      %v1550 = vpop.f32.mrf.mxu0
      %v1551 = vadd.f32 0.0, %v1550
      %v1552 = vpop.f32.mrf.mxu0
      %v1553 = vpop.f32.mrf.mxu0
      %v1554 = vadd.f32 0.0, %v1553
      %v1555 = vpop.f32.mrf.mxu0
      %1556 = vmatprep.mubr.bf16.mxu0 0
      %1557 = vmatmul.mubr.bf16.gmra.mxu0 %v869
      %v1558 = vpop.f32.mrf.mxu0
      %v1559 = vadd.f32 0.0, %v1558
      %v1560 = vpop.f32.mrf.mxu0
      %v1561 = vpop.f32.mrf.mxu0
      %v1562 = vadd.f32 0.0, %v1561
      %v1563 = vpop.f32.mrf.mxu0
      %1564 = vmatprep.mubr.bf16.mxu0 0
      %1565 = vmatmul.mubr.bf16.gmra.mxu0 %v872
      %v1566 = vpop.f32.mrf.mxu0
      %v1567 = vadd.f32 0.0, %v1566
      %v1568 = vpop.f32.mrf.mxu0
      %v1569 = vpop.f32.mrf.mxu0
      %v1570 = vadd.f32 0.0, %v1569
      %v1571 = vpop.f32.mrf.mxu0
      %1572 = vmatprep.mubr.bf16.mxu0 0
      %1573 = vmatmul.mubr.bf16.gmra.mxu0 %v875
      %v1574 = vpop.f32.mrf.mxu0
      %v1575 = vadd.f32 0.0, %v1574
      %v1576 = vpop.f32.mrf.mxu0
      %v1577 = vpop.f32.mrf.mxu0
      %v1578 = vadd.f32 0.0, %v1577
      %v1579 = vpop.f32.mrf.mxu0
      %1580 = vmatprep.mubr.bf16.mxu0 0
      %1581 = vmatmul.mubr.bf16.gmra.mxu0 %v878
      %v1582 = vpop.f32.mrf.mxu0
      %v1583 = vadd.f32 0.0, %v1582
      %v1584 = vpop.f32.mrf.mxu0
      %v1585 = vpop.f32.mrf.mxu0
      %v1586 = vadd.f32 0.0, %v1585
      %v1587 = vpop.f32.mrf.mxu0
      %1588 = vmatprep.mubr.bf16.mxu0 0
      %1589 = vmatmul.mubr.bf16.gmra.mxu0 %v881
      %v1590 = vpop.f32.mrf.mxu0
      %v1591 = vadd.f32 0.0, %v1590
      %v1592 = vpop.f32.mrf.mxu0
      %v1593 = vpop.f32.mrf.mxu0
      %v1594 = vadd.f32 0.0, %v1593
      %v1595 = vpop.f32.mrf.mxu0
      %1596 = vmatprep.mubr.bf16.mxu0 0
      %1597 = vmatmul.mubr.bf16.gmra.mxu0 %v884
      %v1598 = vpop.f32.mrf.mxu0
      %v1599 = vadd.f32 0.0, %v1598
      %v1600 = vpop.f32.mrf.mxu0
      %v1601 = vpop.f32.mrf.mxu0
      %v1602 = vadd.f32 0.0, %v1601
      %v1603 = vpop.f32.mrf.mxu0
      %1604 = vmatprep.mubr.bf16.mxu0 0
      %1605 = vmatmul.mubr.bf16.gmra.mxu0 %v887
      %v1606 = vpop.f32.mrf.mxu0
      %v1607 = vadd.f32 0.0, %v1606
      %v1608 = vpop.f32.mrf.mxu0
      %v1609 = vpop.f32.mrf.mxu0
      %v1610 = vadd.f32 0.0, %v1609
      %v1611 = vpop.f32.mrf.mxu0
      %1612 = vmatprep.mubr.bf16.mxu0 0
      %1613 = vmatmul.mubr.bf16.gmra.mxu0 %v890
      %v1614 = vpop.f32.mrf.mxu0
      %v1615 = vadd.f32 0.0, %v1614
      %v1616 = vpop.f32.mrf.mxu0
      %v1617 = vpop.f32.mrf.mxu0
      %v1618 = vadd.f32 0.0, %v1617
      %v1619 = vpop.f32.mrf.mxu0
      %1620 = vmatprep.mubr.bf16.mxu0 0
      %1621 = vmatmul.mubr.bf16.gmra.mxu0 %v893
      %v1622 = vpop.f32.mrf.mxu0
      %v1623 = vadd.f32 0.0, %v1622
      %v1624 = vpop.f32.mrf.mxu0
      %v1625 = vpop.f32.mrf.mxu0
      %v1626 = vadd.f32 0.0, %v1625
      %v1627 = vpop.f32.mrf.mxu0
      %1628 = vmatprep.mubr.bf16.mxu0 0
      %1629 = vmatmul.mubr.bf16.gmra.mxu0 %v896
      %v1630 = vpop.f32.mrf.mxu0
      %v1631 = vadd.f32 0.0, %v1630
      %v1632 = vpop.f32.mrf.mxu0
      %v1633 = vpop.f32.mrf.mxu0
      %v1634 = vadd.f32 0.0, %v1633
      %v1635 = vpop.f32.mrf.mxu0
      %1636 = vmatprep.mubr.bf16.mxu0 0
      %1637 = vmatmul.mubr.bf16.gmra.mxu0 %v899
      %v1638 = vpop.f32.mrf.mxu0
      %v1639 = vadd.f32 0.0, %v1638
      %v1640 = vpop.f32.mrf.mxu0
      %v1641 = vpop.f32.mrf.mxu0
      %v1642 = vadd.f32 0.0, %v1641
      %v1643 = vpop.f32.mrf.mxu0
      %1644 = vmatprep.mubr.bf16.mxu0 0
      %1645 = vmatmul.mubr.bf16.gmra.mxu0 %v902
      %v1646 = vpop.f32.mrf.mxu0
      %v1647 = vadd.f32 0.0, %v1646
      %v1648 = vpop.f32.mrf.mxu0
      %v1649 = vpop.f32.mrf.mxu0
      %v1650 = vadd.f32 0.0, %v1649
      %v1651 = vpop.f32.mrf.mxu0
      %1652 = vmatprep.mubr.bf16.mxu0 0
      %1653 = vmatmul.mubr.bf16.gmra.mxu0 %v905
      %v1654 = vpop.f32.mrf.mxu0
      %v1655 = vadd.f32 0.0, %v1654
      %v1656 = vpop.f32.mrf.mxu0
      %v1657 = vpop.f32.mrf.mxu0
      %v1658 = vadd.f32 0.0, %v1657
      %v1659 = vpop.f32.mrf.mxu0
      %1660 = vmatprep.mubr.bf16.mxu0 0
      %1661 = vmatmul.mubr.bf16.gmra.mxu0 %v908
      %v1662 = vpop.f32.mrf.mxu0
      %v1663 = vadd.f32 0.0, %v1662
      %v1664 = vpop.f32.mrf.mxu0
      %v1665 = vpop.f32.mrf.mxu0
      %v1666 = vadd.f32 0.0, %v1665
      %v1667 = vpop.f32.mrf.mxu0
      %1668 = vmatprep.mubr.bf16.mxu0 0
      %1669 = vmatmul.mubr.bf16.gmra.mxu0 %v911
      %v1670 = vpop.f32.mrf.mxu0
      %v1671 = vadd.f32 0.0, %v1670
      %v1672 = vpop.f32.mrf.mxu0
      %v1673 = vpop.f32.mrf.mxu0
      %v1674 = vadd.f32 0.0, %v1673
      %v1675 = vpop.f32.mrf.mxu0
      %1676 = vmatprep.mubr.bf16.mxu0 0
      %1677 = vmatmul.mubr.bf16.gmra.mxu0 %v914
      %v1678 = vpop.f32.mrf.mxu0
      %v1679 = vadd.f32 0.0, %v1678
      %v1680 = vpop.f32.mrf.mxu0
      %v1681 = vpop.f32.mrf.mxu0
      %v1682 = vadd.f32 0.0, %v1681
      %v1683 = vpop.f32.mrf.mxu0
      %1684 = vmatprep.mubr.bf16.mxu0 0
      %1685 = vmatmul.mubr.bf16.gmra.mxu0 %v917
      %v1686 = vpop.f32.mrf.mxu0
      %v1687 = vadd.f32 0.0, %v1686
      %v1688 = vpop.f32.mrf.mxu0
      %v1689 = vpop.f32.mrf.mxu0
      %v1690 = vadd.f32 0.0, %v1689
      %v1691 = vpop.f32.mrf.mxu0
      %1692 = vmatprep.mubr.bf16.mxu0 0
      %1693 = vmatmul.mubr.bf16.gmra.mxu0 %v920
      %v1694 = vpop.f32.mrf.mxu0
      %v1695 = vadd.f32 0.0, %v1694
      %v1696 = vpop.f32.mrf.mxu0
      %v1697 = vpop.f32.mrf.mxu0
      %v1698 = vadd.f32 0.0, %v1697
      %v1699 = vpop.f32.mrf.mxu0
      %1700 = vmatprep.mubr.bf16.mxu0 0
      %1701 = vmatmul.mubr.bf16.gmra.mxu0 %v923
      %v1702 = vpop.f32.mrf.mxu0
      %v1703 = vadd.f32 0.0, %v1702
      %v1704 = vpop.f32.mrf.mxu0
      %v1705 = vpop.f32.mrf.mxu0
      %v1706 = vadd.f32 0.0, %v1705
      %v1707 = vpop.f32.mrf.mxu0
      %1708 = vmatprep.mubr.bf16.mxu0 0
      %1709 = vmatmul.mubr.bf16.gmra.mxu0 %v926
      %v1710 = vpop.f32.mrf.mxu0
      %v1711 = vadd.f32 0.0, %v1710
      %v1712 = vpop.f32.mrf.mxu0
      %v1713 = vpop.f32.mrf.mxu0
      %v1714 = vadd.f32 0.0, %v1713
      %v1715 = vpop.f32.mrf.mxu0
      %1716 = vmatprep.mubr.bf16.mxu0 0
      %1717 = vmatmul.mubr.bf16.gmra.mxu0 %v929
      %v1718 = vpop.f32.mrf.mxu0
      %v1719 = vadd.f32 0.0, %v1718
      %v1720 = vpop.f32.mrf.mxu0
      %v1721 = vpop.f32.mrf.mxu0
      %v1722 = vadd.f32 0.0, %v1721
      %v1723 = vpop.f32.mrf.mxu0
      %1724 = vmatprep.mubr.bf16.mxu0 0
      %1725 = vmatmul.mubr.bf16.gmra.mxu0 %v932
      %v1726 = vpop.f32.mrf.mxu0
      %v1727 = vadd.f32 0.0, %v1726
      %v1728 = vpop.f32.mrf.mxu0
      %v1729 = vpop.f32.mrf.mxu0
      %v1730 = vadd.f32 0.0, %v1729
      %v1731 = vpop.f32.mrf.mxu0
      %1732 = vdwg.mxu0
      %v1733 = vmul.f32 %v969, %v667
      %v1734 = vmul.f32 %v971, %v668
      %v1735 = vmul.f32 %v1252, %v669
      %v1736 = vmul.f32 %v1254, %v670
      %v1737 = vmul.f32 %v1535, %v671
      %v1738 = vmul.f32 %v973, %v673
      %v1739 = vmul.f32 %v975, %v674
      %v1740 = vmul.f32 %v1256, %v675
      %v1741 = vmul.f32 %v1258, %v676
      %v1742 = vmul.f32 %v1538, %v677
      %v1743 = vmul.f32 %v979, %v667
      %v1744 = vmul.f32 %v981, %v668
      %v1745 = vmul.f32 %v1262, %v669
      %v1746 = vmul.f32 %v1264, %v670
      %v1747 = vmul.f32 %v1543, %v671
      %v1748 = vmul.f32 %v983, %v673
      %v1749 = vmul.f32 %v985, %v674
      %v1750 = vmul.f32 %v1266, %v675
      %v1751 = vmul.f32 %v1268, %v676
      %v1752 = vmul.f32 %v1546, %v677
      %v1753 = vmul.f32 %v989, %v667
      %v1754 = vmul.f32 %v991, %v668
      %v1755 = vmul.f32 %v1272, %v669
      %v1756 = vmul.f32 %v1274, %v670
      %v1757 = vmul.f32 %v1551, %v671
      %v1758 = vmul.f32 %v993, %v673
      %v1759 = vmul.f32 %v995, %v674
      %v1760 = vmul.f32 %v1276, %v675
      %v1761 = vmul.f32 %v1278, %v676
      %v1762 = vmul.f32 %v1554, %v677
      %v1763 = vmul.f32 %v999, %v667
      %v1764 = vmul.f32 %v1001, %v668
      %v1765 = vmul.f32 %v1282, %v669
      %v1766 = vmul.f32 %v1284, %v670
      %v1767 = vmul.f32 %v1559, %v671
      %v1768 = vmul.f32 %v1003, %v673
      %v1769 = vmul.f32 %v1005, %v674
      %v1770 = vmul.f32 %v1286, %v675
      %v1771 = vmul.f32 %v1288, %v676
      %v1772 = vmul.f32 %v1562, %v677
      %v1773 = vmul.f32 %v1009, %v667
      %v1774 = vmul.f32 %v1011, %v668
      %v1775 = vmul.f32 %v1292, %v669
      %v1776 = vmul.f32 %v1294, %v670
      %v1777 = vmul.f32 %v1567, %v671
      %v1778 = vmul.f32 %v1013, %v673
      %v1779 = vmul.f32 %v1015, %v674
      %v1780 = vmul.f32 %v1296, %v675
      %v1781 = vmul.f32 %v1298, %v676
      %v1782 = vmul.f32 %v1570, %v677
      %v1783 = vmul.f32 %v1019, %v667
      %v1784 = vmul.f32 %v1021, %v668
      %v1785 = vmul.f32 %v1302, %v669
      %v1786 = vmul.f32 %v1304, %v670
      %v1787 = vmul.f32 %v1575, %v671
      %v1788 = vmul.f32 %v1023, %v673
      %v1789 = vmul.f32 %v1025, %v674
      %v1790 = vmul.f32 %v1306, %v675
      %v1791 = vmul.f32 %v1308, %v676
      %v1792 = vmul.f32 %v1578, %v677
      %v1793 = vmul.f32 %v1029, %v667
      %v1794 = vmul.f32 %v1031, %v668
      %v1795 = vmul.f32 %v1312, %v669
      %v1796 = vmul.f32 %v1314, %v670
      %v1797 = vmul.f32 %v1583, %v671
      %v1798 = vmul.f32 %v1033, %v673
      %v1799 = vmul.f32 %v1035, %v674
      %v1800 = vmul.f32 %v1316, %v675
      %v1801 = vmul.f32 %v1318, %v676
      %v1802 = vmul.f32 %v1586, %v677
      %v1803 = vmul.f32 %v1039, %v667
      %v1804 = vmul.f32 %v1041, %v668
      %v1805 = vmul.f32 %v1322, %v669
      %v1806 = vmul.f32 %v1324, %v670
      %v1807 = vmul.f32 %v1591, %v671
      %v1808 = vmul.f32 %v1043, %v673
      %v1809 = vmul.f32 %v1045, %v674
      %v1810 = vmul.f32 %v1326, %v675
      %v1811 = vmul.f32 %v1328, %v676
      %v1812 = vmul.f32 %v1594, %v677
      %v1813 = vmul.f32 %v1049, %v667
      %v1814 = vmul.f32 %v1051, %v668
      %v1815 = vmul.f32 %v1332, %v669
      %v1816 = vmul.f32 %v1334, %v670
      %v1817 = vmul.f32 %v1599, %v671
      %v1818 = vmul.f32 %v1053, %v673
      %v1819 = vmul.f32 %v1055, %v674
      %v1820 = vmul.f32 %v1336, %v675
      %v1821 = vmul.f32 %v1338, %v676
      %v1822 = vmul.f32 %v1602, %v677
      %v1823 = vmul.f32 %v1059, %v667
      %v1824 = vmul.f32 %v1061, %v668
      %v1825 = vmul.f32 %v1342, %v669
      %v1826 = vmul.f32 %v1344, %v670
      %v1827 = vmul.f32 %v1607, %v671
      %v1828 = vmul.f32 %v1063, %v673
      %v1829 = vmul.f32 %v1065, %v674
      %v1830 = vmul.f32 %v1346, %v675
      %v1831 = vmul.f32 %v1348, %v676
      %v1832 = vmul.f32 %v1610, %v677
      %v1833 = vmul.f32 %v1069, %v667
      %v1834 = vmul.f32 %v1071, %v668
      %v1835 = vmul.f32 %v1352, %v669
      %v1836 = vmul.f32 %v1354, %v670
      %v1837 = vmul.f32 %v1615, %v671
      %v1838 = vmul.f32 %v1073, %v673
      %v1839 = vmul.f32 %v1075, %v674
      %v1840 = vmul.f32 %v1356, %v675
      %v1841 = vmul.f32 %v1358, %v676
      %v1842 = vmul.f32 %v1618, %v677
      %v1843 = vmul.f32 %v1079, %v667
      %v1844 = vmul.f32 %v1081, %v668
      %v1845 = vmul.f32 %v1362, %v669
      %v1846 = vmul.f32 %v1364, %v670
      %v1847 = vmul.f32 %v1623, %v671
      %v1848 = vmul.f32 %v1083, %v673
      %v1849 = vmul.f32 %v1085, %v674
      %v1850 = vmul.f32 %v1366, %v675
      %v1851 = vmul.f32 %v1368, %v676
      %v1852 = vmul.f32 %v1626, %v677
      %v1853 = vmul.f32 %v1089, %v667
      %v1854 = vmul.f32 %v1091, %v668
      %v1855 = vmul.f32 %v1372, %v669
      %v1856 = vmul.f32 %v1374, %v670
      %v1857 = vmul.f32 %v1631, %v671
      %v1858 = vmul.f32 %v1093, %v673
      %v1859 = vmul.f32 %v1095, %v674
      %v1860 = vmul.f32 %v1376, %v675
      %v1861 = vmul.f32 %v1378, %v676
      %v1862 = vmul.f32 %v1634, %v677
      %v1863 = vmul.f32 %v1099, %v667
      %v1864 = vmul.f32 %v1101, %v668
      %v1865 = vmul.f32 %v1382, %v669
      %v1866 = vmul.f32 %v1384, %v670
      %v1867 = vmul.f32 %v1639, %v671
      %v1868 = vmul.f32 %v1103, %v673
      %v1869 = vmul.f32 %v1105, %v674
      %v1870 = vmul.f32 %v1386, %v675
      %v1871 = vmul.f32 %v1388, %v676
      %v1872 = vmul.f32 %v1642, %v677
      %v1873 = vmul.f32 %v1109, %v667
      %v1874 = vmul.f32 %v1111, %v668
      %v1875 = vmul.f32 %v1392, %v669
      %v1876 = vmul.f32 %v1394, %v670
      %v1877 = vmul.f32 %v1647, %v671
      %v1878 = vmul.f32 %v1113, %v673
      %v1879 = vmul.f32 %v1115, %v674
      %v1880 = vmul.f32 %v1396, %v675
      %v1881 = vmul.f32 %v1398, %v676
      %v1882 = vmul.f32 %v1650, %v677
      %v1883 = vmul.f32 %v1119, %v667
      %v1884 = vmul.f32 %v1121, %v668
      %v1885 = vmul.f32 %v1402, %v669
      %v1886 = vmul.f32 %v1404, %v670
      %v1887 = vmul.f32 %v1655, %v671
      %v1888 = vmul.f32 %v1123, %v673
      %v1889 = vmul.f32 %v1125, %v674
      %v1890 = vmul.f32 %v1406, %v675
      %v1891 = vmul.f32 %v1408, %v676
      %v1892 = vmul.f32 %v1658, %v677
      %v1893 = vmul.f32 %v1129, %v667
      %v1894 = vmul.f32 %v1131, %v668
      %v1895 = vmul.f32 %v1412, %v669
      %v1896 = vmul.f32 %v1414, %v670
      %v1897 = vmul.f32 %v1663, %v671
      %v1898 = vmul.f32 %v1133, %v673
      %v1899 = vmul.f32 %v1135, %v674
      %v1900 = vmul.f32 %v1416, %v675
      %v1901 = vmul.f32 %v1418, %v676
      %v1902 = vmul.f32 %v1666, %v677
      %v1903 = vmul.f32 %v1139, %v667
      %v1904 = vmul.f32 %v1141, %v668
      %v1905 = vmul.f32 %v1422, %v669
      %v1906 = vmul.f32 %v1424, %v670
      %v1907 = vmul.f32 %v1671, %v671
      %v1908 = vmul.f32 %v1143, %v673
      %v1909 = vmul.f32 %v1145, %v674
      %v1910 = vmul.f32 %v1426, %v675
      %v1911 = vmul.f32 %v1428, %v676
      %v1912 = vmul.f32 %v1674, %v677
      %v1913 = vmul.f32 %v1149, %v667
      %v1914 = vmul.f32 %v1151, %v668
      %v1915 = vmul.f32 %v1432, %v669
      %v1916 = vmul.f32 %v1434, %v670
      %v1917 = vmul.f32 %v1679, %v671
      %v1918 = vmul.f32 %v1153, %v673
      %v1919 = vmul.f32 %v1155, %v674
      %v1920 = vmul.f32 %v1436, %v675
      %v1921 = vmul.f32 %v1438, %v676
      %v1922 = vmul.f32 %v1682, %v677
      %v1923 = vmul.f32 %v1159, %v667
      %v1924 = vmul.f32 %v1161, %v668
      %v1925 = vmul.f32 %v1442, %v669
      %v1926 = vmul.f32 %v1444, %v670
      %v1927 = vmul.f32 %v1687, %v671
      %v1928 = vmul.f32 %v1163, %v673
      %v1929 = vmul.f32 %v1165, %v674
      %v1930 = vmul.f32 %v1446, %v675
      %v1931 = vmul.f32 %v1448, %v676
      %v1932 = vmul.f32 %v1690, %v677
      %v1933 = vmul.f32 %v1169, %v667
      %v1934 = vmul.f32 %v1171, %v668
      %v1935 = vmul.f32 %v1452, %v669
      %v1936 = vmul.f32 %v1454, %v670
      %v1937 = vmul.f32 %v1695, %v671
      %v1938 = vmul.f32 %v1173, %v673
      %v1939 = vmul.f32 %v1175, %v674
      %v1940 = vmul.f32 %v1456, %v675
      %v1941 = vmul.f32 %v1458, %v676
      %v1942 = vmul.f32 %v1698, %v677
      %v1943 = vmul.f32 %v1179, %v667
      %v1944 = vmul.f32 %v1181, %v668
      %v1945 = vmul.f32 %v1462, %v669
      %v1946 = vmul.f32 %v1464, %v670
      %v1947 = vmul.f32 %v1703, %v671
      %v1948 = vmul.f32 %v1183, %v673
      %v1949 = vmul.f32 %v1185, %v674
      %v1950 = vmul.f32 %v1466, %v675
      %v1951 = vmul.f32 %v1468, %v676
      %v1952 = vmul.f32 %v1706, %v677
      %v1953 = vmul.f32 %v1189, %v667
      %v1954 = vmul.f32 %v1191, %v668
      %v1955 = vmul.f32 %v1472, %v669
      %v1956 = vmul.f32 %v1474, %v670
      %v1957 = vmul.f32 %v1711, %v671
      %v1958 = vmul.f32 %v1193, %v673
      %v1959 = vmul.f32 %v1195, %v674
      %v1960 = vmul.f32 %v1476, %v675
      %v1961 = vmul.f32 %v1478, %v676
      %v1962 = vmul.f32 %v1714, %v677
      %v1963 = vmul.f32 %v1199, %v667
      %v1964 = vmul.f32 %v1201, %v668
      %v1965 = vmul.f32 %v1482, %v669
      %v1966 = vmul.f32 %v1484, %v670
      %v1967 = vmul.f32 %v1719, %v671
      %v1968 = vmul.f32 %v1203, %v673
      %v1969 = vmul.f32 %v1205, %v674
      %v1970 = vmul.f32 %v1486, %v675
      %v1971 = vmul.f32 %v1488, %v676
      %v1972 = vmul.f32 %v1722, %v677
      %v1973 = vmul.f32 %v1209, %v667
      %v1974 = vmul.f32 %v1211, %v668
      %v1975 = vmul.f32 %v1492, %v669
      %v1976 = vmul.f32 %v1494, %v670
      %v1977 = vmul.f32 %v1727, %v671
      %v1978 = vmul.f32 %v1213, %v673
      %v1979 = vmul.f32 %v1215, %v674
      %v1980 = vmul.f32 %v1496, %v675
      %v1981 = vmul.f32 %v1498, %v676
      %v1982 = vmul.f32 %v1730, %v677
      %v1983 = vpack.c.bf16 %v1738, %v1733
      %v1984 = vpack.c.bf16 %v1739, %v1734
      %v1985 = vpack.c.bf16 %v1740, %v1735
      %v1986 = vpack.c.bf16 %v1741, %v1736
      %v1987 = vpack.c.bf16 %v1742, %v1737
      %v1988 = vpack.c.bf16 %v1748, %v1743
      %v1989 = vpack.c.bf16 %v1749, %v1744
      %v1990 = vpack.c.bf16 %v1750, %v1745
      %v1991 = vpack.c.bf16 %v1751, %v1746
      %v1992 = vpack.c.bf16 %v1752, %v1747
      %v1993 = vpack.c.bf16 %v1758, %v1753
      %v1994 = vpack.c.bf16 %v1759, %v1754
      %v1995 = vpack.c.bf16 %v1760, %v1755
      %v1996 = vpack.c.bf16 %v1761, %v1756
      %v1997 = vpack.c.bf16 %v1762, %v1757
      %v1998 = vpack.c.bf16 %v1768, %v1763
      %v1999 = vpack.c.bf16 %v1769, %v1764
      %v2000 = vpack.c.bf16 %v1770, %v1765
      %v2001 = vpack.c.bf16 %v1771, %v1766
      %v2002 = vpack.c.bf16 %v1772, %v1767
      %v2003 = vpack.c.bf16 %v1778, %v1773
      %v2004 = vpack.c.bf16 %v1779, %v1774
      %v2005 = vpack.c.bf16 %v1780, %v1775
      %v2006 = vpack.c.bf16 %v1781, %v1776
      %v2007 = vpack.c.bf16 %v1782, %v1777
      %v2008 = vpack.c.bf16 %v1788, %v1783
      %v2009 = vpack.c.bf16 %v1789, %v1784
      %v2010 = vpack.c.bf16 %v1790, %v1785
      %v2011 = vpack.c.bf16 %v1791, %v1786
      %v2012 = vpack.c.bf16 %v1792, %v1787
      %v2013 = vpack.c.bf16 %v1798, %v1793
      %v2014 = vpack.c.bf16 %v1799, %v1794
      %v2015 = vpack.c.bf16 %v1800, %v1795
      %v2016 = vpack.c.bf16 %v1801, %v1796
      %v2017 = vpack.c.bf16 %v1802, %v1797
      %v2018 = vpack.c.bf16 %v1808, %v1803
      %v2019 = vpack.c.bf16 %v1809, %v1804
      %v2020 = vpack.c.bf16 %v1810, %v1805
      %v2021 = vpack.c.bf16 %v1811, %v1806
      %v2022 = vpack.c.bf16 %v1812, %v1807
      %v2023 = vpack.c.bf16 %v1818, %v1813
      %v2024 = vpack.c.bf16 %v1819, %v1814
      %v2025 = vpack.c.bf16 %v1820, %v1815
      %v2026 = vpack.c.bf16 %v1821, %v1816
      %v2027 = vpack.c.bf16 %v1822, %v1817
      %v2028 = vpack.c.bf16 %v1828, %v1823
      %v2029 = vpack.c.bf16 %v1829, %v1824
      %v2030 = vpack.c.bf16 %v1830, %v1825
      %v2031 = vpack.c.bf16 %v1831, %v1826
      %v2032 = vpack.c.bf16 %v1832, %v1827
      %v2033 = vpack.c.bf16 %v1838, %v1833
      %v2034 = vpack.c.bf16 %v1839, %v1834
      %v2035 = vpack.c.bf16 %v1840, %v1835
      %v2036 = vpack.c.bf16 %v1841, %v1836
      %v2037 = vpack.c.bf16 %v1842, %v1837
      %v2038 = vpack.c.bf16 %v1848, %v1843
      %v2039 = vpack.c.bf16 %v1849, %v1844
      %v2040 = vpack.c.bf16 %v1850, %v1845
      %v2041 = vpack.c.bf16 %v1851, %v1846
      %v2042 = vpack.c.bf16 %v1852, %v1847
      %v2043 = vpack.c.bf16 %v1858, %v1853
      %v2044 = vpack.c.bf16 %v1859, %v1854
      %v2045 = vpack.c.bf16 %v1860, %v1855
      %v2046 = vpack.c.bf16 %v1861, %v1856
      %v2047 = vpack.c.bf16 %v1862, %v1857
      %v2048 = vpack.c.bf16 %v1868, %v1863
      %v2049 = vpack.c.bf16 %v1869, %v1864
      %v2050 = vpack.c.bf16 %v1870, %v1865
      %v2051 = vpack.c.bf16 %v1871, %v1866
      %v2052 = vpack.c.bf16 %v1872, %v1867
      %v2053 = vpack.c.bf16 %v1878, %v1873
      %v2054 = vpack.c.bf16 %v1879, %v1874
      %v2055 = vpack.c.bf16 %v1880, %v1875
      %v2056 = vpack.c.bf16 %v1881, %v1876
      %v2057 = vpack.c.bf16 %v1882, %v1877
      %v2058 = vpack.c.bf16 %v1888, %v1883
      %v2059 = vpack.c.bf16 %v1889, %v1884
      %v2060 = vpack.c.bf16 %v1890, %v1885
      %v2061 = vpack.c.bf16 %v1891, %v1886
      %v2062 = vpack.c.bf16 %v1892, %v1887
      %v2063 = vpack.c.bf16 %v1898, %v1893
      %v2064 = vpack.c.bf16 %v1899, %v1894
      %v2065 = vpack.c.bf16 %v1900, %v1895
      %v2066 = vpack.c.bf16 %v1901, %v1896
      %v2067 = vpack.c.bf16 %v1902, %v1897
      %v2068 = vpack.c.bf16 %v1908, %v1903
      %v2069 = vpack.c.bf16 %v1909, %v1904
      %v2070 = vpack.c.bf16 %v1910, %v1905
      %v2071 = vpack.c.bf16 %v1911, %v1906
      %v2072 = vpack.c.bf16 %v1912, %v1907
      %v2073 = vpack.c.bf16 %v1918, %v1913
      %v2074 = vpack.c.bf16 %v1919, %v1914
      %v2075 = vpack.c.bf16 %v1920, %v1915
      %v2076 = vpack.c.bf16 %v1921, %v1916
      %v2077 = vpack.c.bf16 %v1922, %v1917
      %v2078 = vpack.c.bf16 %v1928, %v1923
      %v2079 = vpack.c.bf16 %v1929, %v1924
      %v2080 = vpack.c.bf16 %v1930, %v1925
      %v2081 = vpack.c.bf16 %v1931, %v1926
      %v2082 = vpack.c.bf16 %v1932, %v1927
      %v2083 = vpack.c.bf16 %v1938, %v1933
      %v2084 = vpack.c.bf16 %v1939, %v1934
      %v2085 = vpack.c.bf16 %v1940, %v1935
      %v2086 = vpack.c.bf16 %v1941, %v1936
      %v2087 = vpack.c.bf16 %v1942, %v1937
      %v2088 = vpack.c.bf16 %v1948, %v1943
      %v2089 = vpack.c.bf16 %v1949, %v1944
      %v2090 = vpack.c.bf16 %v1950, %v1945
      %v2091 = vpack.c.bf16 %v1951, %v1946
      %v2092 = vpack.c.bf16 %v1952, %v1947
      %v2093 = vpack.c.bf16 %v1958, %v1953
      %v2094 = vpack.c.bf16 %v1959, %v1954
      %v2095 = vpack.c.bf16 %v1960, %v1955
      %v2096 = vpack.c.bf16 %v1961, %v1956
      %v2097 = vpack.c.bf16 %v1962, %v1957
      %v2098 = vpack.c.bf16 %v1968, %v1963
      %v2099 = vpack.c.bf16 %v1969, %v1964
      %v2100 = vpack.c.bf16 %v1970, %v1965
      %v2101 = vpack.c.bf16 %v1971, %v1966
      %v2102 = vpack.c.bf16 %v1972, %v1967
      %v2103 = vpack.c.bf16 %v1978, %v1973
      %v2104 = vpack.c.bf16 %v1979, %v1974
      %v2105 = vpack.c.bf16 %v1980, %v1975
      %v2106 = vpack.c.bf16 %v1981, %v1976
      %v2107 = vpack.c.bf16 %v1982, %v1977
      %v2108 = vld [vmem:[%s3] sm:$0xf]
      %v2109 = vld [vmem:[%s3 + $0x4] sm:$0xf]
      %v2110 = vld [vmem:[%s3 + $0x8] sm:$0xf]
      %v2111 = vld [vmem:[%s3 + $0xc] sm:$0xf]
      %v2112 = vld [vmem:[%s3 + $0x10] sm:$0xf]
      %v2113 = vld [vmem:[%s3 + $0x14] sm:$0xf]
      %v2114 = vld [vmem:[%s3 + $0x18] sm:$0xf]
      %v2115 = vld [vmem:[%s3 + $0x1c] sm:$0xf]
      %v2116 = vld [vmem:[%s3 + $0x20] sm:$0xf]
      %v2117 = vld [vmem:[%s3 + $0x24] sm:$0xf]
      %v2118 = vld [vmem:[%s3 + $0x28] sm:$0xf]
      %v2119 = vld [vmem:[%s3 + $0x2c] sm:$0xf]
      %v2120 = vld [vmem:[%s3 + $0x30] sm:$0xf]
      %v2121 = vld [vmem:[%s3 + $0x34] sm:$0xf]
      %v2122 = vld [vmem:[%s3 + $0x38] sm:$0xf]
      %v2123 = vld [vmem:[%s3 + $0x3c] sm:$0xf]
      %v2124 = vld [vmem:[%s3 + $0x40] sm:$0xf]
      %v2125 = vld [vmem:[%s3 + $0x44] sm:$0xf]
      %v2126 = vld [vmem:[%s3 + $0x48] sm:$0xf]
      %v2127 = vld [vmem:[%s3 + $0x4c] sm:$0xf]
      %v2128 = vld [vmem:[%s3 + $0x50] sm:$0xf]
      %v2129 = vld [vmem:[%s3 + $0x54] sm:$0xf]
      %v2130 = vld [vmem:[%s3 + $0x58] sm:$0xf]
      %v2131 = vld [vmem:[%s3 + $0x5c] sm:$0xf]
      %v2132 = vld [vmem:[%s3 + $0x60] sm:$0xf]
      %v2133 = vld [vmem:[%s3 + $0x64] sm:$0xf]
      %v2134 = vld [vmem:[%s3 + $0x68] sm:$0xf]
      %v2135 = vld [vmem:[%s3 + $0x6c] sm:$0xf]
      %v2136 = vld [vmem:[%s3 + $0x70] sm:$0xf]
      %v2137 = vld [vmem:[%s3 + $0x74] sm:$0xf]
      %v2138 = vld [vmem:[%s3 + $0x78] sm:$0xf]
      %v2139 = vld [vmem:[%s3 + $0x7c] sm:$0xf]
      %v2140 = vld [vmem:[%s3 + $0x80] sm:$0xf]
      %v2141 = vld [vmem:[%s3 + $0x84] sm:$0xf]
      %v2142 = vld [vmem:[%s3 + $0x88] sm:$0xf]
      %v2143 = vld [vmem:[%s3 + $0x8c] sm:$0xf]
      %v2144 = vld [vmem:[%s3 + $0x90] sm:$0xf]
      %v2145 = vld [vmem:[%s3 + $0x94] sm:$0xf]
      %v2146 = vld [vmem:[%s3 + $0x98] sm:$0xf]
      %v2147 = vld [vmem:[%s3 + $0x9c] sm:$0xf]
      %v2148 = vld [vmem:[%s3 + $0xa0] sm:$0xf]
      %v2149 = vld [vmem:[%s3 + $0xa4] sm:$0xf]
      %v2150 = vld [vmem:[%s3 + $0xa8] sm:$0xf]
      %v2151 = vld [vmem:[%s3 + $0xac] sm:$0xf]
      %v2152 = vld [vmem:[%s3 + $0xb0] sm:$0xf]
      %v2153 = vld [vmem:[%s3 + $0xb4] sm:$0xf]
      %v2154 = vld [vmem:[%s3 + $0xb8] sm:$0xf]
      %v2155 = vld [vmem:[%s3 + $0xbc] sm:$0xf]
      %v2156 = vld [vmem:[%s3 + $0xc0] sm:$0xf]
      %v2157 = vld [vmem:[%s3 + $0xc4] sm:$0xf]
      %v2158 = vld [vmem:[%s3 + $0xc8] sm:$0xf]
      %v2159 = vld [vmem:[%s3 + $0xcc] sm:$0xf]
      %v2160 = vld [vmem:[%s3 + $0xd0] sm:$0xf]
      %v2161 = vld [vmem:[%s3 + $0xd4] sm:$0xf]
      %v2162 = vld [vmem:[%s3 + $0xd8] sm:$0xf]
      %v2163 = vld [vmem:[%s3 + $0xdc] sm:$0xf]
      %v2164 = vld [vmem:[%s3 + $0xe0] sm:$0xf]
      %v2165 = vld [vmem:[%s3 + $0xe4] sm:$0xf]
      %v2166 = vld [vmem:[%s3 + $0xe8] sm:$0xf]
      %v2167 = vld [vmem:[%s3 + $0xec] sm:$0xf]
      %v2168 = vld [vmem:[%s3 + $0xf0] sm:$0xf]
      %v2169 = vld [vmem:[%s3 + $0xf4] sm:$0xf]
      %v2170 = vld [vmem:[%s3 + $0xf8] sm:$0xf]
      %v2171 = vld [vmem:[%s3 + $0xfc] sm:$0xf]
      %v2172 = vld [vmem:[%s3 + $0x100] sm:$0xf]
      %v2173 = vld [vmem:[%s3 + $0x104] sm:$0xf]
      %v2174 = vld [vmem:[%s3 + $0x108] sm:$0xf]
      %v2175 = vld [vmem:[%s3 + $0x10c] sm:$0xf]
      %v2176 = vld [vmem:[%s3 + $0x110] sm:$0xf]
      %v2177 = vld [vmem:[%s3 + $0x114] sm:$0xf]
      %v2178 = vld [vmem:[%s3 + $0x118] sm:$0xf]
      %v2179 = vld [vmem:[%s3 + $0x11c] sm:$0xf]
      %v2180 = vld [vmem:[%s3 + $0x120] sm:$0xf]
      %v2181 = vld [vmem:[%s3 + $0x124] sm:$0xf]
      %v2182 = vld [vmem:[%s3 + $0x128] sm:$0xf]
      %v2183 = vld [vmem:[%s3 + $0x12c] sm:$0xf]
      %v2184 = vld [vmem:[%s3 + $0x130] sm:$0xf]
      %v2185 = vld [vmem:[%s3 + $0x134] sm:$0xf]
      %v2186 = vld [vmem:[%s3 + $0x138] sm:$0xf]
      %v2187 = vld [vmem:[%s3 + $0x13c] sm:$0xf]
      %v2268 = vunpack.c.l.b16 %v2108
      %v2269 = vunpack.c.l.b16 %v2109
      %v2270 = vunpack.c.l.b16 %v2110
      %v2271 = vunpack.c.l.b16 %v2111
      %v2272 = vunpack.c.l.b16 %v2112
      %v2273 = vunpack.c.l.b16 %v2113
      %v2274 = vunpack.c.l.b16 %v2114
      %v2275 = vunpack.c.l.b16 %v2115
      %v2276 = vunpack.c.l.b16 %v2116
      %v2277 = vunpack.c.l.b16 %v2117
      %v2278 = vunpack.c.l.b16 %v2118
      %v2279 = vunpack.c.l.b16 %v2119
      %v2280 = vunpack.c.l.b16 %v2120
      %v2281 = vunpack.c.l.b16 %v2121
      %v2282 = vunpack.c.l.b16 %v2122
      %v2283 = vunpack.c.l.b16 %v2123
      %v2284 = vunpack.c.l.b16 %v2124
      %v2285 = vunpack.c.l.b16 %v2125
      %v2286 = vunpack.c.l.b16 %v2126
      %v2287 = vunpack.c.l.b16 %v2127
      %v2288 = vunpack.c.l.b16 %v2128
      %v2289 = vunpack.c.l.b16 %v2129
      %v2290 = vunpack.c.l.b16 %v2130
      %v2291 = vunpack.c.l.b16 %v2131
      %v2292 = vunpack.c.l.b16 %v2132
      %v2293 = vunpack.c.l.b16 %v2133
      %v2294 = vunpack.c.l.b16 %v2134
      %v2295 = vunpack.c.l.b16 %v2135
      %v2296 = vunpack.c.l.b16 %v2136
      %v2297 = vunpack.c.l.b16 %v2137
      %v2298 = vunpack.c.l.b16 %v2138
      %v2299 = vunpack.c.l.b16 %v2139
      %v2300 = vunpack.c.l.b16 %v2140
      %v2301 = vunpack.c.l.b16 %v2141
      %v2302 = vunpack.c.l.b16 %v2142
      %v2303 = vunpack.c.l.b16 %v2143
      %v2304 = vunpack.c.l.b16 %v2144
      %v2305 = vunpack.c.l.b16 %v2145
      %v2306 = vunpack.c.l.b16 %v2146
      %v2307 = vunpack.c.l.b16 %v2147
      %v2308 = vunpack.c.l.b16 %v2148
      %v2309 = vunpack.c.l.b16 %v2149
      %v2310 = vunpack.c.l.b16 %v2150
      %v2311 = vunpack.c.l.b16 %v2151
      %v2312 = vunpack.c.l.b16 %v2152
      %v2313 = vunpack.c.l.b16 %v2153
      %v2314 = vunpack.c.l.b16 %v2154
      %v2315 = vunpack.c.l.b16 %v2155
      %v2316 = vunpack.c.l.b16 %v2156
      %v2317 = vunpack.c.l.b16 %v2157
      %v2318 = vunpack.c.l.b16 %v2158
      %v2319 = vunpack.c.l.b16 %v2159
      %v2320 = vunpack.c.l.b16 %v2160
      %v2321 = vunpack.c.l.b16 %v2161
      %v2322 = vunpack.c.l.b16 %v2162
      %v2323 = vunpack.c.l.b16 %v2163
      %v2324 = vunpack.c.l.b16 %v2164
      %v2325 = vunpack.c.l.b16 %v2165
      %v2326 = vunpack.c.l.b16 %v2166
      %v2327 = vunpack.c.l.b16 %v2167
      %v2328 = vunpack.c.l.b16 %v2168
      %v2329 = vunpack.c.l.b16 %v2169
      %v2330 = vunpack.c.l.b16 %v2170
      %v2331 = vunpack.c.l.b16 %v2171
      %v2332 = vunpack.c.l.b16 %v2172
      %v2333 = vunpack.c.l.b16 %v2173
      %v2334 = vunpack.c.l.b16 %v2174
      %v2335 = vunpack.c.l.b16 %v2175
      %v2336 = vunpack.c.l.b16 %v2176
      %v2337 = vunpack.c.l.b16 %v2177
      %v2338 = vunpack.c.l.b16 %v2178
      %v2339 = vunpack.c.l.b16 %v2179
      %v2340 = vunpack.c.l.b16 %v2180
      %v2341 = vunpack.c.l.b16 %v2181
      %v2342 = vunpack.c.l.b16 %v2182
      %v2343 = vunpack.c.l.b16 %v2183
      %v2344 = vunpack.c.l.b16 %v2184
      %v2345 = vunpack.c.l.b16 %v2185
      %v2346 = vunpack.c.l.b16 %v2186
      %v2347 = vunpack.c.l.b16 %v2187
      %v2348 = vpack.c.b16 %v2269, %v2268
      %v2349 = vpack.c.b16 %v2271, %v2270
      %v2350 = vpack.c.b16 %v2273, %v2272
      %v2351 = vpack.c.b16 %v2275, %v2274
      %v2352 = vpack.c.b16 %v2277, %v2276
      %v2353 = vpack.c.b16 %v2279, %v2278
      %v2354 = vpack.c.b16 %v2281, %v2280
      %v2355 = vpack.c.b16 %v2283, %v2282
      %v2356 = vpack.c.b16 %v2285, %v2284
      %v2357 = vpack.c.b16 %v2287, %v2286
      %v2358 = vpack.c.b16 %v2289, %v2288
      %v2359 = vpack.c.b16 %v2291, %v2290
      %v2360 = vpack.c.b16 %v2293, %v2292
      %v2361 = vpack.c.b16 %v2295, %v2294
      %v2362 = vpack.c.b16 %v2297, %v2296
      %v2363 = vpack.c.b16 %v2299, %v2298
      %v2364 = vpack.c.b16 %v2301, %v2300
      %v2365 = vpack.c.b16 %v2303, %v2302
      %v2366 = vpack.c.b16 %v2305, %v2304
      %v2367 = vpack.c.b16 %v2307, %v2306
      %v2368 = vpack.c.b16 %v2309, %v2308
      %v2369 = vpack.c.b16 %v2311, %v2310
      %v2370 = vpack.c.b16 %v2313, %v2312
      %v2371 = vpack.c.b16 %v2315, %v2314
      %v2372 = vpack.c.b16 %v2317, %v2316
      %v2373 = vpack.c.b16 %v2319, %v2318
      %v2374 = vpack.c.b16 %v2321, %v2320
      %v2375 = vpack.c.b16 %v2323, %v2322
      %v2376 = vpack.c.b16 %v2325, %v2324
      %v2377 = vpack.c.b16 %v2327, %v2326
      %v2378 = vpack.c.b16 %v2329, %v2328
      %v2379 = vpack.c.b16 %v2331, %v2330
      %v2380 = vpack.c.b16 %v2333, %v2332
      %v2381 = vpack.c.b16 %v2335, %v2334
      %v2382 = vpack.c.b16 %v2337, %v2336
      %v2383 = vpack.c.b16 %v2339, %v2338
      %v2384 = vpack.c.b16 %v2341, %v2340
      %v2385 = vpack.c.b16 %v2343, %v2342
      %v2386 = vpack.c.b16 %v2345, %v2344
      %v2387 = vpack.c.b16 %v2347, %v2346
      %2428 = vmatprep.subr.bf16.mxu0 0
      %2429 = vmatpush1.bf16.msra.mxu0 %v2355
      %2430 = vmatprep.subr.bf16.mxu0 0
      %2431 = vmatpush1.bf16.msra.mxu0 %v2354
      %2432 = vmatprep.subr.bf16.mxu0 0
      %2433 = vmatpush1.bf16.msra.mxu0 %v2353
      %2434 = vmatprep.subr.bf16.mxu0 0
      %2435 = vmatpush1.bf16.msra.mxu0 %v2352
      %2436 = vmatprep.subr.bf16.mxu0 0
      %2437 = vmatpush1.bf16.msra.mxu0 %v2351
      %2438 = vmatprep.subr.bf16.mxu0 0
      %2439 = vmatpush1.bf16.msra.mxu0 %v2350
      %2440 = vmatprep.subr.bf16.mxu0 0
      %2441 = vmatpush1.bf16.msra.mxu0 %v2349
      %2442 = vmatprep.subr.bf16.mxu0 0
      %2443 = vmatpush1.bf16.msra.mxu0 %v2348
      %2444 = vmatprep.subr.bf16.mxu0 0
      %2445 = vmatpush2.bf16.msra.mxu0 %v2363
      %2446 = vmatprep.subr.bf16.mxu0 0
      %2447 = vmatpush2.bf16.msra.mxu0 %v2362
      %2448 = vmatprep.subr.bf16.mxu0 0
      %2449 = vmatpush2.bf16.msra.mxu0 %v2361
      %2450 = vmatprep.subr.bf16.mxu0 0
      %2451 = vmatpush2.bf16.msra.mxu0 %v2360
      %2452 = vmatprep.subr.bf16.mxu0 0
      %2453 = vmatpush2.bf16.msra.mxu0 %v2359
      %2454 = vmatprep.subr.bf16.mxu0 0
      %2455 = vmatpush2.bf16.msra.mxu0 %v2358
      %2456 = vmatprep.subr.bf16.mxu0 0
      %2457 = vmatpush2.bf16.msra.mxu0 %v2357
      %2458 = vmatprep.subr.bf16.mxu0 0
      %2459 = vmatpush2.bf16.msra.mxu0 %v2356
      %2460 = vmatprep.mubr.bf16.mxu0 %v1984
      %2461 = vmatmul.mubr.bf16.gmra.mxu0 %v1983
      %v2462 = vpop.f32.mrf.mxu0
      %v2463 = vadd.f32 0.0, %v2462
      %v2464 = vpop.f32.mrf.mxu0
      %v2465 = vpop.f32.mrf.mxu0
      %v2466 = vadd.f32 0.0, %v2465
      %v2467 = vpop.f32.mrf.mxu0
      %2468 = vmatprep.mubr.bf16.mxu0 %v1989
      %2469 = vmatmul.mubr.bf16.gmra.mxu0 %v1988
      %v2470 = vpop.f32.mrf.mxu0
      %v2471 = vadd.f32 0.0, %v2470
      %v2472 = vpop.f32.mrf.mxu0
      %v2473 = vpop.f32.mrf.mxu0
      %v2474 = vadd.f32 0.0, %v2473
      %v2475 = vpop.f32.mrf.mxu0
      %2476 = vmatprep.mubr.bf16.mxu0 %v1994
      %2477 = vmatmul.mubr.bf16.gmra.mxu0 %v1993
      %v2478 = vpop.f32.mrf.mxu0
      %v2479 = vadd.f32 0.0, %v2478
      %v2480 = vpop.f32.mrf.mxu0
      %v2481 = vpop.f32.mrf.mxu0
      %v2482 = vadd.f32 0.0, %v2481
      %v2483 = vpop.f32.mrf.mxu0
      %2484 = vmatprep.mubr.bf16.mxu0 %v1999
      %2485 = vmatmul.mubr.bf16.gmra.mxu0 %v1998
      %v2486 = vpop.f32.mrf.mxu0
      %v2487 = vadd.f32 0.0, %v2486
      %v2488 = vpop.f32.mrf.mxu0
      %v2489 = vpop.f32.mrf.mxu0
      %v2490 = vadd.f32 0.0, %v2489
      %v2491 = vpop.f32.mrf.mxu0
      %2492 = vmatprep.mubr.bf16.mxu0 %v2004
      %2493 = vmatmul.mubr.bf16.gmra.mxu0 %v2003
      %v2494 = vpop.f32.mrf.mxu0
      %v2495 = vadd.f32 0.0, %v2494
      %v2496 = vpop.f32.mrf.mxu0
      %v2497 = vpop.f32.mrf.mxu0
      %v2498 = vadd.f32 0.0, %v2497
      %v2499 = vpop.f32.mrf.mxu0
      %2500 = vmatprep.mubr.bf16.mxu0 %v2009
      %2501 = vmatmul.mubr.bf16.gmra.mxu0 %v2008
      %v2502 = vpop.f32.mrf.mxu0
      %v2503 = vadd.f32 0.0, %v2502
      %v2504 = vpop.f32.mrf.mxu0
      %v2505 = vpop.f32.mrf.mxu0
      %v2506 = vadd.f32 0.0, %v2505
      %v2507 = vpop.f32.mrf.mxu0
      %2508 = vmatprep.mubr.bf16.mxu0 %v2014
      %2509 = vmatmul.mubr.bf16.gmra.mxu0 %v2013
      %v2510 = vpop.f32.mrf.mxu0
      %v2511 = vadd.f32 0.0, %v2510
      %v2512 = vpop.f32.mrf.mxu0
      %v2513 = vpop.f32.mrf.mxu0
      %v2514 = vadd.f32 0.0, %v2513
      %v2515 = vpop.f32.mrf.mxu0
      %2516 = vmatprep.mubr.bf16.mxu0 %v2019
      %2517 = vmatmul.mubr.bf16.gmra.mxu0 %v2018
      %v2518 = vpop.f32.mrf.mxu0
      %v2519 = vadd.f32 0.0, %v2518
      %v2520 = vpop.f32.mrf.mxu0
      %v2521 = vpop.f32.mrf.mxu0
      %v2522 = vadd.f32 0.0, %v2521
      %v2523 = vpop.f32.mrf.mxu0
      %2524 = vmatprep.mubr.bf16.mxu0 %v2024
      %2525 = vmatmul.mubr.bf16.gmra.mxu0 %v2023
      %v2526 = vpop.f32.mrf.mxu0
      %v2527 = vadd.f32 0.0, %v2526
      %v2528 = vpop.f32.mrf.mxu0
      %v2529 = vpop.f32.mrf.mxu0
      %v2530 = vadd.f32 0.0, %v2529
      %v2531 = vpop.f32.mrf.mxu0
      %2532 = vmatprep.mubr.bf16.mxu0 %v2029
      %2533 = vmatmul.mubr.bf16.gmra.mxu0 %v2028
      %v2534 = vpop.f32.mrf.mxu0
      %v2535 = vadd.f32 0.0, %v2534
      %v2536 = vpop.f32.mrf.mxu0
      %v2537 = vpop.f32.mrf.mxu0
      %v2538 = vadd.f32 0.0, %v2537
      %v2539 = vpop.f32.mrf.mxu0
      %2540 = vmatprep.mubr.bf16.mxu0 %v2034
      %2541 = vmatmul.mubr.bf16.gmra.mxu0 %v2033
      %v2542 = vpop.f32.mrf.mxu0
      %v2543 = vadd.f32 0.0, %v2542
      %v2544 = vpop.f32.mrf.mxu0
      %v2545 = vpop.f32.mrf.mxu0
      %v2546 = vadd.f32 0.0, %v2545
      %v2547 = vpop.f32.mrf.mxu0
      %2548 = vmatprep.mubr.bf16.mxu0 %v2039
      %2549 = vmatmul.mubr.bf16.gmra.mxu0 %v2038
      %v2550 = vpop.f32.mrf.mxu0
      %v2551 = vadd.f32 0.0, %v2550
      %v2552 = vpop.f32.mrf.mxu0
      %v2553 = vpop.f32.mrf.mxu0
      %v2554 = vadd.f32 0.0, %v2553
      %v2555 = vpop.f32.mrf.mxu0
      %2556 = vmatprep.mubr.bf16.mxu0 %v2044
      %2557 = vmatmul.mubr.bf16.gmra.mxu0 %v2043
      %v2558 = vpop.f32.mrf.mxu0
      %v2559 = vadd.f32 0.0, %v2558
      %v2560 = vpop.f32.mrf.mxu0
      %v2561 = vpop.f32.mrf.mxu0
      %v2562 = vadd.f32 0.0, %v2561
      %v2563 = vpop.f32.mrf.mxu0
      %2564 = vmatprep.mubr.bf16.mxu0 %v2049
      %2565 = vmatmul.mubr.bf16.gmra.mxu0 %v2048
      %v2566 = vpop.f32.mrf.mxu0
      %v2567 = vadd.f32 0.0, %v2566
      %v2568 = vpop.f32.mrf.mxu0
      %v2569 = vpop.f32.mrf.mxu0
      %v2570 = vadd.f32 0.0, %v2569
      %v2571 = vpop.f32.mrf.mxu0
      %2572 = vmatprep.mubr.bf16.mxu0 %v2054
      %2573 = vmatmul.mubr.bf16.gmra.mxu0 %v2053
      %v2574 = vpop.f32.mrf.mxu0
      %v2575 = vadd.f32 0.0, %v2574
      %v2576 = vpop.f32.mrf.mxu0
      %v2577 = vpop.f32.mrf.mxu0
      %v2578 = vadd.f32 0.0, %v2577
      %v2579 = vpop.f32.mrf.mxu0
      %2580 = vmatprep.mubr.bf16.mxu0 %v2059
      %2581 = vmatmul.mubr.bf16.gmra.mxu0 %v2058
      %v2582 = vpop.f32.mrf.mxu0
      %v2583 = vadd.f32 0.0, %v2582
      %v2584 = vpop.f32.mrf.mxu0
      %v2585 = vpop.f32.mrf.mxu0
      %v2586 = vadd.f32 0.0, %v2585
      %v2587 = vpop.f32.mrf.mxu0
      %2588 = vmatprep.mubr.bf16.mxu0 %v2064
      %2589 = vmatmul.mubr.bf16.gmra.mxu0 %v2063
      %v2590 = vpop.f32.mrf.mxu0
      %v2591 = vadd.f32 0.0, %v2590
      %v2592 = vpop.f32.mrf.mxu0
      %v2593 = vpop.f32.mrf.mxu0
      %v2594 = vadd.f32 0.0, %v2593
      %v2595 = vpop.f32.mrf.mxu0
      %2596 = vmatprep.mubr.bf16.mxu0 %v2069
      %2597 = vmatmul.mubr.bf16.gmra.mxu0 %v2068
      %v2598 = vpop.f32.mrf.mxu0
      %v2599 = vadd.f32 0.0, %v2598
      %v2600 = vpop.f32.mrf.mxu0
      %v2601 = vpop.f32.mrf.mxu0
      %v2602 = vadd.f32 0.0, %v2601
      %v2603 = vpop.f32.mrf.mxu0
      %2604 = vmatprep.mubr.bf16.mxu0 %v2074
      %2605 = vmatmul.mubr.bf16.gmra.mxu0 %v2073
      %v2606 = vpop.f32.mrf.mxu0
      %v2607 = vadd.f32 0.0, %v2606
      %v2608 = vpop.f32.mrf.mxu0
      %v2609 = vpop.f32.mrf.mxu0
      %v2610 = vadd.f32 0.0, %v2609
      %v2611 = vpop.f32.mrf.mxu0
      %2612 = vmatprep.mubr.bf16.mxu0 %v2079
      %2613 = vmatmul.mubr.bf16.gmra.mxu0 %v2078
      %v2614 = vpop.f32.mrf.mxu0
      %v2615 = vadd.f32 0.0, %v2614
      %v2616 = vpop.f32.mrf.mxu0
      %v2617 = vpop.f32.mrf.mxu0
      %v2618 = vadd.f32 0.0, %v2617
      %v2619 = vpop.f32.mrf.mxu0
      %2620 = vmatprep.mubr.bf16.mxu0 %v2084
      %2621 = vmatmul.mubr.bf16.gmra.mxu0 %v2083
      %v2622 = vpop.f32.mrf.mxu0
      %v2623 = vadd.f32 0.0, %v2622
      %v2624 = vpop.f32.mrf.mxu0
      %v2625 = vpop.f32.mrf.mxu0
      %v2626 = vadd.f32 0.0, %v2625
      %v2627 = vpop.f32.mrf.mxu0
      %2628 = vmatprep.mubr.bf16.mxu0 %v2089
      %2629 = vmatmul.mubr.bf16.gmra.mxu0 %v2088
      %v2630 = vpop.f32.mrf.mxu0
      %v2631 = vadd.f32 0.0, %v2630
      %v2632 = vpop.f32.mrf.mxu0
      %v2633 = vpop.f32.mrf.mxu0
      %v2634 = vadd.f32 0.0, %v2633
      %v2635 = vpop.f32.mrf.mxu0
      %2636 = vmatprep.mubr.bf16.mxu0 %v2094
      %2637 = vmatmul.mubr.bf16.gmra.mxu0 %v2093
      %v2638 = vpop.f32.mrf.mxu0
      %v2639 = vadd.f32 0.0, %v2638
      %v2640 = vpop.f32.mrf.mxu0
      %v2641 = vpop.f32.mrf.mxu0
      %v2642 = vadd.f32 0.0, %v2641
      %v2643 = vpop.f32.mrf.mxu0
      %2644 = vmatprep.mubr.bf16.mxu0 %v2099
      %2645 = vmatmul.mubr.bf16.gmra.mxu0 %v2098
      %v2646 = vpop.f32.mrf.mxu0
      %v2647 = vadd.f32 0.0, %v2646
      %v2648 = vpop.f32.mrf.mxu0
      %v2649 = vpop.f32.mrf.mxu0
      %v2650 = vadd.f32 0.0, %v2649
      %v2651 = vpop.f32.mrf.mxu0
      %2652 = vmatprep.mubr.bf16.mxu0 %v2104
      %2653 = vmatmul.mubr.bf16.gmra.mxu0 %v2103
      %v2654 = vpop.f32.mrf.mxu0
      %v2655 = vadd.f32 0.0, %v2654
      %v2656 = vpop.f32.mrf.mxu0
      %v2657 = vpop.f32.mrf.mxu0
      %v2658 = vadd.f32 0.0, %v2657
      %v2659 = vpop.f32.mrf.mxu0
      %2660 = vdwg.mxu0
      %2661 = vmatprep.subr.bf16.mxu0 0
      %2662 = vmatpush1.bf16.msra.mxu0 %v2371
      %2663 = vmatprep.subr.bf16.mxu0 0
      %2664 = vmatpush1.bf16.msra.mxu0 %v2370
      %2665 = vmatprep.subr.bf16.mxu0 0
      %2666 = vmatpush1.bf16.msra.mxu0 %v2369
      %2667 = vmatprep.subr.bf16.mxu0 0
      %2668 = vmatpush1.bf16.msra.mxu0 %v2368
      %2669 = vmatprep.subr.bf16.mxu0 0
      %2670 = vmatpush1.bf16.msra.mxu0 %v2367
      %2671 = vmatprep.subr.bf16.mxu0 0
      %2672 = vmatpush1.bf16.msra.mxu0 %v2366
      %2673 = vmatprep.subr.bf16.mxu0 0
      %2674 = vmatpush1.bf16.msra.mxu0 %v2365
      %2675 = vmatprep.subr.bf16.mxu0 0
      %2676 = vmatpush1.bf16.msra.mxu0 %v2364
      %2677 = vmatprep.subr.bf16.mxu0 0
      %2678 = vmatpush2.bf16.msra.mxu0 %v2379
      %2679 = vmatprep.subr.bf16.mxu0 0
      %2680 = vmatpush2.bf16.msra.mxu0 %v2378
      %2681 = vmatprep.subr.bf16.mxu0 0
      %2682 = vmatpush2.bf16.msra.mxu0 %v2377
      %2683 = vmatprep.subr.bf16.mxu0 0
      %2684 = vmatpush2.bf16.msra.mxu0 %v2376
      %2685 = vmatprep.subr.bf16.mxu0 0
      %2686 = vmatpush2.bf16.msra.mxu0 %v2375
      %2687 = vmatprep.subr.bf16.mxu0 0
      %2688 = vmatpush2.bf16.msra.mxu0 %v2374
      %2689 = vmatprep.subr.bf16.mxu0 0
      %2690 = vmatpush2.bf16.msra.mxu0 %v2373
      %2691 = vmatprep.subr.bf16.mxu0 0
      %2692 = vmatpush2.bf16.msra.mxu0 %v2372
      %2693 = vmatprep.mubr.bf16.mxu0 %v1986
      %2694 = vmatmul.mubr.bf16.gmra.mxu0 %v1985
      %v2695 = vpop.f32.mrf.mxu0
      %v2696 = vadd.f32 %v2463, %v2695
      %v2697 = vpop.f32.mrf.mxu0
      %v2698 = vpop.f32.mrf.mxu0
      %v2699 = vadd.f32 %v2466, %v2698
      %v2700 = vpop.f32.mrf.mxu0
      %2701 = vmatprep.mubr.bf16.mxu0 %v1991
      %2702 = vmatmul.mubr.bf16.gmra.mxu0 %v1990
      %v2703 = vpop.f32.mrf.mxu0
      %v2704 = vadd.f32 %v2471, %v2703
      %v2705 = vpop.f32.mrf.mxu0
      %v2706 = vpop.f32.mrf.mxu0
      %v2707 = vadd.f32 %v2474, %v2706
      %v2708 = vpop.f32.mrf.mxu0
      %2709 = vmatprep.mubr.bf16.mxu0 %v1996
      %2710 = vmatmul.mubr.bf16.gmra.mxu0 %v1995
      %v2711 = vpop.f32.mrf.mxu0
      %v2712 = vadd.f32 %v2479, %v2711
      %v2713 = vpop.f32.mrf.mxu0
      %v2714 = vpop.f32.mrf.mxu0
      %v2715 = vadd.f32 %v2482, %v2714
      %v2716 = vpop.f32.mrf.mxu0
      %2717 = vmatprep.mubr.bf16.mxu0 %v2001
      %2718 = vmatmul.mubr.bf16.gmra.mxu0 %v2000
      %v2719 = vpop.f32.mrf.mxu0
      %v2720 = vadd.f32 %v2487, %v2719
      %v2721 = vpop.f32.mrf.mxu0
      %v2722 = vpop.f32.mrf.mxu0
      %v2723 = vadd.f32 %v2490, %v2722
      %v2724 = vpop.f32.mrf.mxu0
      %2725 = vmatprep.mubr.bf16.mxu0 %v2006
      %2726 = vmatmul.mubr.bf16.gmra.mxu0 %v2005
      %v2727 = vpop.f32.mrf.mxu0
      %v2728 = vadd.f32 %v2495, %v2727
      %v2729 = vpop.f32.mrf.mxu0
      %v2730 = vpop.f32.mrf.mxu0
      %v2731 = vadd.f32 %v2498, %v2730
      %v2732 = vpop.f32.mrf.mxu0
      %2733 = vmatprep.mubr.bf16.mxu0 %v2011
      %2734 = vmatmul.mubr.bf16.gmra.mxu0 %v2010
      %v2735 = vpop.f32.mrf.mxu0
      %v2736 = vadd.f32 %v2503, %v2735
      %v2737 = vpop.f32.mrf.mxu0
      %v2738 = vpop.f32.mrf.mxu0
      %v2739 = vadd.f32 %v2506, %v2738
      %v2740 = vpop.f32.mrf.mxu0
      %2741 = vmatprep.mubr.bf16.mxu0 %v2016
      %2742 = vmatmul.mubr.bf16.gmra.mxu0 %v2015
      %v2743 = vpop.f32.mrf.mxu0
      %v2744 = vadd.f32 %v2511, %v2743
      %v2745 = vpop.f32.mrf.mxu0
      %v2746 = vpop.f32.mrf.mxu0
      %v2747 = vadd.f32 %v2514, %v2746
      %v2748 = vpop.f32.mrf.mxu0
      %2749 = vmatprep.mubr.bf16.mxu0 %v2021
      %2750 = vmatmul.mubr.bf16.gmra.mxu0 %v2020
      %v2751 = vpop.f32.mrf.mxu0
      %v2752 = vadd.f32 %v2519, %v2751
      %v2753 = vpop.f32.mrf.mxu0
      %v2754 = vpop.f32.mrf.mxu0
      %v2755 = vadd.f32 %v2522, %v2754
      %v2756 = vpop.f32.mrf.mxu0
      %2757 = vmatprep.mubr.bf16.mxu0 %v2026
      %2758 = vmatmul.mubr.bf16.gmra.mxu0 %v2025
      %v2759 = vpop.f32.mrf.mxu0
      %v2760 = vadd.f32 %v2527, %v2759
      %v2761 = vpop.f32.mrf.mxu0
      %v2762 = vpop.f32.mrf.mxu0
      %v2763 = vadd.f32 %v2530, %v2762
      %v2764 = vpop.f32.mrf.mxu0
      %2765 = vmatprep.mubr.bf16.mxu0 %v2031
      %2766 = vmatmul.mubr.bf16.gmra.mxu0 %v2030
      %v2767 = vpop.f32.mrf.mxu0
      %v2768 = vadd.f32 %v2535, %v2767
      %v2769 = vpop.f32.mrf.mxu0
      %v2770 = vpop.f32.mrf.mxu0
      %v2771 = vadd.f32 %v2538, %v2770
      %v2772 = vpop.f32.mrf.mxu0
      %2773 = vmatprep.mubr.bf16.mxu0 %v2036
      %2774 = vmatmul.mubr.bf16.gmra.mxu0 %v2035
      %v2775 = vpop.f32.mrf.mxu0
      %v2776 = vadd.f32 %v2543, %v2775
      %v2777 = vpop.f32.mrf.mxu0
      %v2778 = vpop.f32.mrf.mxu0
      %v2779 = vadd.f32 %v2546, %v2778
      %v2780 = vpop.f32.mrf.mxu0
      %2781 = vmatprep.mubr.bf16.mxu0 %v2041
      %2782 = vmatmul.mubr.bf16.gmra.mxu0 %v2040
      %v2783 = vpop.f32.mrf.mxu0
      %v2784 = vadd.f32 %v2551, %v2783
      %v2785 = vpop.f32.mrf.mxu0
      %v2786 = vpop.f32.mrf.mxu0
      %v2787 = vadd.f32 %v2554, %v2786
      %v2788 = vpop.f32.mrf.mxu0
      %2789 = vmatprep.mubr.bf16.mxu0 %v2046
      %2790 = vmatmul.mubr.bf16.gmra.mxu0 %v2045
      %v2791 = vpop.f32.mrf.mxu0
      %v2792 = vadd.f32 %v2559, %v2791
      %v2793 = vpop.f32.mrf.mxu0
      %v2794 = vpop.f32.mrf.mxu0
      %v2795 = vadd.f32 %v2562, %v2794
      %v2796 = vpop.f32.mrf.mxu0
      %2797 = vmatprep.mubr.bf16.mxu0 %v2051
      %2798 = vmatmul.mubr.bf16.gmra.mxu0 %v2050
      %v2799 = vpop.f32.mrf.mxu0
      %v2800 = vadd.f32 %v2567, %v2799
      %v2801 = vpop.f32.mrf.mxu0
      %v2802 = vpop.f32.mrf.mxu0
      %v2803 = vadd.f32 %v2570, %v2802
      %v2804 = vpop.f32.mrf.mxu0
      %2805 = vmatprep.mubr.bf16.mxu0 %v2056
      %2806 = vmatmul.mubr.bf16.gmra.mxu0 %v2055
      %v2807 = vpop.f32.mrf.mxu0
      %v2808 = vadd.f32 %v2575, %v2807
      %v2809 = vpop.f32.mrf.mxu0
      %v2810 = vpop.f32.mrf.mxu0
      %v2811 = vadd.f32 %v2578, %v2810
      %v2812 = vpop.f32.mrf.mxu0
      %2813 = vmatprep.mubr.bf16.mxu0 %v2061
      %2814 = vmatmul.mubr.bf16.gmra.mxu0 %v2060
      %v2815 = vpop.f32.mrf.mxu0
      %v2816 = vadd.f32 %v2583, %v2815
      %v2817 = vpop.f32.mrf.mxu0
      %v2818 = vpop.f32.mrf.mxu0
      %v2819 = vadd.f32 %v2586, %v2818
      %v2820 = vpop.f32.mrf.mxu0
      %2821 = vmatprep.mubr.bf16.mxu0 %v2066
      %2822 = vmatmul.mubr.bf16.gmra.mxu0 %v2065
      %v2823 = vpop.f32.mrf.mxu0
      %v2824 = vadd.f32 %v2591, %v2823
      %v2825 = vpop.f32.mrf.mxu0
      %v2826 = vpop.f32.mrf.mxu0
      %v2827 = vadd.f32 %v2594, %v2826
      %v2828 = vpop.f32.mrf.mxu0
      %2829 = vmatprep.mubr.bf16.mxu0 %v2071
      %2830 = vmatmul.mubr.bf16.gmra.mxu0 %v2070
      %v2831 = vpop.f32.mrf.mxu0
      %v2832 = vadd.f32 %v2599, %v2831
      %v2833 = vpop.f32.mrf.mxu0
      %v2834 = vpop.f32.mrf.mxu0
      %v2835 = vadd.f32 %v2602, %v2834
      %v2836 = vpop.f32.mrf.mxu0
      %2837 = vmatprep.mubr.bf16.mxu0 %v2076
      %2838 = vmatmul.mubr.bf16.gmra.mxu0 %v2075
      %v2839 = vpop.f32.mrf.mxu0
      %v2840 = vadd.f32 %v2607, %v2839
      %v2841 = vpop.f32.mrf.mxu0
      %v2842 = vpop.f32.mrf.mxu0
      %v2843 = vadd.f32 %v2610, %v2842
      %v2844 = vpop.f32.mrf.mxu0
      %2845 = vmatprep.mubr.bf16.mxu0 %v2081
      %2846 = vmatmul.mubr.bf16.gmra.mxu0 %v2080
      %v2847 = vpop.f32.mrf.mxu0
      %v2848 = vadd.f32 %v2615, %v2847
      %v2849 = vpop.f32.mrf.mxu0
      %v2850 = vpop.f32.mrf.mxu0
      %v2851 = vadd.f32 %v2618, %v2850
      %v2852 = vpop.f32.mrf.mxu0
      %2853 = vmatprep.mubr.bf16.mxu0 %v2086
      %2854 = vmatmul.mubr.bf16.gmra.mxu0 %v2085
      %v2855 = vpop.f32.mrf.mxu0
      %v2856 = vadd.f32 %v2623, %v2855
      %v2857 = vpop.f32.mrf.mxu0
      %v2858 = vpop.f32.mrf.mxu0
      %v2859 = vadd.f32 %v2626, %v2858
      %v2860 = vpop.f32.mrf.mxu0
      %2861 = vmatprep.mubr.bf16.mxu0 %v2091
      %2862 = vmatmul.mubr.bf16.gmra.mxu0 %v2090
      %v2863 = vpop.f32.mrf.mxu0
      %v2864 = vadd.f32 %v2631, %v2863
      %v2865 = vpop.f32.mrf.mxu0
      %v2866 = vpop.f32.mrf.mxu0
      %v2867 = vadd.f32 %v2634, %v2866
      %v2868 = vpop.f32.mrf.mxu0
      %2869 = vmatprep.mubr.bf16.mxu0 %v2096
      %2870 = vmatmul.mubr.bf16.gmra.mxu0 %v2095
      %v2871 = vpop.f32.mrf.mxu0
      %v2872 = vadd.f32 %v2639, %v2871
      %v2873 = vpop.f32.mrf.mxu0
      %v2874 = vpop.f32.mrf.mxu0
      %v2875 = vadd.f32 %v2642, %v2874
      %v2876 = vpop.f32.mrf.mxu0
      %2877 = vmatprep.mubr.bf16.mxu0 %v2101
      %2878 = vmatmul.mubr.bf16.gmra.mxu0 %v2100
      %v2879 = vpop.f32.mrf.mxu0
      %v2880 = vadd.f32 %v2647, %v2879
      %v2881 = vpop.f32.mrf.mxu0
      %v2882 = vpop.f32.mrf.mxu0
      %v2883 = vadd.f32 %v2650, %v2882
      %v2884 = vpop.f32.mrf.mxu0
      %2885 = vmatprep.mubr.bf16.mxu0 %v2106
      %2886 = vmatmul.mubr.bf16.gmra.mxu0 %v2105
      %v2887 = vpop.f32.mrf.mxu0
      %v2888 = vadd.f32 %v2655, %v2887
      %v2889 = vpop.f32.mrf.mxu0
      %v2890 = vpop.f32.mrf.mxu0
      %v2891 = vadd.f32 %v2658, %v2890
      %v2892 = vpop.f32.mrf.mxu0
      %2893 = vdwg.mxu0
      %2894 = vmatprep.subr.bf16.mxu0 0
      %2895 = vmatpush1.bf16.msra.mxu0 %v2387
      %2896 = vmatprep.subr.bf16.mxu0 0
      %2897 = vmatpush1.bf16.msra.mxu0 %v2386
      %2898 = vmatprep.subr.bf16.mxu0 0
      %2899 = vmatpush1.bf16.msra.mxu0 %v2385
      %2900 = vmatprep.subr.bf16.mxu0 0
      %2901 = vmatpush1.bf16.msra.mxu0 %v2384
      %2902 = vmatprep.subr.bf16.mxu0 0
      %2903 = vmatpush1.bf16.msra.mxu0 %v2383
      %2904 = vmatprep.subr.bf16.mxu0 0
      %2905 = vmatpush1.bf16.msra.mxu0 %v2382
      %2906 = vmatprep.subr.bf16.mxu0 0
      %2907 = vmatpush1.bf16.msra.mxu0 %v2381
      %2908 = vmatprep.subr.bf16.mxu0 0
      %2909 = vmatpush1.bf16.msra.mxu0 %v2380
      %2910 = vmatprep.subr.bf16.mxu0 0
      %2911 = vmatpush2.bf16.msra.mxu0 0
      %2912 = vmatprep.subr.bf16.mxu0 0
      %2913 = vmatpush2.bf16.msra.mxu0 0
      %2914 = vmatprep.subr.bf16.mxu0 0
      %2915 = vmatpush2.bf16.msra.mxu0 0
      %2916 = vmatprep.subr.bf16.mxu0 0
      %2917 = vmatpush2.bf16.msra.mxu0 0
      %2918 = vmatprep.subr.bf16.mxu0 0
      %2919 = vmatpush2.bf16.msra.mxu0 0
      %2920 = vmatprep.subr.bf16.mxu0 0
      %2921 = vmatpush2.bf16.msra.mxu0 0
      %2922 = vmatprep.subr.bf16.mxu0 0
      %2923 = vmatpush2.bf16.msra.mxu0 0
      %2924 = vmatprep.subr.bf16.mxu0 0
      %2925 = vmatpush2.bf16.msra.mxu0 0
      %2926 = vmatprep.mubr.bf16.mxu0 0
      %2927 = vmatmul.mubr.bf16.gmra.mxu0 %v1987
      %v2928 = vpop.f32.mrf.mxu0
      %v2929 = vadd.f32 %v2696, %v2928
      %v2930 = vpop.f32.mrf.mxu0
      %v2931 = vpop.f32.mrf.mxu0
      %v2932 = vadd.f32 %v2699, %v2931
      %v2933 = vpop.f32.mrf.mxu0
      %2934 = vmatprep.mubr.bf16.mxu0 0
      %2935 = vmatmul.mubr.bf16.gmra.mxu0 %v1992
      %v2936 = vpop.f32.mrf.mxu0
      %v2937 = vadd.f32 %v2704, %v2936
      %v2938 = vpop.f32.mrf.mxu0
      %v2939 = vpop.f32.mrf.mxu0
      %v2940 = vadd.f32 %v2707, %v2939
      %v2941 = vpop.f32.mrf.mxu0
      %2942 = vmatprep.mubr.bf16.mxu0 0
      %2943 = vmatmul.mubr.bf16.gmra.mxu0 %v1997
      %v2944 = vpop.f32.mrf.mxu0
      %v2945 = vadd.f32 %v2712, %v2944
      %v2946 = vpop.f32.mrf.mxu0
      %v2947 = vpop.f32.mrf.mxu0
      %v2948 = vadd.f32 %v2715, %v2947
      %v2949 = vpop.f32.mrf.mxu0
      %2950 = vmatprep.mubr.bf16.mxu0 0
      %2951 = vmatmul.mubr.bf16.gmra.mxu0 %v2002
      %v2952 = vpop.f32.mrf.mxu0
      %v2953 = vadd.f32 %v2720, %v2952
      %v2954 = vpop.f32.mrf.mxu0
      %v2955 = vpop.f32.mrf.mxu0
      %v2956 = vadd.f32 %v2723, %v2955
      %v2957 = vpop.f32.mrf.mxu0
      %2958 = vmatprep.mubr.bf16.mxu0 0
      %2959 = vmatmul.mubr.bf16.gmra.mxu0 %v2007
      %v2960 = vpop.f32.mrf.mxu0
      %v2961 = vadd.f32 %v2728, %v2960
      %v2962 = vpop.f32.mrf.mxu0
      %v2963 = vpop.f32.mrf.mxu0
      %v2964 = vadd.f32 %v2731, %v2963
      %v2965 = vpop.f32.mrf.mxu0
      %2966 = vmatprep.mubr.bf16.mxu0 0
      %2967 = vmatmul.mubr.bf16.gmra.mxu0 %v2012
      %v2968 = vpop.f32.mrf.mxu0
      %v2969 = vadd.f32 %v2736, %v2968
      %v2970 = vpop.f32.mrf.mxu0
      %v2971 = vpop.f32.mrf.mxu0
      %v2972 = vadd.f32 %v2739, %v2971
      %v2973 = vpop.f32.mrf.mxu0
      %2974 = vmatprep.mubr.bf16.mxu0 0
      %2975 = vmatmul.mubr.bf16.gmra.mxu0 %v2017
      %v2976 = vpop.f32.mrf.mxu0
      %v2977 = vadd.f32 %v2744, %v2976
      %v2978 = vpop.f32.mrf.mxu0
      %v2979 = vpop.f32.mrf.mxu0
      %v2980 = vadd.f32 %v2747, %v2979
      %v2981 = vpop.f32.mrf.mxu0
      %2982 = vmatprep.mubr.bf16.mxu0 0
      %2983 = vmatmul.mubr.bf16.gmra.mxu0 %v2022
      %v2984 = vpop.f32.mrf.mxu0
      %v2985 = vadd.f32 %v2752, %v2984
      %v2986 = vpop.f32.mrf.mxu0
      %v2987 = vpop.f32.mrf.mxu0
      %v2988 = vadd.f32 %v2755, %v2987
      %v2989 = vpop.f32.mrf.mxu0
      %2990 = vmatprep.mubr.bf16.mxu0 0
      %2991 = vmatmul.mubr.bf16.gmra.mxu0 %v2027
      %v2992 = vpop.f32.mrf.mxu0
      %v2993 = vadd.f32 %v2760, %v2992
      %v2994 = vpop.f32.mrf.mxu0
      %v2995 = vpop.f32.mrf.mxu0
      %v2996 = vadd.f32 %v2763, %v2995
      %v2997 = vpop.f32.mrf.mxu0
      %2998 = vmatprep.mubr.bf16.mxu0 0
      %2999 = vmatmul.mubr.bf16.gmra.mxu0 %v2032
      %v3000 = vpop.f32.mrf.mxu0
      %v3001 = vadd.f32 %v2768, %v3000
      %v3002 = vpop.f32.mrf.mxu0
      %v3003 = vpop.f32.mrf.mxu0
      %v3004 = vadd.f32 %v2771, %v3003
      %v3005 = vpop.f32.mrf.mxu0
      %3006 = vmatprep.mubr.bf16.mxu0 0
      %3007 = vmatmul.mubr.bf16.gmra.mxu0 %v2037
      %v3008 = vpop.f32.mrf.mxu0
      %v3009 = vadd.f32 %v2776, %v3008
      %v3010 = vpop.f32.mrf.mxu0
      %v3011 = vpop.f32.mrf.mxu0
      %v3012 = vadd.f32 %v2779, %v3011
      %v3013 = vpop.f32.mrf.mxu0
      %3014 = vmatprep.mubr.bf16.mxu0 0
      %3015 = vmatmul.mubr.bf16.gmra.mxu0 %v2042
      %v3016 = vpop.f32.mrf.mxu0
      %v3017 = vadd.f32 %v2784, %v3016
      %v3018 = vpop.f32.mrf.mxu0
      %v3019 = vpop.f32.mrf.mxu0
      %v3020 = vadd.f32 %v2787, %v3019
      %v3021 = vpop.f32.mrf.mxu0
      %3022 = vmatprep.mubr.bf16.mxu0 0
      %3023 = vmatmul.mubr.bf16.gmra.mxu0 %v2047
      %v3024 = vpop.f32.mrf.mxu0
      %v3025 = vadd.f32 %v2792, %v3024
      %v3026 = vpop.f32.mrf.mxu0
      %v3027 = vpop.f32.mrf.mxu0
      %v3028 = vadd.f32 %v2795, %v3027
      %v3029 = vpop.f32.mrf.mxu0
      %3030 = vmatprep.mubr.bf16.mxu0 0
      %3031 = vmatmul.mubr.bf16.gmra.mxu0 %v2052
      %v3032 = vpop.f32.mrf.mxu0
      %v3033 = vadd.f32 %v2800, %v3032
      %v3034 = vpop.f32.mrf.mxu0
      %v3035 = vpop.f32.mrf.mxu0
      %v3036 = vadd.f32 %v2803, %v3035
      %v3037 = vpop.f32.mrf.mxu0
      %3038 = vmatprep.mubr.bf16.mxu0 0
      %3039 = vmatmul.mubr.bf16.gmra.mxu0 %v2057
      %v3040 = vpop.f32.mrf.mxu0
      %v3041 = vadd.f32 %v2808, %v3040
      %v3042 = vpop.f32.mrf.mxu0
      %v3043 = vpop.f32.mrf.mxu0
      %v3044 = vadd.f32 %v2811, %v3043
      %v3045 = vpop.f32.mrf.mxu0
      %3046 = vmatprep.mubr.bf16.mxu0 0
      %3047 = vmatmul.mubr.bf16.gmra.mxu0 %v2062
      %v3048 = vpop.f32.mrf.mxu0
      %v3049 = vadd.f32 %v2816, %v3048
      %v3050 = vpop.f32.mrf.mxu0
      %v3051 = vpop.f32.mrf.mxu0
      %v3052 = vadd.f32 %v2819, %v3051
      %v3053 = vpop.f32.mrf.mxu0
      %3054 = vmatprep.mubr.bf16.mxu0 0
      %3055 = vmatmul.mubr.bf16.gmra.mxu0 %v2067
      %v3056 = vpop.f32.mrf.mxu0
      %v3057 = vadd.f32 %v2824, %v3056
      %v3058 = vpop.f32.mrf.mxu0
      %v3059 = vpop.f32.mrf.mxu0
      %v3060 = vadd.f32 %v2827, %v3059
      %v3061 = vpop.f32.mrf.mxu0
      %3062 = vmatprep.mubr.bf16.mxu0 0
      %3063 = vmatmul.mubr.bf16.gmra.mxu0 %v2072
      %v3064 = vpop.f32.mrf.mxu0
      %v3065 = vadd.f32 %v2832, %v3064
      %v3066 = vpop.f32.mrf.mxu0
      %v3067 = vpop.f32.mrf.mxu0
      %v3068 = vadd.f32 %v2835, %v3067
      %v3069 = vpop.f32.mrf.mxu0
      %3070 = vmatprep.mubr.bf16.mxu0 0
      %3071 = vmatmul.mubr.bf16.gmra.mxu0 %v2077
      %v3072 = vpop.f32.mrf.mxu0
      %v3073 = vadd.f32 %v2840, %v3072
      %v3074 = vpop.f32.mrf.mxu0
      %v3075 = vpop.f32.mrf.mxu0
      %v3076 = vadd.f32 %v2843, %v3075
      %v3077 = vpop.f32.mrf.mxu0
      %3078 = vmatprep.mubr.bf16.mxu0 0
      %3079 = vmatmul.mubr.bf16.gmra.mxu0 %v2082
      %v3080 = vpop.f32.mrf.mxu0
      %v3081 = vadd.f32 %v2848, %v3080
      %v3082 = vpop.f32.mrf.mxu0
      %v3083 = vpop.f32.mrf.mxu0
      %v3084 = vadd.f32 %v2851, %v3083
      %v3085 = vpop.f32.mrf.mxu0
      %3086 = vmatprep.mubr.bf16.mxu0 0
      %3087 = vmatmul.mubr.bf16.gmra.mxu0 %v2087
      %v3088 = vpop.f32.mrf.mxu0
      %v3089 = vadd.f32 %v2856, %v3088
      %v3090 = vpop.f32.mrf.mxu0
      %v3091 = vpop.f32.mrf.mxu0
      %v3092 = vadd.f32 %v2859, %v3091
      %v3093 = vpop.f32.mrf.mxu0
      %3094 = vmatprep.mubr.bf16.mxu0 0
      %3095 = vmatmul.mubr.bf16.gmra.mxu0 %v2092
      %v3096 = vpop.f32.mrf.mxu0
      %v3097 = vadd.f32 %v2864, %v3096
      %v3098 = vpop.f32.mrf.mxu0
      %v3099 = vpop.f32.mrf.mxu0
      %v3100 = vadd.f32 %v2867, %v3099
      %v3101 = vpop.f32.mrf.mxu0
      %3102 = vmatprep.mubr.bf16.mxu0 0
      %3103 = vmatmul.mubr.bf16.gmra.mxu0 %v2097
      %v3104 = vpop.f32.mrf.mxu0
      %v3105 = vadd.f32 %v2872, %v3104
      %v3106 = vpop.f32.mrf.mxu0
      %v3107 = vpop.f32.mrf.mxu0
      %v3108 = vadd.f32 %v2875, %v3107
      %v3109 = vpop.f32.mrf.mxu0
      %3110 = vmatprep.mubr.bf16.mxu0 0
      %3111 = vmatmul.mubr.bf16.gmra.mxu0 %v2102
      %v3112 = vpop.f32.mrf.mxu0
      %v3113 = vadd.f32 %v2880, %v3112
      %v3114 = vpop.f32.mrf.mxu0
      %v3115 = vpop.f32.mrf.mxu0
      %v3116 = vadd.f32 %v2883, %v3115
      %v3117 = vpop.f32.mrf.mxu0
      %3118 = vmatprep.mubr.bf16.mxu0 0
      %3119 = vmatmul.mubr.bf16.gmra.mxu0 %v2107
      %v3120 = vpop.f32.mrf.mxu0
      %v3121 = vadd.f32 %v2888, %v3120
      %v3122 = vpop.f32.mrf.mxu0
      %v3123 = vpop.f32.mrf.mxu0
      %v3124 = vadd.f32 %v2891, %v3123
      %v3125 = vpop.f32.mrf.mxu0
      %3126 = vdwg.mxu0
      %v3127 = vld [vmem:[%s7] sm:$0x1]
      %v3128 = vlaneseq
      %v3129 = vshrl.u32 %v3128, 7
      %v3130 = vsub.s32 0, %v3129
      %v3131 = vrot.slane %v3127, %v3130
      %v3132 = vmul.f32 %v2929, %v3131
      %v3133 = vmul.f32 %v2932, %v3131
      %v3134 = vmul.f32 %v2937, %v3131
      %v3135 = vmul.f32 %v2940, %v3131
      %v3136 = vmul.f32 %v2945, %v3131
      %v3137 = vmul.f32 %v2948, %v3131
      %v3138 = vmul.f32 %v2953, %v3131
      %v3139 = vmul.f32 %v2956, %v3131
      %v3140 = vmul.f32 %v2961, %v3131
      %v3141 = vmul.f32 %v2964, %v3131
      %v3142 = vmul.f32 %v2969, %v3131
      %v3143 = vmul.f32 %v2972, %v3131
      %v3144 = vmul.f32 %v2977, %v3131
      %v3145 = vmul.f32 %v2980, %v3131
      %v3146 = vmul.f32 %v2985, %v3131
      %v3147 = vmul.f32 %v2988, %v3131
      %v3148 = vmul.f32 %v2993, %v3131
      %v3149 = vmul.f32 %v2996, %v3131
      %v3150 = vmul.f32 %v3001, %v3131
      %v3151 = vmul.f32 %v3004, %v3131
      %v3152 = vmul.f32 %v3009, %v3131
      %v3153 = vmul.f32 %v3012, %v3131
      %v3154 = vmul.f32 %v3017, %v3131
      %v3155 = vmul.f32 %v3020, %v3131
      %v3156 = vmul.f32 %v3025, %v3131
      %v3157 = vmul.f32 %v3028, %v3131
      %v3158 = vmul.f32 %v3033, %v3131
      %v3159 = vmul.f32 %v3036, %v3131
      %v3160 = vmul.f32 %v3041, %v3131
      %v3161 = vmul.f32 %v3044, %v3131
      %v3162 = vmul.f32 %v3049, %v3131
      %v3163 = vmul.f32 %v3052, %v3131
      %v3164 = vmul.f32 %v3057, %v3131
      %v3165 = vmul.f32 %v3060, %v3131
      %v3166 = vmul.f32 %v3065, %v3131
      %v3167 = vmul.f32 %v3068, %v3131
      %v3168 = vmul.f32 %v3073, %v3131
      %v3169 = vmul.f32 %v3076, %v3131
      %v3170 = vmul.f32 %v3081, %v3131
      %v3171 = vmul.f32 %v3084, %v3131
      %v3172 = vmul.f32 %v3089, %v3131
      %v3173 = vmul.f32 %v3092, %v3131
      %v3174 = vmul.f32 %v3097, %v3131
      %v3175 = vmul.f32 %v3100, %v3131
      %v3176 = vmul.f32 %v3105, %v3131
      %v3177 = vmul.f32 %v3108, %v3131
      %v3178 = vmul.f32 %v3113, %v3131
      %v3179 = vmul.f32 %v3116, %v3131
      %v3180 = vmul.f32 %v3121, %v3131
      %v3181 = vmul.f32 %v3124, %v3131
      %v3182 = vld [vmem:[%s8] sm:$0x1]
      %v3183 = vlaneseq
      %v3184 = vshrl.u32 %v3183, 7
      %v3185 = vsub.s32 0, %v3184
      %v3186 = vrot.slane %v3182, %v3185
      %v3187 = vadd.f32 %v3132, %v3186
      %v3188 = vadd.f32 %v3133, %v3186
      %v3189 = vadd.f32 %v3134, %v3186
      %v3190 = vadd.f32 %v3135, %v3186
      %v3191 = vadd.f32 %v3136, %v3186
      %v3192 = vadd.f32 %v3137, %v3186
      %v3193 = vadd.f32 %v3138, %v3186
      %v3194 = vadd.f32 %v3139, %v3186
      %v3195 = vadd.f32 %v3140, %v3186
      %v3196 = vadd.f32 %v3141, %v3186
      %v3197 = vadd.f32 %v3142, %v3186
      %v3198 = vadd.f32 %v3143, %v3186
      %v3199 = vadd.f32 %v3144, %v3186
      %v3200 = vadd.f32 %v3145, %v3186
      %v3201 = vadd.f32 %v3146, %v3186
      %v3202 = vadd.f32 %v3147, %v3186
      %v3203 = vadd.f32 %v3148, %v3186
      %v3204 = vadd.f32 %v3149, %v3186
      %v3205 = vadd.f32 %v3150, %v3186
      %v3206 = vadd.f32 %v3151, %v3186
      %v3207 = vadd.f32 %v3152, %v3186
      %v3208 = vadd.f32 %v3153, %v3186
      %v3209 = vadd.f32 %v3154, %v3186
      %v3210 = vadd.f32 %v3155, %v3186
      %v3211 = vadd.f32 %v3156, %v3186
      %v3212 = vadd.f32 %v3157, %v3186
      %v3213 = vadd.f32 %v3158, %v3186
      %v3214 = vadd.f32 %v3159, %v3186
      %v3215 = vadd.f32 %v3160, %v3186
      %v3216 = vadd.f32 %v3161, %v3186
      %v3217 = vadd.f32 %v3162, %v3186
      %v3218 = vadd.f32 %v3163, %v3186
      %v3219 = vadd.f32 %v3164, %v3186
      %v3220 = vadd.f32 %v3165, %v3186
      %v3221 = vadd.f32 %v3166, %v3186
      %v3222 = vadd.f32 %v3167, %v3186
      %v3223 = vadd.f32 %v3168, %v3186
      %v3224 = vadd.f32 %v3169, %v3186
      %v3225 = vadd.f32 %v3170, %v3186
      %v3226 = vadd.f32 %v3171, %v3186
      %v3227 = vadd.f32 %v3172, %v3186
      %v3228 = vadd.f32 %v3173, %v3186
      %v3229 = vadd.f32 %v3174, %v3186
      %v3230 = vadd.f32 %v3175, %v3186
      %v3231 = vadd.f32 %v3176, %v3186
      %v3232 = vadd.f32 %v3177, %v3186
      %v3233 = vadd.f32 %v3178, %v3186
      %v3234 = vadd.f32 %v3179, %v3186
      %v3235 = vadd.f32 %v3180, %v3186
      %v3236 = vadd.f32 %v3181, %v3186
      %v3237 = vmax.f32 %v3187, 0.0
      %v3238 = vmax.f32 %v3188, 0.0
      %v3239 = vmax.f32 %v3189, 0.0
      %v3240 = vmax.f32 %v3190, 0.0
      %v3241 = vmax.f32 %v3191, 0.0
      %v3242 = vmax.f32 %v3192, 0.0
      %v3243 = vmax.f32 %v3193, 0.0
      %v3244 = vmax.f32 %v3194, 0.0
      %v3245 = vmax.f32 %v3195, 0.0
      %v3246 = vmax.f32 %v3196, 0.0
      %v3247 = vmax.f32 %v3197, 0.0
      %v3248 = vmax.f32 %v3198, 0.0
      %v3249 = vmax.f32 %v3199, 0.0
      %v3250 = vmax.f32 %v3200, 0.0
      %v3251 = vmax.f32 %v3201, 0.0
      %v3252 = vmax.f32 %v3202, 0.0
      %v3253 = vmax.f32 %v3203, 0.0
      %v3254 = vmax.f32 %v3204, 0.0
      %v3255 = vmax.f32 %v3205, 0.0
      %v3256 = vmax.f32 %v3206, 0.0
      %v3257 = vmax.f32 %v3207, 0.0
      %v3258 = vmax.f32 %v3208, 0.0
      %v3259 = vmax.f32 %v3209, 0.0
      %v3260 = vmax.f32 %v3210, 0.0
      %v3261 = vmax.f32 %v3211, 0.0
      %v3262 = vmax.f32 %v3212, 0.0
      %v3263 = vmax.f32 %v3213, 0.0
      %v3264 = vmax.f32 %v3214, 0.0
      %v3265 = vmax.f32 %v3215, 0.0
      %v3266 = vmax.f32 %v3216, 0.0
      %v3267 = vmax.f32 %v3217, 0.0
      %v3268 = vmax.f32 %v3218, 0.0
      %v3269 = vmax.f32 %v3219, 0.0
      %v3270 = vmax.f32 %v3220, 0.0
      %v3271 = vmax.f32 %v3221, 0.0
      %v3272 = vmax.f32 %v3222, 0.0
      %v3273 = vmax.f32 %v3223, 0.0
      %v3274 = vmax.f32 %v3224, 0.0
      %v3275 = vmax.f32 %v3225, 0.0
      %v3276 = vmax.f32 %v3226, 0.0
      %v3277 = vmax.f32 %v3227, 0.0
      %v3278 = vmax.f32 %v3228, 0.0
      %v3279 = vmax.f32 %v3229, 0.0
      %v3280 = vmax.f32 %v3230, 0.0
      %v3281 = vmax.f32 %v3231, 0.0
      %v3282 = vmax.f32 %v3232, 0.0
      %v3283 = vmax.f32 %v3233, 0.0
      %v3284 = vmax.f32 %v3234, 0.0
      %v3285 = vmax.f32 %v3235, 0.0
      %v3286 = vmax.f32 %v3236, 0.0
      %v3287 = vpack.c.bf16 %v3238, %v3237
      %v3288 = vpack.c.bf16 %v3240, %v3239
      %v3289 = vpack.c.bf16 %v3242, %v3241
      %v3290 = vpack.c.bf16 %v3244, %v3243
      %v3291 = vpack.c.bf16 %v3246, %v3245
      %v3292 = vpack.c.bf16 %v3248, %v3247
      %v3293 = vpack.c.bf16 %v3250, %v3249
      %v3294 = vpack.c.bf16 %v3252, %v3251
      %v3295 = vpack.c.bf16 %v3254, %v3253
      %v3296 = vpack.c.bf16 %v3256, %v3255
      %v3297 = vpack.c.bf16 %v3258, %v3257
      %v3298 = vpack.c.bf16 %v3260, %v3259
      %v3299 = vpack.c.bf16 %v3262, %v3261
      %v3300 = vpack.c.bf16 %v3264, %v3263
      %v3301 = vpack.c.bf16 %v3266, %v3265
      %v3302 = vpack.c.bf16 %v3268, %v3267
      %v3303 = vpack.c.bf16 %v3270, %v3269
      %v3304 = vpack.c.bf16 %v3272, %v3271
      %v3305 = vpack.c.bf16 %v3274, %v3273
      %v3306 = vpack.c.bf16 %v3276, %v3275
      %v3307 = vpack.c.bf16 %v3278, %v3277
      %v3308 = vpack.c.bf16 %v3280, %v3279
      %v3309 = vpack.c.bf16 %v3282, %v3281
      %v3310 = vpack.c.bf16 %v3284, %v3283
      %v3311 = vpack.c.bf16 %v3286, %v3285
      %3315 = vrot.lane.b32.xlu0 %v3288, 64
      %v3316 = vpop.permute.xlu0 %3315
      %3317 = vrot.lane.b32.xlu0 %v3289, 64
      %v3318 = vpop.permute.xlu0 %3317
      %3319 = vrot.lane.b32.xlu0 %v3290, 64
      %v3320 = vpop.permute.xlu0 %3319
      %3324 = vrot.lane.b32.xlu0 %v3292, 64
      %v3325 = vpop.permute.xlu0 %3324
      %3326 = vrot.lane.b32.xlu0 %v3293, 64
      %v3327 = vpop.permute.xlu0 %3326
      %3328 = vrot.lane.b32.xlu0 %v3294, 64
      %v3329 = vpop.permute.xlu0 %3328
      %3332 = vrot.lane.b32.xlu0 %v3295, 64
      %v3333 = vpop.permute.xlu0 %3332
      %3334 = vrot.lane.b32.xlu0 %v3296, 64
      %v3335 = vpop.permute.xlu0 %3334
      %3339 = vrot.lane.b32.xlu0 %v3298, 64
      %v3340 = vpop.permute.xlu0 %3339
      %3341 = vrot.lane.b32.xlu0 %v3299, 64
      %v3342 = vpop.permute.xlu0 %3341
      %3343 = vrot.lane.b32.xlu0 %v3300, 64
      %v3344 = vpop.permute.xlu0 %3343
      %vm3345 = vcmask 523264
      %v3348 = vsel %vm3345, %v3287, %v3316
      %v3352 = vsel %vm3345, %v3288, %v3318
      %v3356 = vsel %vm3345, %v3289, %v3320
      %v3359 = vsel %vm3345, %v3289, %v3325
      %v3363 = vsel %vm3345, %v3290, %v3327
      %v3367 = vsel %vm3345, %v3291, %v3329
      %v3370 = vsel %vm3345, %v3293, %v3329
      %v3374 = vsel %vm3345, %v3294, %v3333
      %v3378 = vsel %vm3345, %v3295, %v3335
      %v3382 = vsel %vm3345, %v3297, %v3340
      %v3386 = vsel %vm3345, %v3298, %v3342
      %v3390 = vsel %vm3345, %v3299, %v3344
      %3393 = vrot.lane.b32.xlu0 %v3297, 64
      %v3394 = vpop.permute.xlu0 %3393
      %3396 = vrot.lane.b32.xlu0 %v3301, 64
      %v3397 = vpop.permute.xlu0 %3396
      %3401 = vrot.lane.b32.xlu0 %v3303, 64
      %v3402 = vpop.permute.xlu0 %3401
      %3403 = vrot.lane.b32.xlu0 %v3304, 64
      %v3404 = vpop.permute.xlu0 %3403
      %3405 = vrot.lane.b32.xlu0 %v3305, 64
      %v3406 = vpop.permute.xlu0 %3405
      %v3408 = vsel %vm3345, %v3292, %v3327
      %v3411 = vsel %vm3345, %v3294, %v3394
      %v3413 = vsel %vm3345, %v3295, %v3340
      %v3416 = vsel %vm3345, %v3296, %v3342
      %v3420 = vsel %vm3345, %v3300, %v3397
      %v3424 = vsel %vm3345, %v3302, %v3402
      %v3428 = vsel %vm3345, %v3303, %v3404
      %v3432 = vsel %vm3345, %v3304, %v3406
      %3435 = vrot.lane.b32.xlu0 %v3302, 64
      %v3436 = vpop.permute.xlu0 %3435
      %3438 = vrot.lane.b32.xlu0 %v3306, 64
      %v3439 = vpop.permute.xlu0 %3438
      %3443 = vrot.lane.b32.xlu0 %v3308, 64
      %v3444 = vpop.permute.xlu0 %3443
      %3445 = vrot.lane.b32.xlu0 %v3309, 64
      %v3446 = vpop.permute.xlu0 %3445
      %3447 = vrot.lane.b32.xlu0 %v3310, 64
      %v3448 = vpop.permute.xlu0 %3447
      %v3450 = vsel %vm3345, %v3299, %v3436
      %v3452 = vsel %vm3345, %v3300, %v3402
      %v3455 = vsel %vm3345, %v3301, %v3404
      %v3459 = vsel %vm3345, %v3305, %v3439
      %v3463 = vsel %vm3345, %v3307, %v3444
      %v3467 = vsel %vm3345, %v3308, %v3446
      %v3471 = vsel %vm3345, %v3309, %v3448
      %v3473 = vld [vmem:[%s4] sm:$0xf]
      %v3474 = vld [vmem:[%s4 + $0x4] sm:$0xf]
      %v3475 = vld [vmem:[%s4 + $0x8] sm:$0xf]
      %v3476 = vld [vmem:[%s4 + $0xc] sm:$0xf]
      %v3477 = vld [vmem:[%s4 + $0x10] sm:$0xf]
      %v3478 = vld [vmem:[%s4 + $0x14] sm:$0xf]
      %v3479 = vld [vmem:[%s4 + $0x18] sm:$0xf]
      %v3480 = vld [vmem:[%s4 + $0x1c] sm:$0xf]
      %v3481 = vld [vmem:[%s4 + $0x20] sm:$0xf]
      %v3482 = vld [vmem:[%s4 + $0x24] sm:$0xf]
      %v3483 = vld [vmem:[%s4 + $0x28] sm:$0xf]
      %v3484 = vld [vmem:[%s4 + $0x2c] sm:$0xf]
      %v3485 = vld [vmem:[%s4 + $0x30] sm:$0xf]
      %v3486 = vld [vmem:[%s4 + $0x34] sm:$0xf]
      %v3487 = vld [vmem:[%s4 + $0x38] sm:$0xf]
      %v3488 = vld [vmem:[%s4 + $0x3c] sm:$0xf]
      %v3489 = vld [vmem:[%s4 + $0x40] sm:$0xf]
      %v3490 = vld [vmem:[%s4 + $0x44] sm:$0xf]
      %v3491 = vld [vmem:[%s4 + $0x48] sm:$0xf]
      %v3492 = vld [vmem:[%s4 + $0x4c] sm:$0xf]
      %v3493 = vld [vmem:[%s4 + $0x50] sm:$0xf]
      %v3494 = vld [vmem:[%s4 + $0x54] sm:$0xf]
      %v3495 = vld [vmem:[%s4 + $0x58] sm:$0xf]
      %v3496 = vld [vmem:[%s4 + $0x5c] sm:$0xf]
      %v3497 = vld [vmem:[%s4 + $0x60] sm:$0xf]
      %v3498 = vld [vmem:[%s4 + $0x64] sm:$0xf]
      %v3499 = vld [vmem:[%s4 + $0x68] sm:$0xf]
      %v3500 = vld [vmem:[%s4 + $0x6c] sm:$0xf]
      %v3501 = vld [vmem:[%s4 + $0x70] sm:$0xf]
      %v3502 = vld [vmem:[%s4 + $0x74] sm:$0xf]
      %v3503 = vld [vmem:[%s4 + $0x78] sm:$0xf]
      %v3504 = vld [vmem:[%s4 + $0x7c] sm:$0xf]
      %v3505 = vld [vmem:[%s4 + $0x80] sm:$0xf]
      %v3506 = vld [vmem:[%s4 + $0x84] sm:$0xf]
      %v3507 = vld [vmem:[%s4 + $0x88] sm:$0xf]
      %v3508 = vld [vmem:[%s4 + $0x8c] sm:$0xf]
      %v3509 = vld [vmem:[%s4 + $0x90] sm:$0xf]
      %v3510 = vld [vmem:[%s4 + $0x94] sm:$0xf]
      %v3511 = vld [vmem:[%s4 + $0x98] sm:$0xf]
      %v3512 = vld [vmem:[%s4 + $0x9c] sm:$0xf]
      %v3513 = vld [vmem:[%s4 + $0xa0] sm:$0xf]
      %v3514 = vld [vmem:[%s4 + $0xa4] sm:$0xf]
      %v3515 = vld [vmem:[%s4 + $0xa8] sm:$0xf]
      %v3516 = vld [vmem:[%s4 + $0xac] sm:$0xf]
      %v3517 = vld [vmem:[%s4 + $0xb0] sm:$0xf]
      %v3518 = vld [vmem:[%s4 + $0xb4] sm:$0xf]
      %v3519 = vld [vmem:[%s4 + $0xb8] sm:$0xf]
      %v3520 = vld [vmem:[%s4 + $0xbc] sm:$0xf]
      %v3521 = vld [vmem:[%s4 + $0xc0] sm:$0xf]
      %v3522 = vld [vmem:[%s4 + $0xc4] sm:$0xf]
      %v3523 = vld [vmem:[%s4 + $0xc8] sm:$0xf]
      %v3524 = vld [vmem:[%s4 + $0xcc] sm:$0xf]
      %v3525 = vld [vmem:[%s4 + $0xd0] sm:$0xf]
      %v3526 = vld [vmem:[%s4 + $0xd4] sm:$0xf]
      %v3527 = vld [vmem:[%s4 + $0xd8] sm:$0xf]
      %v3528 = vld [vmem:[%s4 + $0xdc] sm:$0xf]
      %v3529 = vld [vmem:[%s4 + $0xe0] sm:$0xf]
      %v3530 = vld [vmem:[%s4 + $0xe4] sm:$0xf]
      %v3531 = vld [vmem:[%s4 + $0xe8] sm:$0xf]
      %v3532 = vld [vmem:[%s4 + $0xec] sm:$0xf]
      %v3533 = vld [vmem:[%s4 + $0xf0] sm:$0xf]
      %v3534 = vld [vmem:[%s4 + $0xf4] sm:$0xf]
      %v3535 = vld [vmem:[%s4 + $0xf8] sm:$0xf]
      %v3536 = vld [vmem:[%s4 + $0xfc] sm:$0xf]
      %v3537 = vld [vmem:[%s4 + $0x100] sm:$0xf]
      %v3538 = vld [vmem:[%s4 + $0x104] sm:$0xf]
      %v3539 = vld [vmem:[%s4 + $0x108] sm:$0xf]
      %v3540 = vld [vmem:[%s4 + $0x10c] sm:$0xf]
      %v3541 = vld [vmem:[%s4 + $0x110] sm:$0xf]
      %v3542 = vld [vmem:[%s4 + $0x114] sm:$0xf]
      %v3543 = vld [vmem:[%s4 + $0x118] sm:$0xf]
      %v3544 = vld [vmem:[%s4 + $0x11c] sm:$0xf]
      %v3617 = vunpack.c.l.b16 %v3473
      %v3618 = vunpack.c.l.b16 %v3474
      %v3619 = vunpack.c.l.b16 %v3475
      %v3620 = vunpack.c.l.b16 %v3476
      %v3621 = vunpack.c.l.b16 %v3477
      %v3622 = vunpack.c.l.b16 %v3478
      %v3623 = vunpack.c.l.b16 %v3479
      %v3624 = vunpack.c.l.b16 %v3480
      %v3625 = vunpack.c.l.b16 %v3481
      %v3626 = vunpack.c.l.b16 %v3482
      %v3627 = vunpack.c.l.b16 %v3483
      %v3628 = vunpack.c.l.b16 %v3484
      %v3629 = vunpack.c.l.b16 %v3485
      %v3630 = vunpack.c.l.b16 %v3486
      %v3631 = vunpack.c.l.b16 %v3487
      %v3632 = vunpack.c.l.b16 %v3488
      %v3633 = vunpack.c.l.b16 %v3489
      %v3634 = vunpack.c.l.b16 %v3490
      %v3635 = vunpack.c.l.b16 %v3491
      %v3636 = vunpack.c.l.b16 %v3492
      %v3637 = vunpack.c.l.b16 %v3493
      %v3638 = vunpack.c.l.b16 %v3494
      %v3639 = vunpack.c.l.b16 %v3495
      %v3640 = vunpack.c.l.b16 %v3496
      %v3641 = vunpack.c.l.b16 %v3497
      %v3642 = vunpack.c.l.b16 %v3498
      %v3643 = vunpack.c.l.b16 %v3499
      %v3644 = vunpack.c.l.b16 %v3500
      %v3645 = vunpack.c.l.b16 %v3501
      %v3646 = vunpack.c.l.b16 %v3502
      %v3647 = vunpack.c.l.b16 %v3503
      %v3648 = vunpack.c.l.b16 %v3504
      %v3649 = vunpack.c.l.b16 %v3505
      %v3650 = vunpack.c.l.b16 %v3506
      %v3651 = vunpack.c.l.b16 %v3507
      %v3652 = vunpack.c.l.b16 %v3508
      %v3653 = vunpack.c.l.b16 %v3509
      %v3654 = vunpack.c.l.b16 %v3510
      %v3655 = vunpack.c.l.b16 %v3511
      %v3656 = vunpack.c.l.b16 %v3512
      %v3657 = vunpack.c.l.b16 %v3513
      %v3658 = vunpack.c.l.b16 %v3514
      %v3659 = vunpack.c.l.b16 %v3515
      %v3660 = vunpack.c.l.b16 %v3516
      %v3661 = vunpack.c.l.b16 %v3517
      %v3662 = vunpack.c.l.b16 %v3518
      %v3663 = vunpack.c.l.b16 %v3519
      %v3664 = vunpack.c.l.b16 %v3520
      %v3665 = vunpack.c.l.b16 %v3521
      %v3666 = vunpack.c.l.b16 %v3522
      %v3667 = vunpack.c.l.b16 %v3523
      %v3668 = vunpack.c.l.b16 %v3524
      %v3669 = vunpack.c.l.b16 %v3525
      %v3670 = vunpack.c.l.b16 %v3526
      %v3671 = vunpack.c.l.b16 %v3527
      %v3672 = vunpack.c.l.b16 %v3528
      %v3673 = vunpack.c.l.b16 %v3529
      %v3674 = vunpack.c.l.b16 %v3530
      %v3675 = vunpack.c.l.b16 %v3531
      %v3676 = vunpack.c.l.b16 %v3532
      %v3677 = vunpack.c.l.b16 %v3533
      %v3678 = vunpack.c.l.b16 %v3534
      %v3679 = vunpack.c.l.b16 %v3535
      %v3680 = vunpack.c.l.b16 %v3536
      %v3681 = vunpack.c.l.b16 %v3537
      %v3682 = vunpack.c.l.b16 %v3538
      %v3683 = vunpack.c.l.b16 %v3539
      %v3684 = vunpack.c.l.b16 %v3540
      %v3685 = vunpack.c.l.b16 %v3541
      %v3686 = vunpack.c.l.b16 %v3542
      %v3687 = vunpack.c.l.b16 %v3543
      %v3688 = vunpack.c.l.b16 %v3544
      %v3689 = vpack.c.b16 %v3618, %v3617
      %v3690 = vpack.c.b16 %v3620, %v3619
      %v3691 = vpack.c.b16 %v3622, %v3621
      %v3692 = vpack.c.b16 %v3624, %v3623
      %v3693 = vpack.c.b16 %v3626, %v3625
      %v3694 = vpack.c.b16 %v3628, %v3627
      %v3695 = vpack.c.b16 %v3630, %v3629
      %v3696 = vpack.c.b16 %v3632, %v3631
      %v3697 = vpack.c.b16 %v3634, %v3633
      %v3698 = vpack.c.b16 %v3636, %v3635
      %v3699 = vpack.c.b16 %v3638, %v3637
      %v3700 = vpack.c.b16 %v3640, %v3639
      %v3701 = vpack.c.b16 %v3642, %v3641
      %v3702 = vpack.c.b16 %v3644, %v3643
      %v3703 = vpack.c.b16 %v3646, %v3645
      %v3704 = vpack.c.b16 %v3648, %v3647
      %v3705 = vpack.c.b16 %v3650, %v3649
      %v3706 = vpack.c.b16 %v3652, %v3651
      %v3707 = vpack.c.b16 %v3654, %v3653
      %v3708 = vpack.c.b16 %v3656, %v3655
      %v3709 = vpack.c.b16 %v3658, %v3657
      %v3710 = vpack.c.b16 %v3660, %v3659
      %v3711 = vpack.c.b16 %v3662, %v3661
      %v3712 = vpack.c.b16 %v3664, %v3663
      %v3713 = vpack.c.b16 %v3666, %v3665
      %v3714 = vpack.c.b16 %v3668, %v3667
      %v3715 = vpack.c.b16 %v3670, %v3669
      %v3716 = vpack.c.b16 %v3672, %v3671
      %v3717 = vpack.c.b16 %v3674, %v3673
      %v3718 = vpack.c.b16 %v3676, %v3675
      %v3719 = vpack.c.b16 %v3678, %v3677
      %v3720 = vpack.c.b16 %v3680, %v3679
      %v3721 = vpack.c.b16 %v3682, %v3681
      %v3722 = vpack.c.b16 %v3684, %v3683
      %v3723 = vpack.c.b16 %v3686, %v3685
      %v3724 = vpack.c.b16 %v3688, %v3687
      %v3761 = vsel %vm3345, %v3299, 0
      %v3763 = vsel %vm3345, %v3300, 0
      %v3765 = vsel %vm3345, %v3301, 0
      %v3767 = vsel %vm3345, %v3304, 0
      %v3769 = vsel %vm3345, %v3305, 0
      %v3772 = vsel %vm3345, %v3306, 0
      %v3774 = vsel %vm3345, %v3309, 0
      %v3777 = vsel %vm3345, %v3310, 0
      %v3780 = vsel %vm3345, %v3311, 0
      %3782 = vmatprep.subr.bf16.mxu0 0
      %3783 = vmatpush1.bf16.msra.mxu0 %v3696
      %3784 = vmatprep.subr.bf16.mxu0 0
      %3785 = vmatpush1.bf16.msra.mxu0 %v3695
      %3786 = vmatprep.subr.bf16.mxu0 0
      %3787 = vmatpush1.bf16.msra.mxu0 %v3694
      %3788 = vmatprep.subr.bf16.mxu0 0
      %3789 = vmatpush1.bf16.msra.mxu0 %v3693
      %3790 = vmatprep.subr.bf16.mxu0 0
      %3791 = vmatpush1.bf16.msra.mxu0 %v3692
      %3792 = vmatprep.subr.bf16.mxu0 0
      %3793 = vmatpush1.bf16.msra.mxu0 %v3691
      %3794 = vmatprep.subr.bf16.mxu0 0
      %3795 = vmatpush1.bf16.msra.mxu0 %v3690
      %3796 = vmatprep.subr.bf16.mxu0 0
      %3797 = vmatpush1.bf16.msra.mxu0 %v3689
      %3798 = vmatprep.subr.bf16.mxu0 0
      %3799 = vmatpush2.bf16.msra.mxu0 %v3704
      %3800 = vmatprep.subr.bf16.mxu0 0
      %3801 = vmatpush2.bf16.msra.mxu0 %v3703
      %3802 = vmatprep.subr.bf16.mxu0 0
      %3803 = vmatpush2.bf16.msra.mxu0 %v3702
      %3804 = vmatprep.subr.bf16.mxu0 0
      %3805 = vmatpush2.bf16.msra.mxu0 %v3701
      %3806 = vmatprep.subr.bf16.mxu0 0
      %3807 = vmatpush2.bf16.msra.mxu0 %v3700
      %3808 = vmatprep.subr.bf16.mxu0 0
      %3809 = vmatpush2.bf16.msra.mxu0 %v3699
      %3810 = vmatprep.subr.bf16.mxu0 0
      %3811 = vmatpush2.bf16.msra.mxu0 %v3698
      %3812 = vmatprep.subr.bf16.mxu0 0
      %3813 = vmatpush2.bf16.msra.mxu0 %v3697
      %3814 = vmatprep.mubr.bf16.mxu0 %v3359
      %3815 = vmatmul.mubr.bf16.gmra.mxu0 %v3348
      %v3816 = vpop.f32.mrf.mxu0
      %v3817 = vadd.f32 0.0, %v3816
      %v3818 = vpop.f32.mrf.mxu0
      %v3819 = vpop.f32.mrf.mxu0
      %v3820 = vadd.f32 0.0, %v3819
      %v3821 = vpop.f32.mrf.mxu0
      %3822 = vmatprep.mubr.bf16.mxu0 %v3363
      %3823 = vmatmul.mubr.bf16.gmra.mxu0 %v3352
      %v3824 = vpop.f32.mrf.mxu0
      %v3825 = vadd.f32 0.0, %v3824
      %v3826 = vpop.f32.mrf.mxu0
      %v3827 = vpop.f32.mrf.mxu0
      %v3828 = vadd.f32 0.0, %v3827
      %v3829 = vpop.f32.mrf.mxu0
      %3830 = vmatprep.mubr.bf16.mxu0 %v3367
      %3831 = vmatmul.mubr.bf16.gmra.mxu0 %v3356
      %v3832 = vpop.f32.mrf.mxu0
      %v3833 = vadd.f32 0.0, %v3832
      %v3834 = vpop.f32.mrf.mxu0
      %v3835 = vpop.f32.mrf.mxu0
      %v3836 = vadd.f32 0.0, %v3835
      %v3837 = vpop.f32.mrf.mxu0
      %3838 = vmatprep.mubr.bf16.mxu0 %v3411
      %3839 = vmatmul.mubr.bf16.gmra.mxu0 %v3408
      %v3840 = vpop.f32.mrf.mxu0
      %v3841 = vadd.f32 0.0, %v3840
      %v3842 = vpop.f32.mrf.mxu0
      %v3843 = vpop.f32.mrf.mxu0
      %v3844 = vadd.f32 0.0, %v3843
      %v3845 = vpop.f32.mrf.mxu0
      %3846 = vmatprep.mubr.bf16.mxu0 %v3413
      %3847 = vmatmul.mubr.bf16.gmra.mxu0 %v3370
      %v3848 = vpop.f32.mrf.mxu0
      %v3849 = vadd.f32 0.0, %v3848
      %v3850 = vpop.f32.mrf.mxu0
      %v3851 = vpop.f32.mrf.mxu0
      %v3852 = vadd.f32 0.0, %v3851
      %v3853 = vpop.f32.mrf.mxu0
      %3854 = vmatprep.mubr.bf16.mxu0 %v3416
      %3855 = vmatmul.mubr.bf16.gmra.mxu0 %v3374
      %v3856 = vpop.f32.mrf.mxu0
      %v3857 = vadd.f32 0.0, %v3856
      %v3858 = vpop.f32.mrf.mxu0
      %v3859 = vpop.f32.mrf.mxu0
      %v3860 = vadd.f32 0.0, %v3859
      %v3861 = vpop.f32.mrf.mxu0
      %3862 = vmatprep.mubr.bf16.mxu0 %v3450
      %3863 = vmatmul.mubr.bf16.gmra.mxu0 %v3382
      %v3864 = vpop.f32.mrf.mxu0
      %v3865 = vadd.f32 0.0, %v3864
      %v3866 = vpop.f32.mrf.mxu0
      %v3867 = vpop.f32.mrf.mxu0
      %v3868 = vadd.f32 0.0, %v3867
      %v3869 = vpop.f32.mrf.mxu0
      %3870 = vmatprep.mubr.bf16.mxu0 %v3452
      %3871 = vmatmul.mubr.bf16.gmra.mxu0 %v3386
      %v3872 = vpop.f32.mrf.mxu0
      %v3873 = vadd.f32 0.0, %v3872
      %v3874 = vpop.f32.mrf.mxu0
      %v3875 = vpop.f32.mrf.mxu0
      %v3876 = vadd.f32 0.0, %v3875
      %v3877 = vpop.f32.mrf.mxu0
      %3878 = vmatprep.mubr.bf16.mxu0 %v3455
      %3879 = vmatmul.mubr.bf16.gmra.mxu0 %v3390
      %v3880 = vpop.f32.mrf.mxu0
      %v3881 = vadd.f32 0.0, %v3880
      %v3882 = vpop.f32.mrf.mxu0
      %v3883 = vpop.f32.mrf.mxu0
      %v3884 = vadd.f32 0.0, %v3883
      %v3885 = vpop.f32.mrf.mxu0
      %3886 = vdwg.mxu0
      %3887 = vmatprep.subr.bf16.mxu0 0
      %3888 = vmatpush1.bf16.msra.mxu0 %v3712
      %3889 = vmatprep.subr.bf16.mxu0 0
      %3890 = vmatpush1.bf16.msra.mxu0 %v3711
      %3891 = vmatprep.subr.bf16.mxu0 0
      %3892 = vmatpush1.bf16.msra.mxu0 %v3710
      %3893 = vmatprep.subr.bf16.mxu0 0
      %3894 = vmatpush1.bf16.msra.mxu0 %v3709
      %3895 = vmatprep.subr.bf16.mxu0 0
      %3896 = vmatpush1.bf16.msra.mxu0 %v3708
      %3897 = vmatprep.subr.bf16.mxu0 0
      %3898 = vmatpush1.bf16.msra.mxu0 %v3707
      %3899 = vmatprep.subr.bf16.mxu0 0
      %3900 = vmatpush1.bf16.msra.mxu0 %v3706
      %3901 = vmatprep.subr.bf16.mxu0 0
      %3902 = vmatpush1.bf16.msra.mxu0 %v3705
      %3903 = vmatprep.subr.bf16.mxu0 0
      %3904 = vmatpush2.bf16.msra.mxu0 %v3720
      %3905 = vmatprep.subr.bf16.mxu0 0
      %3906 = vmatpush2.bf16.msra.mxu0 %v3719
      %3907 = vmatprep.subr.bf16.mxu0 0
      %3908 = vmatpush2.bf16.msra.mxu0 %v3718
      %3909 = vmatprep.subr.bf16.mxu0 0
      %3910 = vmatpush2.bf16.msra.mxu0 %v3717
      %3911 = vmatprep.subr.bf16.mxu0 0
      %3912 = vmatpush2.bf16.msra.mxu0 %v3716
      %3913 = vmatprep.subr.bf16.mxu0 0
      %3914 = vmatpush2.bf16.msra.mxu0 %v3715
      %3915 = vmatprep.subr.bf16.mxu0 0
      %3916 = vmatpush2.bf16.msra.mxu0 %v3714
      %3917 = vmatprep.subr.bf16.mxu0 0
      %3918 = vmatpush2.bf16.msra.mxu0 %v3713
      %3919 = vmatprep.mubr.bf16.mxu0 %v3382
      %3920 = vmatmul.mubr.bf16.gmra.mxu0 %v3370
      %v3921 = vpop.f32.mrf.mxu0
      %v3922 = vadd.f32 %v3817, %v3921
      %v3923 = vpop.f32.mrf.mxu0
      %v3924 = vpop.f32.mrf.mxu0
      %v3925 = vadd.f32 %v3820, %v3924
      %v3926 = vpop.f32.mrf.mxu0
      %3927 = vmatprep.mubr.bf16.mxu0 %v3386
      %3928 = vmatmul.mubr.bf16.gmra.mxu0 %v3374
      %v3929 = vpop.f32.mrf.mxu0
      %v3930 = vadd.f32 %v3825, %v3929
      %v3931 = vpop.f32.mrf.mxu0
      %v3932 = vpop.f32.mrf.mxu0
      %v3933 = vadd.f32 %v3828, %v3932
      %v3934 = vpop.f32.mrf.mxu0
      %3935 = vmatprep.mubr.bf16.mxu0 %v3390
      %3936 = vmatmul.mubr.bf16.gmra.mxu0 %v3378
      %v3937 = vpop.f32.mrf.mxu0
      %v3938 = vadd.f32 %v3833, %v3937
      %v3939 = vpop.f32.mrf.mxu0
      %v3940 = vpop.f32.mrf.mxu0
      %v3941 = vadd.f32 %v3836, %v3940
      %v3942 = vpop.f32.mrf.mxu0
      %3943 = vmatprep.mubr.bf16.mxu0 %v3424
      %3944 = vmatmul.mubr.bf16.gmra.mxu0 %v3386
      %v3945 = vpop.f32.mrf.mxu0
      %v3946 = vadd.f32 %v3841, %v3945
      %v3947 = vpop.f32.mrf.mxu0
      %v3948 = vpop.f32.mrf.mxu0
      %v3949 = vadd.f32 %v3844, %v3948
      %v3950 = vpop.f32.mrf.mxu0
      %3951 = vmatprep.mubr.bf16.mxu0 %v3428
      %3952 = vmatmul.mubr.bf16.gmra.mxu0 %v3390
      %v3953 = vpop.f32.mrf.mxu0
      %v3954 = vadd.f32 %v3849, %v3953
      %v3955 = vpop.f32.mrf.mxu0
      %v3956 = vpop.f32.mrf.mxu0
      %v3957 = vadd.f32 %v3852, %v3956
      %v3958 = vpop.f32.mrf.mxu0
      %3959 = vmatprep.mubr.bf16.mxu0 %v3432
      %3960 = vmatmul.mubr.bf16.gmra.mxu0 %v3420
      %v3961 = vpop.f32.mrf.mxu0
      %v3962 = vadd.f32 %v3857, %v3961
      %v3963 = vpop.f32.mrf.mxu0
      %v3964 = vpop.f32.mrf.mxu0
      %v3965 = vadd.f32 %v3860, %v3964
      %v3966 = vpop.f32.mrf.mxu0
      %3967 = vmatprep.mubr.bf16.mxu0 %v3463
      %3968 = vmatmul.mubr.bf16.gmra.mxu0 %v3428
      %v3969 = vpop.f32.mrf.mxu0
      %v3970 = vadd.f32 %v3865, %v3969
      %v3971 = vpop.f32.mrf.mxu0
      %v3972 = vpop.f32.mrf.mxu0
      %v3973 = vadd.f32 %v3868, %v3972
      %v3974 = vpop.f32.mrf.mxu0
      %3975 = vmatprep.mubr.bf16.mxu0 %v3467
      %3976 = vmatmul.mubr.bf16.gmra.mxu0 %v3432
      %v3977 = vpop.f32.mrf.mxu0
      %v3978 = vadd.f32 %v3873, %v3977
      %v3979 = vpop.f32.mrf.mxu0
      %v3980 = vpop.f32.mrf.mxu0
      %v3981 = vadd.f32 %v3876, %v3980
      %v3982 = vpop.f32.mrf.mxu0
      %3983 = vmatprep.mubr.bf16.mxu0 %v3471
      %3984 = vmatmul.mubr.bf16.gmra.mxu0 %v3459
      %v3985 = vpop.f32.mrf.mxu0
      %v3986 = vadd.f32 %v3881, %v3985
      %v3987 = vpop.f32.mrf.mxu0
      %v3988 = vpop.f32.mrf.mxu0
      %v3989 = vadd.f32 %v3884, %v3988
      %v3990 = vpop.f32.mrf.mxu0
      %3991 = vdwg.mxu0
      %3992 = vmatprep.subr.bf16.mxu0 0
      %3993 = vmatpush1.bf16.msra.mxu0 0
      %3994 = vmatprep.subr.bf16.mxu0 0
      %3995 = vmatpush1.bf16.msra.mxu0 0
      %3996 = vmatprep.subr.bf16.mxu0 0
      %3997 = vmatpush1.bf16.msra.mxu0 0
      %3998 = vmatprep.subr.bf16.mxu0 0
      %3999 = vmatpush1.bf16.msra.mxu0 0
      %4000 = vmatprep.subr.bf16.mxu0 0
      %4001 = vmatpush1.bf16.msra.mxu0 %v3724
      %4002 = vmatprep.subr.bf16.mxu0 0
      %4003 = vmatpush1.bf16.msra.mxu0 %v3723
      %4004 = vmatprep.subr.bf16.mxu0 0
      %4005 = vmatpush1.bf16.msra.mxu0 %v3722
      %4006 = vmatprep.subr.bf16.mxu0 0
      %4007 = vmatpush1.bf16.msra.mxu0 %v3721
      %4008 = vmatprep.subr.bf16.mxu0 0
      %4009 = vmatpush2.bf16.msra.mxu0 0
      %4010 = vmatprep.subr.bf16.mxu0 0
      %4011 = vmatpush2.bf16.msra.mxu0 0
      %4012 = vmatprep.subr.bf16.mxu0 0
      %4013 = vmatpush2.bf16.msra.mxu0 0
      %4014 = vmatprep.subr.bf16.mxu0 0
      %4015 = vmatpush2.bf16.msra.mxu0 0
      %4016 = vmatprep.subr.bf16.mxu0 0
      %4017 = vmatpush2.bf16.msra.mxu0 0
      %4018 = vmatprep.subr.bf16.mxu0 0
      %4019 = vmatpush2.bf16.msra.mxu0 0
      %4020 = vmatprep.subr.bf16.mxu0 0
      %4021 = vmatpush2.bf16.msra.mxu0 0
      %4022 = vmatprep.subr.bf16.mxu0 0
      %4023 = vmatpush2.bf16.msra.mxu0 0
      %4024 = vmatprep.mubr.bf16.mxu0 0
      %4025 = vmatmul.mubr.bf16.gmra.mxu0 %v3761
      %v4026 = vpop.f32.mrf.mxu0
      %v4027 = vadd.f32 %v3922, %v4026
      %v4028 = vpop.f32.mrf.mxu0
      %v4029 = vpop.f32.mrf.mxu0
      %v4030 = vadd.f32 %v3925, %v4029
      %v4031 = vpop.f32.mrf.mxu0
      %4032 = vmatprep.mubr.bf16.mxu0 0
      %4033 = vmatmul.mubr.bf16.gmra.mxu0 %v3763
      %v4034 = vpop.f32.mrf.mxu0
      %v4035 = vadd.f32 %v3930, %v4034
      %v4036 = vpop.f32.mrf.mxu0
      %v4037 = vpop.f32.mrf.mxu0
      %v4038 = vadd.f32 %v3933, %v4037
      %v4039 = vpop.f32.mrf.mxu0
      %4040 = vmatprep.mubr.bf16.mxu0 0
      %4041 = vmatmul.mubr.bf16.gmra.mxu0 %v3765
      %v4042 = vpop.f32.mrf.mxu0
      %v4043 = vadd.f32 %v3938, %v4042
      %v4044 = vpop.f32.mrf.mxu0
      %v4045 = vpop.f32.mrf.mxu0
      %v4046 = vadd.f32 %v3941, %v4045
      %v4047 = vpop.f32.mrf.mxu0
      %4048 = vmatprep.mubr.bf16.mxu0 0
      %4049 = vmatmul.mubr.bf16.gmra.mxu0 %v3767
      %v4050 = vpop.f32.mrf.mxu0
      %v4051 = vadd.f32 %v3946, %v4050
      %v4052 = vpop.f32.mrf.mxu0
      %v4053 = vpop.f32.mrf.mxu0
      %v4054 = vadd.f32 %v3949, %v4053
      %v4055 = vpop.f32.mrf.mxu0
      %4056 = vmatprep.mubr.bf16.mxu0 0
      %4057 = vmatmul.mubr.bf16.gmra.mxu0 %v3769
      %v4058 = vpop.f32.mrf.mxu0
      %v4059 = vadd.f32 %v3954, %v4058
      %v4060 = vpop.f32.mrf.mxu0
      %v4061 = vpop.f32.mrf.mxu0
      %v4062 = vadd.f32 %v3957, %v4061
      %v4063 = vpop.f32.mrf.mxu0
      %4064 = vmatprep.mubr.bf16.mxu0 0
      %4065 = vmatmul.mubr.bf16.gmra.mxu0 %v3772
      %v4066 = vpop.f32.mrf.mxu0
      %v4067 = vadd.f32 %v3962, %v4066
      %v4068 = vpop.f32.mrf.mxu0
      %v4069 = vpop.f32.mrf.mxu0
      %v4070 = vadd.f32 %v3965, %v4069
      %v4071 = vpop.f32.mrf.mxu0
      %4072 = vmatprep.mubr.bf16.mxu0 0
      %4073 = vmatmul.mubr.bf16.gmra.mxu0 %v3774
      %v4074 = vpop.f32.mrf.mxu0
      %v4075 = vadd.f32 %v3970, %v4074
      %v4076 = vpop.f32.mrf.mxu0
      %v4077 = vpop.f32.mrf.mxu0
      %v4078 = vadd.f32 %v3973, %v4077
      %v4079 = vpop.f32.mrf.mxu0
      %4080 = vmatprep.mubr.bf16.mxu0 0
      %4081 = vmatmul.mubr.bf16.gmra.mxu0 %v3777
      %v4082 = vpop.f32.mrf.mxu0
      %v4083 = vadd.f32 %v3978, %v4082
      %v4084 = vpop.f32.mrf.mxu0
      %v4085 = vpop.f32.mrf.mxu0
      %v4086 = vadd.f32 %v3981, %v4085
      %v4087 = vpop.f32.mrf.mxu0
      %4088 = vmatprep.mubr.bf16.mxu0 0
      %4089 = vmatmul.mubr.bf16.gmra.mxu0 %v3780
      %v4090 = vpop.f32.mrf.mxu0
      %v4091 = vadd.f32 %v3986, %v4090
      %v4092 = vpop.f32.mrf.mxu0
      %v4093 = vpop.f32.mrf.mxu0
      %v4094 = vadd.f32 %v3989, %v4093
      %v4095 = vpop.f32.mrf.mxu0
      %4096 = vdwg.mxu0
      %v4097 = vld [vmem:[%s7 + $0x1] sm:$0x1]
      %v4098 = vlaneseq
      %v4099 = vshrl.u32 %v4098, 7
      %v4100 = vsub.s32 0, %v4099
      %v4101 = vrot.slane %v4097, %v4100
      %v4102 = vmul.f32 %v4027, %v4101
      %v4103 = vmul.f32 %v4030, %v4101
      %v4104 = vmul.f32 %v4035, %v4101
      %v4105 = vmul.f32 %v4038, %v4101
      %v4106 = vmul.f32 %v4043, %v4101
      %v4107 = vmul.f32 %v4046, %v4101
      %v4108 = vmul.f32 %v4051, %v4101
      %v4109 = vmul.f32 %v4054, %v4101
      %v4110 = vmul.f32 %v4059, %v4101
      %v4111 = vmul.f32 %v4062, %v4101
      %v4112 = vmul.f32 %v4067, %v4101
      %v4113 = vmul.f32 %v4070, %v4101
      %v4114 = vmul.f32 %v4075, %v4101
      %v4115 = vmul.f32 %v4078, %v4101
      %v4116 = vmul.f32 %v4083, %v4101
      %v4117 = vmul.f32 %v4086, %v4101
      %v4118 = vmul.f32 %v4091, %v4101
      %v4119 = vmul.f32 %v4094, %v4101
      %v4120 = vld [vmem:[%s8 + $0x1] sm:$0x1]
      %v4121 = vlaneseq
      %v4122 = vshrl.u32 %v4121, 7
      %v4123 = vsub.s32 0, %v4122
      %v4124 = vrot.slane %v4120, %v4123
      %v4125 = vadd.f32 %v4102, %v4124
      %v4126 = vadd.f32 %v4103, %v4124
      %v4127 = vadd.f32 %v4104, %v4124
      %v4128 = vadd.f32 %v4105, %v4124
      %v4129 = vadd.f32 %v4106, %v4124
      %v4130 = vadd.f32 %v4107, %v4124
      %v4131 = vadd.f32 %v4108, %v4124
      %v4132 = vadd.f32 %v4109, %v4124
      %v4133 = vadd.f32 %v4110, %v4124
      %v4134 = vadd.f32 %v4111, %v4124
      %v4135 = vadd.f32 %v4112, %v4124
      %v4136 = vadd.f32 %v4113, %v4124
      %v4137 = vadd.f32 %v4114, %v4124
      %v4138 = vadd.f32 %v4115, %v4124
      %v4139 = vadd.f32 %v4116, %v4124
      %v4140 = vadd.f32 %v4117, %v4124
      %v4141 = vadd.f32 %v4118, %v4124
      %v4142 = vadd.f32 %v4119, %v4124
      %v4143 = vmax.f32 %v4125, 0.0
      %v4144 = vmax.f32 %v4126, 0.0
      %v4145 = vmax.f32 %v4127, 0.0
      %v4146 = vmax.f32 %v4128, 0.0
      %v4147 = vmax.f32 %v4129, 0.0
      %v4148 = vmax.f32 %v4130, 0.0
      %v4149 = vmax.f32 %v4131, 0.0
      %v4150 = vmax.f32 %v4132, 0.0
      %v4151 = vmax.f32 %v4133, 0.0
      %v4152 = vmax.f32 %v4134, 0.0
      %v4153 = vmax.f32 %v4135, 0.0
      %v4154 = vmax.f32 %v4136, 0.0
      %v4155 = vmax.f32 %v4137, 0.0
      %v4156 = vmax.f32 %v4138, 0.0
      %v4157 = vmax.f32 %v4139, 0.0
      %v4158 = vmax.f32 %v4140, 0.0
      %v4159 = vmax.f32 %v4141, 0.0
      %v4160 = vmax.f32 %v4142, 0.0
      %v4161 = vpack.c.bf16 %v4144, %v4143
      %v4162 = vpack.c.bf16 %v4146, %v4145
      %v4163 = vpack.c.bf16 %v4148, %v4147
      %v4164 = vpack.c.bf16 %v4150, %v4149
      %v4165 = vpack.c.bf16 %v4152, %v4151
      %v4166 = vpack.c.bf16 %v4154, %v4153
      %v4167 = vpack.c.bf16 %v4156, %v4155
      %v4168 = vpack.c.bf16 %v4158, %v4157
      %v4169 = vpack.c.bf16 %v4160, %v4159
      %4171 = vrot.lane.b32.xlu0 %v4162, 64
      %v4172 = vpop.permute.xlu0 %4171
      %4174 = vrot.lane.b32.xlu0 %v4164, 64
      %v4175 = vpop.permute.xlu0 %4174
      %4177 = vrot.lane.b32.xlu0 %v4166, 64
      %v4178 = vpop.permute.xlu0 %4177
      %4180 = vrot.lane.b32.xlu0 %v4168, 64
      %v4181 = vpop.permute.xlu0 %4180
      %v4184 = vsel %vm3345, %v4161, %v4172
      %v4188 = vsel %vm3345, %v4163, %v4175
      %v4192 = vsel %vm3345, %v4165, %v4178
      %v4196 = vsel %vm3345, %v4167, %v4181
      %v4198 = vld [vmem:[%s5] sm:$0xf]
      %v4199 = vld [vmem:[%s5 + $0x4] sm:$0xf]
      %v4200 = vld [vmem:[%s5 + $0x8] sm:$0xf]
      %v4201 = vld [vmem:[%s5 + $0xc] sm:$0xf]
      %v4202 = vld [vmem:[%s5 + $0x10] sm:$0xf]
      %v4203 = vld [vmem:[%s5 + $0x14] sm:$0xf]
      %v4204 = vld [vmem:[%s5 + $0x18] sm:$0xf]
      %v4205 = vld [vmem:[%s5 + $0x1c] sm:$0xf]
      %v4206 = vld [vmem:[%s5 + $0x20] sm:$0xf]
      %v4207 = vld [vmem:[%s5 + $0x24] sm:$0xf]
      %v4208 = vld [vmem:[%s5 + $0x28] sm:$0xf]
      %v4209 = vld [vmem:[%s5 + $0x2c] sm:$0xf]
      %v4210 = vld [vmem:[%s5 + $0x30] sm:$0xf]
      %v4211 = vld [vmem:[%s5 + $0x34] sm:$0xf]
      %v4212 = vld [vmem:[%s5 + $0x38] sm:$0xf]
      %v4213 = vld [vmem:[%s5 + $0x3c] sm:$0xf]
      %v4214 = vld [vmem:[%s5 + $0x40] sm:$0xf]
      %v4215 = vld [vmem:[%s5 + $0x44] sm:$0xf]
      %v4216 = vld [vmem:[%s5 + $0x48] sm:$0xf]
      %v4217 = vld [vmem:[%s5 + $0x4c] sm:$0xf]
      %v4218 = vld [vmem:[%s5 + $0x50] sm:$0xf]
      %v4219 = vld [vmem:[%s5 + $0x54] sm:$0xf]
      %v4220 = vld [vmem:[%s5 + $0x58] sm:$0xf]
      %v4221 = vld [vmem:[%s5 + $0x5c] sm:$0xf]
      %v4222 = vld [vmem:[%s5 + $0x60] sm:$0xf]
      %v4223 = vld [vmem:[%s5 + $0x64] sm:$0xf]
      %v4224 = vld [vmem:[%s5 + $0x68] sm:$0xf]
      %v4225 = vld [vmem:[%s5 + $0x6c] sm:$0xf]
      %v4226 = vld [vmem:[%s5 + $0x70] sm:$0xf]
      %v4227 = vld [vmem:[%s5 + $0x74] sm:$0xf]
      %v4228 = vld [vmem:[%s5 + $0x78] sm:$0xf]
      %v4229 = vld [vmem:[%s5 + $0x7c] sm:$0xf]
      %v4230 = vld [vmem:[%s5 + $0x80] sm:$0xf]
      %v4231 = vld [vmem:[%s5 + $0x84] sm:$0xf]
      %v4232 = vld [vmem:[%s5 + $0x88] sm:$0xf]
      %v4233 = vld [vmem:[%s5 + $0x8c] sm:$0xf]
      %v4234 = vld [vmem:[%s5 + $0x90] sm:$0xf]
      %v4235 = vld [vmem:[%s5 + $0x94] sm:$0xf]
      %v4236 = vld [vmem:[%s5 + $0x98] sm:$0xf]
      %v4237 = vld [vmem:[%s5 + $0x9c] sm:$0xf]
      %v4238 = vld [vmem:[%s5 + $0xa0] sm:$0xf]
      %v4239 = vld [vmem:[%s5 + $0xa4] sm:$0xf]
      %v4240 = vld [vmem:[%s5 + $0xa8] sm:$0xf]
      %v4241 = vld [vmem:[%s5 + $0xac] sm:$0xf]
      %v4242 = vld [vmem:[%s5 + $0xb0] sm:$0xf]
      %v4243 = vld [vmem:[%s5 + $0xb4] sm:$0xf]
      %v4244 = vld [vmem:[%s5 + $0xb8] sm:$0xf]
      %v4245 = vld [vmem:[%s5 + $0xbc] sm:$0xf]
      %v4246 = vld [vmem:[%s5 + $0xc0] sm:$0xf]
      %v4247 = vld [vmem:[%s5 + $0xc4] sm:$0xf]
      %v4248 = vld [vmem:[%s5 + $0xc8] sm:$0xf]
      %v4249 = vld [vmem:[%s5 + $0xcc] sm:$0xf]
      %v4250 = vld [vmem:[%s5 + $0xd0] sm:$0xf]
      %v4251 = vld [vmem:[%s5 + $0xd4] sm:$0xf]
      %v4252 = vld [vmem:[%s5 + $0xd8] sm:$0xf]
      %v4253 = vld [vmem:[%s5 + $0xdc] sm:$0xf]
      %v4254 = vld [vmem:[%s5 + $0xe0] sm:$0xf]
      %v4255 = vld [vmem:[%s5 + $0xe4] sm:$0xf]
      %v4256 = vld [vmem:[%s5 + $0xe8] sm:$0xf]
      %v4257 = vld [vmem:[%s5 + $0xec] sm:$0xf]
      %v4258 = vld [vmem:[%s5 + $0xf0] sm:$0xf]
      %v4259 = vld [vmem:[%s5 + $0xf4] sm:$0xf]
      %v4260 = vld [vmem:[%s5 + $0xf8] sm:$0xf]
      %v4261 = vld [vmem:[%s5 + $0xfc] sm:$0xf]
      %v4262 = vld [vmem:[%s5 + $0x100] sm:$0xf]
      %v4263 = vld [vmem:[%s5 + $0x104] sm:$0xf]
      %v4264 = vld [vmem:[%s5 + $0x108] sm:$0xf]
      %v4265 = vld [vmem:[%s5 + $0x10c] sm:$0xf]
      %v4266 = vld [vmem:[%s5 + $0x110] sm:$0xf]
      %v4267 = vld [vmem:[%s5 + $0x114] sm:$0xf]
      %v4268 = vld [vmem:[%s5 + $0x118] sm:$0xf]
      %v4269 = vld [vmem:[%s5 + $0x11c] sm:$0xf]
      %v4342 = vunpack.c.l.b16 %v4198
      %v4343 = vunpack.c.l.b16 %v4199
      %v4344 = vunpack.c.l.b16 %v4200
      %v4345 = vunpack.c.l.b16 %v4201
      %v4346 = vunpack.c.l.b16 %v4202
      %v4347 = vunpack.c.l.b16 %v4203
      %v4348 = vunpack.c.l.b16 %v4204
      %v4349 = vunpack.c.l.b16 %v4205
      %v4350 = vunpack.c.l.b16 %v4206
      %v4351 = vunpack.c.l.b16 %v4207
      %v4352 = vunpack.c.l.b16 %v4208
      %v4353 = vunpack.c.l.b16 %v4209
      %v4354 = vunpack.c.l.b16 %v4210
      %v4355 = vunpack.c.l.b16 %v4211
      %v4356 = vunpack.c.l.b16 %v4212
      %v4357 = vunpack.c.l.b16 %v4213
      %v4358 = vunpack.c.l.b16 %v4214
      %v4359 = vunpack.c.l.b16 %v4215
      %v4360 = vunpack.c.l.b16 %v4216
      %v4361 = vunpack.c.l.b16 %v4217
      %v4362 = vunpack.c.l.b16 %v4218
      %v4363 = vunpack.c.l.b16 %v4219
      %v4364 = vunpack.c.l.b16 %v4220
      %v4365 = vunpack.c.l.b16 %v4221
      %v4366 = vunpack.c.l.b16 %v4222
      %v4367 = vunpack.c.l.b16 %v4223
      %v4368 = vunpack.c.l.b16 %v4224
      %v4369 = vunpack.c.l.b16 %v4225
      %v4370 = vunpack.c.l.b16 %v4226
      %v4371 = vunpack.c.l.b16 %v4227
      %v4372 = vunpack.c.l.b16 %v4228
      %v4373 = vunpack.c.l.b16 %v4229
      %v4374 = vunpack.c.l.b16 %v4230
      %v4375 = vunpack.c.l.b16 %v4231
      %v4376 = vunpack.c.l.b16 %v4232
      %v4377 = vunpack.c.l.b16 %v4233
      %v4378 = vunpack.c.l.b16 %v4234
      %v4379 = vunpack.c.l.b16 %v4235
      %v4380 = vunpack.c.l.b16 %v4236
      %v4381 = vunpack.c.l.b16 %v4237
      %v4382 = vunpack.c.l.b16 %v4238
      %v4383 = vunpack.c.l.b16 %v4239
      %v4384 = vunpack.c.l.b16 %v4240
      %v4385 = vunpack.c.l.b16 %v4241
      %v4386 = vunpack.c.l.b16 %v4242
      %v4387 = vunpack.c.l.b16 %v4243
      %v4388 = vunpack.c.l.b16 %v4244
      %v4389 = vunpack.c.l.b16 %v4245
      %v4390 = vunpack.c.l.b16 %v4246
      %v4391 = vunpack.c.l.b16 %v4247
      %v4392 = vunpack.c.l.b16 %v4248
      %v4393 = vunpack.c.l.b16 %v4249
      %v4394 = vunpack.c.l.b16 %v4250
      %v4395 = vunpack.c.l.b16 %v4251
      %v4396 = vunpack.c.l.b16 %v4252
      %v4397 = vunpack.c.l.b16 %v4253
      %v4398 = vunpack.c.l.b16 %v4254
      %v4399 = vunpack.c.l.b16 %v4255
      %v4400 = vunpack.c.l.b16 %v4256
      %v4401 = vunpack.c.l.b16 %v4257
      %v4402 = vunpack.c.l.b16 %v4258
      %v4403 = vunpack.c.l.b16 %v4259
      %v4404 = vunpack.c.l.b16 %v4260
      %v4405 = vunpack.c.l.b16 %v4261
      %v4406 = vunpack.c.l.b16 %v4262
      %v4407 = vunpack.c.l.b16 %v4263
      %v4408 = vunpack.c.l.b16 %v4264
      %v4409 = vunpack.c.l.b16 %v4265
      %v4410 = vunpack.c.l.b16 %v4266
      %v4411 = vunpack.c.l.b16 %v4267
      %v4412 = vunpack.c.l.b16 %v4268
      %v4413 = vunpack.c.l.b16 %v4269
      %v4414 = vpack.c.b16 %v4343, %v4342
      %v4415 = vpack.c.b16 %v4345, %v4344
      %v4416 = vpack.c.b16 %v4347, %v4346
      %v4417 = vpack.c.b16 %v4349, %v4348
      %v4418 = vpack.c.b16 %v4351, %v4350
      %v4419 = vpack.c.b16 %v4353, %v4352
      %v4420 = vpack.c.b16 %v4355, %v4354
      %v4421 = vpack.c.b16 %v4357, %v4356
      %v4422 = vpack.c.b16 %v4359, %v4358
      %v4423 = vpack.c.b16 %v4361, %v4360
      %v4424 = vpack.c.b16 %v4363, %v4362
      %v4425 = vpack.c.b16 %v4365, %v4364
      %v4426 = vpack.c.b16 %v4367, %v4366
      %v4427 = vpack.c.b16 %v4369, %v4368
      %v4428 = vpack.c.b16 %v4371, %v4370
      %v4429 = vpack.c.b16 %v4373, %v4372
      %v4430 = vpack.c.b16 %v4375, %v4374
      %v4431 = vpack.c.b16 %v4377, %v4376
      %v4432 = vpack.c.b16 %v4379, %v4378
      %v4433 = vpack.c.b16 %v4381, %v4380
      %v4434 = vpack.c.b16 %v4383, %v4382
      %v4435 = vpack.c.b16 %v4385, %v4384
      %v4436 = vpack.c.b16 %v4387, %v4386
      %v4437 = vpack.c.b16 %v4389, %v4388
      %v4438 = vpack.c.b16 %v4391, %v4390
      %v4439 = vpack.c.b16 %v4393, %v4392
      %v4440 = vpack.c.b16 %v4395, %v4394
      %v4441 = vpack.c.b16 %v4397, %v4396
      %v4442 = vpack.c.b16 %v4399, %v4398
      %v4443 = vpack.c.b16 %v4401, %v4400
      %v4444 = vpack.c.b16 %v4403, %v4402
      %v4445 = vpack.c.b16 %v4405, %v4404
      %v4446 = vpack.c.b16 %v4407, %v4406
      %v4447 = vpack.c.b16 %v4409, %v4408
      %v4448 = vpack.c.b16 %v4411, %v4410
      %v4449 = vpack.c.b16 %v4413, %v4412
      %v4487 = vsel %vm3345, %v4169, 0
      %4489 = vmatprep.subr.bf16.mxu0 0
      %4490 = vmatpush1.bf16.msra.mxu0 %v4421
      %4491 = vmatprep.subr.bf16.mxu0 0
      %4492 = vmatpush1.bf16.msra.mxu0 %v4420
      %4493 = vmatprep.subr.bf16.mxu0 0
      %4494 = vmatpush1.bf16.msra.mxu0 %v4419
      %4495 = vmatprep.subr.bf16.mxu0 0
      %4496 = vmatpush1.bf16.msra.mxu0 %v4418
      %4497 = vmatprep.subr.bf16.mxu0 0
      %4498 = vmatpush1.bf16.msra.mxu0 %v4417
      %4499 = vmatprep.subr.bf16.mxu0 0
      %4500 = vmatpush1.bf16.msra.mxu0 %v4416
      %4501 = vmatprep.subr.bf16.mxu0 0
      %4502 = vmatpush1.bf16.msra.mxu0 %v4415
      %4503 = vmatprep.subr.bf16.mxu0 0
      %4504 = vmatpush1.bf16.msra.mxu0 %v4414
      %4505 = vmatprep.subr.bf16.mxu0 0
      %4506 = vmatpush2.bf16.msra.mxu0 %v4429
      %4507 = vmatprep.subr.bf16.mxu0 0
      %4508 = vmatpush2.bf16.msra.mxu0 %v4428
      %4509 = vmatprep.subr.bf16.mxu0 0
      %4510 = vmatpush2.bf16.msra.mxu0 %v4427
      %4511 = vmatprep.subr.bf16.mxu0 0
      %4512 = vmatpush2.bf16.msra.mxu0 %v4426
      %4513 = vmatprep.subr.bf16.mxu0 0
      %4514 = vmatpush2.bf16.msra.mxu0 %v4425
      %4515 = vmatprep.subr.bf16.mxu0 0
      %4516 = vmatpush2.bf16.msra.mxu0 %v4424
      %4517 = vmatprep.subr.bf16.mxu0 0
      %4518 = vmatpush2.bf16.msra.mxu0 %v4423
      %4519 = vmatprep.subr.bf16.mxu0 0
      %4520 = vmatpush2.bf16.msra.mxu0 %v4422
      %4521 = vmatprep.mubr.bf16.mxu0 %v4188
      %4522 = vmatmul.mubr.bf16.gmra.mxu0 %v4184
      %v4523 = vpop.f32.mrf.mxu0
      %v4524 = vadd.f32 0.0, %v4523
      %v4525 = vpop.f32.mrf.mxu0
      %v4526 = vpop.f32.mrf.mxu0
      %v4527 = vadd.f32 0.0, %v4526
      %v4528 = vpop.f32.mrf.mxu0
      %4529 = vdwg.mxu0
      %4530 = vmatprep.subr.bf16.mxu0 0
      %4531 = vmatpush1.bf16.msra.mxu0 %v4437
      %4532 = vmatprep.subr.bf16.mxu0 0
      %4533 = vmatpush1.bf16.msra.mxu0 %v4436
      %4534 = vmatprep.subr.bf16.mxu0 0
      %4535 = vmatpush1.bf16.msra.mxu0 %v4435
      %4536 = vmatprep.subr.bf16.mxu0 0
      %4537 = vmatpush1.bf16.msra.mxu0 %v4434
      %4538 = vmatprep.subr.bf16.mxu0 0
      %4539 = vmatpush1.bf16.msra.mxu0 %v4433
      %4540 = vmatprep.subr.bf16.mxu0 0
      %4541 = vmatpush1.bf16.msra.mxu0 %v4432
      %4542 = vmatprep.subr.bf16.mxu0 0
      %4543 = vmatpush1.bf16.msra.mxu0 %v4431
      %4544 = vmatprep.subr.bf16.mxu0 0
      %4545 = vmatpush1.bf16.msra.mxu0 %v4430
      %4546 = vmatprep.subr.bf16.mxu0 0
      %4547 = vmatpush2.bf16.msra.mxu0 %v4445
      %4548 = vmatprep.subr.bf16.mxu0 0
      %4549 = vmatpush2.bf16.msra.mxu0 %v4444
      %4550 = vmatprep.subr.bf16.mxu0 0
      %4551 = vmatpush2.bf16.msra.mxu0 %v4443
      %4552 = vmatprep.subr.bf16.mxu0 0
      %4553 = vmatpush2.bf16.msra.mxu0 %v4442
      %4554 = vmatprep.subr.bf16.mxu0 0
      %4555 = vmatpush2.bf16.msra.mxu0 %v4441
      %4556 = vmatprep.subr.bf16.mxu0 0
      %4557 = vmatpush2.bf16.msra.mxu0 %v4440
      %4558 = vmatprep.subr.bf16.mxu0 0
      %4559 = vmatpush2.bf16.msra.mxu0 %v4439
      %4560 = vmatprep.subr.bf16.mxu0 0
      %4561 = vmatpush2.bf16.msra.mxu0 %v4438
      %4562 = vmatprep.mubr.bf16.mxu0 %v4196
      %4563 = vmatmul.mubr.bf16.gmra.mxu0 %v4192
      %v4564 = vpop.f32.mrf.mxu0
      %v4565 = vadd.f32 %v4524, %v4564
      %v4566 = vpop.f32.mrf.mxu0
      %v4567 = vpop.f32.mrf.mxu0
      %v4568 = vadd.f32 %v4527, %v4567
      %v4569 = vpop.f32.mrf.mxu0
      %4570 = vdwg.mxu0
      %4571 = vmatprep.subr.bf16.mxu0 0
      %4572 = vmatpush1.bf16.msra.mxu0 0
      %4573 = vmatprep.subr.bf16.mxu0 0
      %4574 = vmatpush1.bf16.msra.mxu0 0
      %4575 = vmatprep.subr.bf16.mxu0 0
      %4576 = vmatpush1.bf16.msra.mxu0 0
      %4577 = vmatprep.subr.bf16.mxu0 0
      %4578 = vmatpush1.bf16.msra.mxu0 0
      %4579 = vmatprep.subr.bf16.mxu0 0
      %4580 = vmatpush1.bf16.msra.mxu0 %v4449
      %4581 = vmatprep.subr.bf16.mxu0 0
      %4582 = vmatpush1.bf16.msra.mxu0 %v4448
      %4583 = vmatprep.subr.bf16.mxu0 0
      %4584 = vmatpush1.bf16.msra.mxu0 %v4447
      %4585 = vmatprep.subr.bf16.mxu0 0
      %4586 = vmatpush1.bf16.msra.mxu0 %v4446
      %4587 = vmatprep.subr.bf16.mxu0 0
      %4588 = vmatpush2.bf16.msra.mxu0 0
      %4589 = vmatprep.subr.bf16.mxu0 0
      %4590 = vmatpush2.bf16.msra.mxu0 0
      %4591 = vmatprep.subr.bf16.mxu0 0
      %4592 = vmatpush2.bf16.msra.mxu0 0
      %4593 = vmatprep.subr.bf16.mxu0 0
      %4594 = vmatpush2.bf16.msra.mxu0 0
      %4595 = vmatprep.subr.bf16.mxu0 0
      %4596 = vmatpush2.bf16.msra.mxu0 0
      %4597 = vmatprep.subr.bf16.mxu0 0
      %4598 = vmatpush2.bf16.msra.mxu0 0
      %4599 = vmatprep.subr.bf16.mxu0 0
      %4600 = vmatpush2.bf16.msra.mxu0 0
      %4601 = vmatprep.subr.bf16.mxu0 0
      %4602 = vmatpush2.bf16.msra.mxu0 0
      %4603 = vmatprep.mubr.bf16.mxu0 0
      %4604 = vmatmul.mubr.bf16.gmra.mxu0 %v4487
      %v4605 = vpop.f32.mrf.mxu0
      %v4606 = vadd.f32 %v4565, %v4605
      %v4607 = vpop.f32.mrf.mxu0
      %v4608 = vpop.f32.mrf.mxu0
      %v4609 = vadd.f32 %v4568, %v4608
      %v4610 = vpop.f32.mrf.mxu0
      %4611 = vdwg.mxu0
      %v4612 = vld [vmem:[%s7 + $0x2] sm:$0x1]
      %v4613 = vlaneseq
      %v4614 = vshrl.u32 %v4613, 7
      %v4615 = vsub.s32 0, %v4614
      %v4616 = vrot.slane %v4612, %v4615
      %v4617 = vmul.f32 %v4606, %v4616
      %v4618 = vmul.f32 %v4609, %v4616
      %v4619 = vld [vmem:[%s8 + $0x2] sm:$0x1]
      %v4620 = vlaneseq
      %v4621 = vshrl.u32 %v4620, 7
      %v4622 = vsub.s32 0, %v4621
      %v4623 = vrot.slane %v4619, %v4622
      %v4624 = vadd.f32 %v4617, %v4623
      %v4625 = vadd.f32 %v4618, %v4623
      %v4626 = vmax.f32 %v4624, 0.0
      %v4627 = vmax.f32 %v4625, 0.0
      %v4628 = vpack.c.bf16 %v4627, %v4626
      %v4629 = vld [vmem:[%s6] sm:$0xff]
      %v4630 = vld [vmem:[%s6 + $0x8] sm:$0xff]
      %v4631 = vld [vmem:[%s6 + $0x10] sm:$0xf]
      %v4632 = vld [vmem:[%s6 + $0x14] sm:$0xff]
      %v4633 = vld [vmem:[%s6 + $0x1c] sm:$0xff]
      %v4634 = vld [vmem:[%s6 + $0x24] sm:$0xf]
      %v4635 = vld [vmem:[%s6 + $0x28] sm:$0xff]
      %v4636 = vld [vmem:[%s6 + $0x30] sm:$0xff]
      %v4637 = vld [vmem:[%s6 + $0x38] sm:$0xf]
      %v4638 = vld [vmem:[%s6 + $0x3c] sm:$0xff]
      %v4639 = vld [vmem:[%s6 + $0x44] sm:$0xff]
      %v4640 = vld [vmem:[%s6 + $0x4c] sm:$0xf]
      %v4641 = vld [vmem:[%s6 + $0x50] sm:$0xff]
      %v4642 = vld [vmem:[%s6 + $0x58] sm:$0xff]
      %v4643 = vld [vmem:[%s6 + $0x60] sm:$0xf]
      %v4644 = vld [vmem:[%s6 + $0x64] sm:$0xff]
      %v4645 = vld [vmem:[%s6 + $0x6c] sm:$0xff]
      %v4646 = vld [vmem:[%s6 + $0x74] sm:$0xf]
      %v4647 = vld [vmem:[%s6 + $0x78] sm:$0xff]
      %v4648 = vld [vmem:[%s6 + $0x80] sm:$0xff]
      %v4649 = vld [vmem:[%s6 + $0x88] sm:$0xf]
      %v4650 = vld [vmem:[%s6 + $0x8c] sm:$0xff]
      %v4651 = vld [vmem:[%s6 + $0x94] sm:$0xff]
      %v4652 = vld [vmem:[%s6 + $0x9c] sm:$0xf]
      %v4677 = vunpack.c.l.b16 %v4629
      %v4678 = vunpack.c.h.b16 %v4629
      %v4679 = vunpack.c.l.b16 %v4630
      %v4680 = vunpack.c.h.b16 %v4630
      %v4681 = vunpack.c.l.b16 %v4631
      %v4682 = vunpack.c.l.b16 %v4632
      %v4683 = vunpack.c.h.b16 %v4632
      %v4684 = vunpack.c.l.b16 %v4633
      %v4685 = vunpack.c.h.b16 %v4633
      %v4686 = vunpack.c.l.b16 %v4634
      %v4687 = vunpack.c.l.b16 %v4635
      %v4688 = vunpack.c.h.b16 %v4635
      %v4689 = vunpack.c.l.b16 %v4636
      %v4690 = vunpack.c.h.b16 %v4636
      %v4691 = vunpack.c.l.b16 %v4637
      %v4692 = vunpack.c.l.b16 %v4638
      %v4693 = vunpack.c.h.b16 %v4638
      %v4694 = vunpack.c.l.b16 %v4639
      %v4695 = vunpack.c.h.b16 %v4639
      %v4696 = vunpack.c.l.b16 %v4640
      %v4697 = vunpack.c.l.b16 %v4641
      %v4698 = vunpack.c.h.b16 %v4641
      %v4699 = vunpack.c.l.b16 %v4642
      %v4700 = vunpack.c.h.b16 %v4642
      %v4701 = vunpack.c.l.b16 %v4643
      %v4702 = vunpack.c.l.b16 %v4644
      %v4703 = vunpack.c.h.b16 %v4644
      %v4704 = vunpack.c.l.b16 %v4645
      %v4705 = vunpack.c.h.b16 %v4645
      %v4706 = vunpack.c.l.b16 %v4646
      %v4707 = vunpack.c.l.b16 %v4647
      %v4708 = vunpack.c.h.b16 %v4647
      %v4709 = vunpack.c.l.b16 %v4648
      %v4710 = vunpack.c.h.b16 %v4648
      %v4711 = vunpack.c.l.b16 %v4649
      %v4712 = vunpack.c.l.b16 %v4650
      %v4713 = vunpack.c.h.b16 %v4650
      %v4714 = vunpack.c.l.b16 %v4651
      %v4715 = vunpack.c.h.b16 %v4651
      %v4716 = vunpack.c.l.b16 %v4652
      %v4717 = vpack.c.b16 %v4682, %v4677
      %v4718 = vpack.c.b16 %v4683, %v4678
      %v4719 = vpack.c.b16 %v4684, %v4679
      %v4720 = vpack.c.b16 %v4685, %v4680
      %v4721 = vpack.c.b16 %v4686, %v4681
      %v4722 = vpack.c.b16 %v4692, %v4687
      %v4723 = vpack.c.b16 %v4693, %v4688
      %v4724 = vpack.c.b16 %v4694, %v4689
      %v4725 = vpack.c.b16 %v4695, %v4690
      %v4726 = vpack.c.b16 %v4696, %v4691
      %v4727 = vpack.c.b16 %v4702, %v4697
      %v4728 = vpack.c.b16 %v4703, %v4698
      %v4729 = vpack.c.b16 %v4704, %v4699
      %v4730 = vpack.c.b16 %v4705, %v4700
      %v4731 = vpack.c.b16 %v4706, %v4701
      %v4732 = vpack.c.b16 %v4712, %v4707
      %v4733 = vpack.c.b16 %v4713, %v4708
      %v4734 = vpack.c.b16 %v4714, %v4709
      %v4735 = vpack.c.b16 %v4715, %v4710
      %v4736 = vpack.c.b16 %v4716, %v4711
      %v4758 = vsel %vm3345, %v4628, 0
      %4760 = vmatprep.subr.bf16.mxu0 0
      %4761 = vmatpush1.bf16.msra.mxu0 0
      %4762 = vmatprep.subr.bf16.mxu0 0
      %4763 = vmatpush1.bf16.msra.mxu0 0
      %4764 = vmatprep.subr.bf16.mxu0 0
      %4765 = vmatpush1.bf16.msra.mxu0 0
      %4766 = vmatprep.subr.bf16.mxu0 0
      %4767 = vmatpush1.bf16.msra.mxu0 0
      %4768 = vmatprep.subr.bf16.mxu0 %v4733
      %4769 = vmatpush1.bf16.msra.mxu0 %v4732
      %4770 = vmatprep.subr.bf16.mxu0 %v4728
      %4771 = vmatpush1.bf16.msra.mxu0 %v4727
      %4772 = vmatprep.subr.bf16.mxu0 %v4723
      %4773 = vmatpush1.bf16.msra.mxu0 %v4722
      %4774 = vmatprep.subr.bf16.mxu0 %v4718
      %4775 = vmatpush1.bf16.msra.mxu0 %v4717
      %4776 = vmatprep.subr.bf16.mxu0 0
      %4777 = vmatpush2.bf16.msra.mxu0 0
      %4778 = vmatprep.subr.bf16.mxu0 0
      %4779 = vmatpush2.bf16.msra.mxu0 0
      %4780 = vmatprep.subr.bf16.mxu0 0
      %4781 = vmatpush2.bf16.msra.mxu0 0
      %4782 = vmatprep.subr.bf16.mxu0 0
      %4783 = vmatpush2.bf16.msra.mxu0 0
      %4784 = vmatprep.subr.bf16.mxu0 0
      %4785 = vmatpush2.bf16.msra.mxu0 0
      %4786 = vmatprep.subr.bf16.mxu0 0
      %4787 = vmatpush2.bf16.msra.mxu0 0
      %4788 = vmatprep.subr.bf16.mxu0 0
      %4789 = vmatpush2.bf16.msra.mxu0 0
      %4790 = vmatprep.subr.bf16.mxu0 0
      %4791 = vmatpush2.bf16.msra.mxu0 0
      %4792 = vmatprep.mubr.bf16.mxu0 0
      %4793 = vmatmul.mubr.bf16.gmra.mxu0 %v4758
      %v4794 = vpop.f32.mrf.mxu0
      %v4795 = vadd.f32 0.0, %v4794
      %v4796 = vpop.f32.mrf.mxu0
      %v4797 = vadd.f32 0.0, %v4796
      %v4798 = vpop.f32.mrf.mxu0
      %v4799 = vadd.f32 0.0, %v4798
      %v4800 = vpop.f32.mrf.mxu0
      %v4801 = vadd.f32 0.0, %v4800
      %4802 = vdwg.mxu0
      %4803 = vmatprep.subr.bf16.mxu0 0
      %4804 = vmatpush1.bf16.msra.mxu0 0
      %4805 = vmatprep.subr.bf16.mxu0 0
      %4806 = vmatpush1.bf16.msra.mxu0 0
      %4807 = vmatprep.subr.bf16.mxu0 0
      %4808 = vmatpush1.bf16.msra.mxu0 0
      %4809 = vmatprep.subr.bf16.mxu0 0
      %4810 = vmatpush1.bf16.msra.mxu0 0
      %4811 = vmatprep.subr.bf16.mxu0 %v4735
      %4812 = vmatpush1.bf16.msra.mxu0 %v4734
      %4813 = vmatprep.subr.bf16.mxu0 %v4730
      %4814 = vmatpush1.bf16.msra.mxu0 %v4729
      %4815 = vmatprep.subr.bf16.mxu0 %v4725
      %4816 = vmatpush1.bf16.msra.mxu0 %v4724
      %4817 = vmatprep.subr.bf16.mxu0 %v4720
      %4818 = vmatpush1.bf16.msra.mxu0 %v4719
      %4819 = vmatprep.subr.bf16.mxu0 0
      %4820 = vmatpush2.bf16.msra.mxu0 0
      %4821 = vmatprep.subr.bf16.mxu0 0
      %4822 = vmatpush2.bf16.msra.mxu0 0
      %4823 = vmatprep.subr.bf16.mxu0 0
      %4824 = vmatpush2.bf16.msra.mxu0 0
      %4825 = vmatprep.subr.bf16.mxu0 0
      %4826 = vmatpush2.bf16.msra.mxu0 0
      %4827 = vmatprep.subr.bf16.mxu0 0
      %4828 = vmatpush2.bf16.msra.mxu0 0
      %4829 = vmatprep.subr.bf16.mxu0 0
      %4830 = vmatpush2.bf16.msra.mxu0 0
      %4831 = vmatprep.subr.bf16.mxu0 0
      %4832 = vmatpush2.bf16.msra.mxu0 0
      %4833 = vmatprep.subr.bf16.mxu0 0
      %4834 = vmatpush2.bf16.msra.mxu0 0
      %4835 = vmatprep.mubr.bf16.mxu0 0
      %4836 = vmatmul.mubr.bf16.gmra.mxu0 %v4758
      %v4837 = vpop.f32.mrf.mxu0
      %v4838 = vadd.f32 0.0, %v4837
      %v4839 = vpop.f32.mrf.mxu0
      %v4840 = vadd.f32 0.0, %v4839
      %v4841 = vpop.f32.mrf.mxu0
      %v4842 = vadd.f32 0.0, %v4841
      %v4843 = vpop.f32.mrf.mxu0
      %v4844 = vadd.f32 0.0, %v4843
      %4845 = vdwg.mxu0
      %4846 = vmatprep.subr.bf16.mxu0 0
      %4847 = vmatpush1.bf16.msra.mxu0 0
      %4848 = vmatprep.subr.bf16.mxu0 0
      %4849 = vmatpush1.bf16.msra.mxu0 0
      %4850 = vmatprep.subr.bf16.mxu0 0
      %4851 = vmatpush1.bf16.msra.mxu0 0
      %4852 = vmatprep.subr.bf16.mxu0 0
      %4853 = vmatpush1.bf16.msra.mxu0 0
      %4854 = vmatprep.subr.bf16.mxu0 0
      %4855 = vmatpush1.bf16.msra.mxu0 %v4736
      %4856 = vmatprep.subr.bf16.mxu0 0
      %4857 = vmatpush1.bf16.msra.mxu0 %v4731
      %4858 = vmatprep.subr.bf16.mxu0 0
      %4859 = vmatpush1.bf16.msra.mxu0 %v4726
      %4860 = vmatprep.subr.bf16.mxu0 0
      %4861 = vmatpush1.bf16.msra.mxu0 %v4721
      %4862 = vmatprep.subr.bf16.mxu0 0
      %4863 = vmatpush2.bf16.msra.mxu0 0
      %4864 = vmatprep.subr.bf16.mxu0 0
      %4865 = vmatpush2.bf16.msra.mxu0 0
      %4866 = vmatprep.subr.bf16.mxu0 0
      %4867 = vmatpush2.bf16.msra.mxu0 0
      %4868 = vmatprep.subr.bf16.mxu0 0
      %4869 = vmatpush2.bf16.msra.mxu0 0
      %4870 = vmatprep.subr.bf16.mxu0 0
      %4871 = vmatpush2.bf16.msra.mxu0 0
      %4872 = vmatprep.subr.bf16.mxu0 0
      %4873 = vmatpush2.bf16.msra.mxu0 0
      %4874 = vmatprep.subr.bf16.mxu0 0
      %4875 = vmatpush2.bf16.msra.mxu0 0
      %4876 = vmatprep.subr.bf16.mxu0 0
      %4877 = vmatpush2.bf16.msra.mxu0 0
      %4878 = vmatprep.mubr.bf16.mxu0 0
      %4879 = vmatmul.mubr.bf16.gmra.mxu0 %v4758
      %v4880 = vpop.f32.mrf.mxu0
      %v4881 = vadd.f32 0.0, %v4880
      %v4882 = vpop.f32.mrf.mxu0
      %v4883 = vpop.f32.mrf.mxu0
      %v4884 = vadd.f32 0.0, %v4883
      %v4885 = vpop.f32.mrf.mxu0
      %4886 = vdwg.mxu0
      %v4887 = vld [vmem:[%s9] sm:$0x1f]
      %v4889 = vlaneseq
      %v4890 = vshrl.u32 %v4889, 7
      %v4891 = vsub.s32 0, %v4890
      %v4892 = vrot.slane %v4887, %v4891
      %v4893 = vlaneseq
      %v4894 = vshrl.u32 %v4893, 7
      %v4895 = vsub.s32 1, %v4894
      %v4896 = vrot.slane %v4887, %v4895
      %v4897 = vlaneseq
      %v4898 = vshrl.u32 %v4897, 7
      %v4899 = vsub.s32 2, %v4898
      %v4900 = vrot.slane %v4887, %v4899
      %v4901 = vlaneseq
      %v4902 = vshrl.u32 %v4901, 7
      %v4903 = vsub.s32 3, %v4902
      %v4904 = vrot.slane %v4887, %v4903
      %v4905 = vlaneseq
      %v4906 = vshrl.u32 %v4905, 7
      %v4907 = vsub.s32 4, %v4906
      %v4908 = vrot.slane %v4887, %v4907
      %v4914 = vmul.f32 %v4795, %v4892
      %v4915 = vmul.f32 %v4797, %v4896
      %v4916 = vmul.f32 %v4838, %v4900
      %v4917 = vmul.f32 %v4840, %v4904
      %v4918 = vmul.f32 %v4881, %v4908
      %v4919 = vmul.f32 %v4799, %v4892
      %v4920 = vmul.f32 %v4801, %v4896
      %v4921 = vmul.f32 %v4842, %v4900
      %v4922 = vmul.f32 %v4844, %v4904
      %v4923 = vmul.f32 %v4884, %v4908
      %v4924 = vld [vmem:[%s10] sm:$0x1f]
      %v4926 = vlaneseq
      %v4927 = vshrl.u32 %v4926, 7
      %v4928 = vsub.s32 0, %v4927
      %v4929 = vrot.slane %v4924, %v4928
      %v4930 = vlaneseq
      %v4931 = vshrl.u32 %v4930, 7
      %v4932 = vsub.s32 1, %v4931
      %v4933 = vrot.slane %v4924, %v4932
      %v4934 = vlaneseq
      %v4935 = vshrl.u32 %v4934, 7
      %v4936 = vsub.s32 2, %v4935
      %v4937 = vrot.slane %v4924, %v4936
      %v4938 = vlaneseq
      %v4939 = vshrl.u32 %v4938, 7
      %v4940 = vsub.s32 3, %v4939
      %v4941 = vrot.slane %v4924, %v4940
      %v4942 = vlaneseq
      %v4943 = vshrl.u32 %v4942, 7
      %v4944 = vsub.s32 4, %v4943
      %v4945 = vrot.slane %v4924, %v4944
      %v4951 = vadd.f32 %v4914, %v4929
      %v4952 = vadd.f32 %v4915, %v4933
      %v4953 = vadd.f32 %v4916, %v4937
      %v4954 = vadd.f32 %v4917, %v4941
      %v4955 = vadd.f32 %v4918, %v4945
      %v4956 = vadd.f32 %v4919, %v4929
      %v4957 = vadd.f32 %v4920, %v4933
      %v4958 = vadd.f32 %v4921, %v4937
      %v4959 = vadd.f32 %v4922, %v4941
      %v4960 = vadd.f32 %v4923, %v4945
      %v4961 = vadd.f32 %v4951, %v618
      %v4962 = vadd.f32 %v4952, %v619
      %v4963 = vadd.f32 %v4953, %v620
      %v4964 = vadd.f32 %v4954, %v621
      %v4965 = vadd.f32 %v4955, %v622
      %v4966 = vadd.f32 %v4956, %v623
      %v4967 = vadd.f32 %v4957, %v624
      %v4968 = vadd.f32 %v4958, %v625
      %v4969 = vadd.f32 %v4959, %v626
      %v4970 = vadd.f32 %v4960, %v627
      %v4971 = vmax.f32 %v4961, 0.0
      %v4972 = vmax.f32 %v4962, 0.0
      %v4973 = vmax.f32 %v4963, 0.0
      %v4974 = vmax.f32 %v4964, 0.0
      %v4975 = vmax.f32 %v4965, 0.0
      %v4976 = vmax.f32 %v4966, 0.0
      %v4977 = vmax.f32 %v4967, 0.0
      %v4978 = vmax.f32 %v4968, 0.0
      %v4979 = vmax.f32 %v4969, 0.0
      %v4980 = vmax.f32 %v4970, 0.0
      %4981 = vst [vmem:[%s386] sm:$0xff] %v4971
      %4982 = vst [vmem:[%s386 + $0x8] sm:$0xff] %v4972
      %4983 = vst [vmem:[%s386 + $0x10] sm:$0xff] %v4973
      %4984 = vst [vmem:[%s386 + $0x18] sm:$0xff] %v4974
      %4985 = vst [vmem:[%s386 + $0x20] sm:$0xff] %v4975
      %4986 = vst [vmem:[%s386 + $0x28] sm:$0xff] %v4976
      %4987 = vst [vmem:[%s386 + $0x30] sm:$0xff] %v4977
      %4988 = vst [vmem:[%s386 + $0x38] sm:$0xff] %v4978
      %4989 = vst [vmem:[%s386 + $0x40] sm:$0xff] %v4979
      %4990 = vst [vmem:[%s386 + $0x48] sm:$0xff] %v4980
      %p4991 = scmp.lt.s32.totalorder %s22, 1
      %s4992 = scalar_select %p4991, %s22, 1
      %s4993 = smul.addr %s4992, 10
      %s4994 = smul.addr %s4993, 8
      %s4995 = scalar_lea.vmem %s11, %s4994
      // Predicated region
      $region65: #{prenet_forward.1} parent=63 // pred_check
        %p4996 = pneg %p276
      $region66: #{prenet_forward.1} parent=63 // pred_check_branch
        %4998 = sbr.rel (%p4996) target = $region68
      $region67: #{prenet_forward.1} parent=63 // pred_region
        _
      $region68: #{prenet_forward.1} parent=63 // pred_fallthru
        _
    $region64: #{prenet_forward.1} parent=5 // pred_fallthru
      _
    %p4999 = scmp.le.s32.totalorder 2, %s17
    // Predicated region
    $region69: #{prenet_forward.1} parent=5 // pred_check
      %p5000 = pneg %p4999
    $region70: #{prenet_forward.1} parent=5 // pred_check_branch
      %5002 = sbr.rel (%p5000) target = $region72
    $region71: #{prenet_forward.1} parent=5 // pred_region
      %s5003 = ssub.s32 %s17, 2
      // Predicated region
      $region73: #{prenet_forward.1} parent=71 // pred_check
        %p5004 = pneg %p282
      $region74: #{prenet_forward.1} parent=71 // pred_check_branch
        %5006 = sbr.rel (%p5004) target = $region76
      $region75: #{prenet_forward.1} parent=71 // pred_region
        %p5007 = scmp.lt.s32.totalorder %s23, 1
        %s5008 = scalar_select %p5007, %s23, 1
        %s5009 = smul.addr %s5008, 10
        %s5010 = smul.addr %s5009, 8
        %s5011 = scalar_lea.vmem %s11, %s5010
      $region76: #{prenet_forward.1} parent=71 // pred_fallthru
        _
    $region72: #{prenet_forward.1} parent=5 // pred_fallthru
      _
  $region6: #{prenet_forward.1} parent=0 // loop_footer
    %s21 = sadd.s32 1, %s17
  $region7: #{prenet_forward.1} parent=0 // loop_footer_branch
    %16 = sbr.rel target = $region3
  $region8: #{prenet_forward.1} parent=0 // loop_exit
    _

</llo_original>
